<compile_context>
chip_gen: v7x
topology: tpu7x:2x2x1
jax: 0.10.0
libtpu: 0.0.40
codegen_flags: <defaults>
</compile_context>

<pallas_src>
import jax
import jax.numpy as jnp
from jax import lax
from jax.experimental import pallas as pl
from jax.experimental.pallas import tpu as pltpu


# (kind, out_channels, in_channels, input_dilation)
_LAYERS = (
    ("down", 8, 1, 1),
    ("down", 16, 8, 2),
    ("down", 32, 16, 4),
    ("up", 16, 32, 8),
    ("up", 8, 16, 4),
    ("up", 1, 8, 2),
)
_MAX_CH = 32
_L = 1024


# ----------------------------------------------------------------------------
# Fused kernel: 6 conv layers (batch-vectorized, a-trous) + bf16 Linear head
# ----------------------------------------------------------------------------
def _fused_kernel(x_ref, wc_ref, bc_ref, wt_ref, bout_ref, out_ref,
                  za_ref, zb_ref):
    Bt, n = x_ref.shape                      # (Bt, 1024): batch x length

    # Hoisted lane iota (per-sample position index); up-layer masks are one
    # AND + compare each, derived from this single iota.
    lane = lax.broadcasted_iota(jnp.int32, (Bt, n), 1)

    # Layer-1 input (1 channel) -> activation scratch A, channel 0.
    za_ref[0] = x_ref[...]

    bufs = (za_ref, zb_ref)                  # ping-pong (32, Bt, n) scratches
    w_off = 0
    b_off = 0
    for li, (kind, out_ch, in_ch, dil) in enumerate(_LAYERS):
        src = bufs[li % 2]
        dst = bufs[(li + 1) % 2]
        ts = out_ch * in_ch                  # scalars per tap in this layer

        if kind == "down":
            # Conv1d(k=2, s=2):  y[b, m] = sum_c w0[o,c]*z_c[b,m] + w1[o,c]*z_c[b,m+dil]
            shift = n - dil                  # left-rotate by dil

            def out_body(o, carry, src=src, dst=dst, woff=w_off, boff=b_off,
                         in_ch=in_ch, ts=ts, shift=shift):
                def in_body(c, acc):
                    zc = src[c]                                   # (Bt, n)
                    zr = pltpu.roll(zc, shift=shift, axis=1)      # z_c[m+dil]
                    w0 = wc_ref[woff + o * in_ch + c]             # SMEM scalar
                    w1 = wc_ref[woff + ts + o * in_ch + c]
                    return acc + w0 * zc + w1 * zr
                acc = lax.fori_loop(0, in_ch, in_body,
                                    jnp.zeros((Bt, n), jnp.float32))
                dst[o] = jnp.tanh(acc + bc_ref[boff + o])
                return carry

            lax.fori_loop(0, out_ch, out_body, 0)
        else:
            # ConvTranspose1d(k=2, s=2): output dilation = dil // 2
            #   y[m] = a0[m]            where m % dil == 0
            #   y[m] = a1[m - dil//2]   where m % dil == dil//2   (else: don't care)
            half = dil // 2
            mask = (lane & (dil - 1)) == 0

            def out_body(o, carry, src=src, dst=dst, woff=w_off, boff=b_off,
                         in_ch=in_ch, ts=ts, half=half, mask=mask):
                def in_body(c, carry2):
                    a0, a1 = carry2
                    zc = src[c]
                    w0 = wc_ref[woff + o * in_ch + c]
                    w1 = wc_ref[woff + ts + o * in_ch + c]
                    return (a0 + w0 * zc, a1 + w1 * zc)
                zero = jnp.zeros((Bt, n), jnp.float32)
                a0, a1 = lax.fori_loop(0, in_ch, in_body, (zero, zero))
                a1 = pltpu.roll(a1, shift=half, axis=1)           # a1[m - half]
                y = jnp.where(mask, a0, a1)
                dst[o] = jnp.tanh(y + bc_ref[boff + o])
                return carry

            lax.fori_loop(0, out_ch, out_body, 0)

        w_off += 2 * ts
        b_off += out_ch

    # ---- Linear(1024, 1024) head: one batched bf16 MXU matmul --------------
    final = bufs[len(_LAYERS) % 2]           # after 6 layers result is in za_ref
    zh = final[0].astype(jnp.bfloat16)       # (Bt, n)
    y = jnp.dot(zh, wt_ref[...], preferred_element_type=jnp.float32)
    out_ref[...] = y + bout_ref[...]


# ----------------------------------------------------------------------------
# Forward wrapper (single pallas_call, batch-blocked grid)
# ----------------------------------------------------------------------------
def forward(prepped, x, *, block_b=32):
    B, c_in, L = x.shape
    assert c_in == 1 and L == _L

    # Batch tile: at least 8 rows (sublane tile), block_b for large batches.
    if B >= block_b:
        Bt = block_b
    else:
        Bt = max(8, ((B + 7) // 8) * 8)
    Bpad = ((B + Bt - 1) // Bt) * Bt

    x2 = x.reshape(B, L)                     # contiguous reshape, free
    if Bpad != B:
        x2 = jnp.concatenate(
            [x2, jnp.zeros((Bpad - B, L), x2.dtype)], axis=0)

    grid = (Bpad // Bt,)
    out = pl.pallas_call(
        _fused_kernel,
        out_shape=jax.ShapeDtypeStruct((Bpad, L), jnp.float32),
        grid=grid,
        in_specs=[
            pl.BlockSpec((Bt, L), lambda b: (b, 0)),                 # x tile
            pl.BlockSpec(memory_space=pltpu.MemorySpace.SMEM),       # conv W (flat)
            pl.BlockSpec(memory_space=pltpu.MemorySpace.SMEM),       # conv b (flat)
            pl.BlockSpec((L, L), lambda b: (0, 0)),                  # Linear W^T (bf16)
            pl.BlockSpec((1, L), lambda b: (0, 0)),                  # Linear bias
        ],
        out_specs=pl.BlockSpec((Bt, L), lambda b: (b, 0)),
        scratch_shapes=[
            pltpu.VMEM((_MAX_CH, Bt, L), jnp.float32),               # activations A
            pltpu.VMEM((_MAX_CH, Bt, L), jnp.float32),               # activations B
        ],
        compiler_params=pltpu.CompilerParams(
            dimension_semantics=("parallel",),
            vmem_limit_bytes=32 * 1024 * 1024,
        ),
    )(x2, prepped["wconv"], prepped["bconv"], prepped["wt"], prepped["bout"])

    return out[:B].reshape(B, 1, L)


# ----------------------------------------------------------------------------
# One-time parameter preparation (all weight transforms hoisted out of forward)
# ----------------------------------------------------------------------------
def prepare_params(p):
    wvals = []
    bvals = []
    for i, (kind, out_ch, in_ch, _) in enumerate(_LAYERS):
        w = p[f"w{i + 1}"]                   # down: (O,C,2); up: (C,O,2)
        b = p[f"b{i + 1}"]
        for k in range(2):
            tap = w[:, :, k] if kind == "down" else w[:, :, k].T     # (O, C)
            wvals.append(tap.reshape(-1))
        bvals.append(b.reshape(-1))
    return {
        "wconv": jnp.concatenate(wvals).astype(jnp.float32),   # (2592,) SMEM
        "bconv": jnp.concatenate(bvals).astype(jnp.float32),   # (81,)   SMEM
        "wt": p["w_out"].T.astype(jnp.bfloat16),                # y = z @ W^T + b
        "bout": p["b_out"].reshape(1, -1).astype(jnp.float32),
    }


# ----------------------------------------------------------------------------
# Deterministic parameter init (PyTorch-shaped weights, uniform fan-in scale)
# ----------------------------------------------------------------------------
def init_params(key):
    ks = jax.random.split(key, 14)

    def u(k, shape, fan_in):
        s = 1.0 / (fan_in ** 0.5)
        return jax.random.uniform(k, shape, jnp.float32, -s, s)

    p = {}
    p["w1"] = u(ks[0], (8, 1, 2), 1 * 2);    p["b1"] = u(ks[1], (8,), 1 * 2)
    p["w2"] = u(ks[2], (16, 8, 2), 8 * 2);   p["b2"] = u(ks[3], (16,), 8 * 2)
    p["w3"] = u(ks[4], (32, 16, 2), 16 * 2); p["b3"] = u(ks[5], (32,), 16 * 2)
    p["w4"] = u(ks[6], (32, 16, 2), 16 * 2); p["b4"] = u(ks[7], (16,), 16 * 2)
    p["w5"] = u(ks[8], (16, 8, 2), 8 * 2);   p["b5"] = u(ks[9], (8,), 8 * 2)
    p["w6"] = u(ks[10], (8, 1, 2), 1 * 2);   p["b6"] = u(ks[11], (1,), 1 * 2)
    p["w_out"] = u(ks[12], (1024, 1024), 1024)
    p["b_out"] = u(ks[13], (1024,), 1024)
    return p


# ----------------------------------------------------------------------------
# Independent pure-JAX reference (NCL layout, einsum-based) for verification
# ----------------------------------------------------------------------------
def reference(params, x_ncl):
    def conv(x, w, b):
        B, C, L = x.shape
        xr = x.reshape(B, C, L // 2, 2)
        y = jnp.einsum("bclk,ock->bol", xr, w, precision="highest")
        return jnp.tanh(y + b[None, :, None])

    def convT(x, w, b):
        B, C, L = x.shape
        O = w.shape[1]
        y = jnp.einsum("bct,cok->botk", x, w,
                       precision="highest").reshape(B, O, 2 * L)
        return jnp.tanh(y + b[None, :, None])

    z = conv(x_ncl, params["w1"], params["b1"])
    z = conv(z, params["w2"], params["b2"])
    z = conv(z, params["w3"], params["b3"])
    z = convT(z, params["w4"], params["b4"])
    z = convT(z, params["w5"], params["b5"])
    z = convT(z, params["w6"], params["b6"])          # (B, 1, 1024)
    return (jnp.einsum("bcl,jl->bcj", z, params["w_out"], precision="highest")
            + params["b_out"])


if __name__ == "__main__":
    key = jax.random.PRNGKey(0)
    pkey, xkey = jax.random.split(key)
    params = init_params(pkey)
    prepped = prepare_params(params)

    B = 2
    x = jax.random.normal(xkey, (B, 1, 1024), jnp.float32)   # (B, C=1, L=1024)

    out = forward(prepped, x)
    out = jax.block_until_ready(out)
    assert out.shape == (B, 1, 1024)

    ref = reference(params, x)
    err = float(jnp.max(jnp.abs(out - ref)))
    # Conv stage is exact f32; head is bf16 x bf16 with f32 accumulation over
    # K=1024 -> expected max abs err ~2e-3 against the f32 reference.
    assert err < 1e-2, f"max abs err too large: {err}"

    print("KERNEL_OK")
</pallas_src>

<mosaic_0001>
module attributes {stable_mosaic.version = 11 : i64} {
  func.func @_fused_kernel(%arg0: i32, %arg1: memref<8x1024xf32, #tpu.memory_space<vmem>>, %arg2: memref<2592xf32, #tpu.memory_space<smem>>, %arg3: memref<81xf32, #tpu.memory_space<smem>>, %arg4: memref<1024x1024xbf16, #tpu.memory_space<vmem>>, %arg5: memref<1x1024xf32, #tpu.memory_space<vmem>>, %arg6: memref<8x1024xf32, #tpu.memory_space<vmem>>, %arg7: memref<32x8x1024xf32, #tpu.memory_space<vmem>>, %arg8: memref<32x8x1024xf32, #tpu.memory_space<vmem>>) attributes {dimension_semantics = [#tpu.dimension_semantics<parallel>], iteration_bounds = array<i64: 1>, scalar_prefetch = 0 : i64, scratch_operands = 2 : i64, tpu.core_type = #tpu.core_type<tc>, window_params = [{transform_indices = @transform_0, window_bounds = array<i64: 8, 1024>}, {transform_indices = @transform_1, window_bounds = array<i64: 2592>}, {transform_indices = @transform_2, window_bounds = array<i64: 81>}, {pipeline_mode = #tpu.pipeline_mode<synchronous>, transform_indices = @transform_3, window_bounds = array<i64: 1024, 1024>}, {pipeline_mode = #tpu.pipeline_mode<synchronous>, transform_indices = @transform_4, window_bounds = array<i64: 1, 1024>}, {transform_indices = @transform_5, window_bounds = array<i64: 8, 1024>}]} {
    %0 = tpu.iota {dimensions = array<i32: 1>} : vector<8x1024xi32>
    %c0 = arith.constant 0 : index
    %c0_0 = arith.constant 0 : index
    %1 = vector.load %arg1[%c0, %c0_0] : memref<8x1024xf32, #tpu.memory_space<vmem>>, vector<8x1024xf32>
    %c0_1 = arith.constant 0 : index
    %c0_2 = arith.constant 0 : index
    %c0_3 = arith.constant 0 : index
    %2 = vector.load %arg7[%c0_1, %c0_2, %c0_3] : memref<32x8x1024xf32, #tpu.memory_space<vmem>>, vector<1x8x1024xf32>
    %3 = vector.shape_cast %2 : vector<1x8x1024xf32> to vector<8x1024xf32>
    %4 = vector.shape_cast %1 : vector<8x1024xf32> to vector<1x8x1024xf32>
    tpu.vector_store %arg7[%c0_1, %c0_2, %c0_3], %4 {strides = array<i32>} : memref<32x8x1024xf32, #tpu.memory_space<vmem>>, vector<1x8x1024xf32>,
    %c0_i32 = arith.constant 0 : i32
    %c8_i32 = arith.constant 8 : i32
    %5 = arith.addi %c0_i32, %c8_i32 : i32
    %c1_i32 = arith.constant 1 : i32
    scf.for %arg9 = %c0_i32 to %5 step %c1_i32  : i32 {
      %cst_42 = arith.constant 0.000000e+00 : f32
      %46 = vector.broadcast %cst_42 : f32 to vector<8x1024xf32>
      %c0_i32_43 = arith.constant 0 : i32
      %47 = arith.index_cast %c0_i32_43 : i32 to index
      %c0_44 = arith.constant 0 : index
      %c0_45 = arith.constant 0 : index
      %48 = vector.load %arg7[%47, %c0_44, %c0_45] : memref<32x8x1024xf32, #tpu.memory_space<vmem>>, vector<1x8x1024xf32>
      %49 = vector.shape_cast %48 : vector<1x8x1024xf32> to vector<8x1024xf32>
      %c1023_i32 = arith.constant 1023 : i32
      %50 = tpu.dynamic_rotate %49 by %c1023_i32 dim 1 : vector<8x1024xf32>, i32 -> vector<8x1024xf32>
      %c1_i32_46 = arith.constant 1 : i32
      %51 = arith.muli %arg9, %c1_i32_46 : i32
      %c0_i32_47 = arith.constant 0 : i32
      %52 = arith.addi %c0_i32_47, %51 : i32
      %53 = arith.addi %52, %c0_i32_43 : i32
      %54 = arith.index_cast %53 : i32 to index
      %55 = memref.load %arg2[%54] : memref<2592xf32, #tpu.memory_space<smem>>
      %c1_i32_48 = arith.constant 1 : i32
      %56 = arith.muli %arg9, %c1_i32_48 : i32
      %c8_i32_49 = arith.constant 8 : i32
      %57 = arith.addi %c8_i32_49, %56 : i32
      %58 = arith.addi %57, %c0_i32_43 : i32
      %59 = arith.index_cast %58 : i32 to index
      %60 = memref.load %arg2[%59] : memref<2592xf32, #tpu.memory_space<smem>>
      %61 = vector.broadcast %55 : f32 to vector<8x1024xf32>
      %62 = arith.mulf %61, %49 : vector<8x1024xf32>
      %63 = arith.addf %46, %62 : vector<8x1024xf32>
      %64 = vector.broadcast %60 : f32 to vector<8x1024xf32>
      %65 = arith.mulf %64, %50 : vector<8x1024xf32>
      %66 = arith.addf %63, %65 : vector<8x1024xf32>
      %c1_i32_50 = arith.constant 1 : i32
      %c0_i32_51 = arith.constant 0 : i32
      %67 = arith.addi %c0_i32_51, %arg9 : i32
      %68 = arith.index_cast %67 : i32 to index
      %69 = memref.load %arg3[%68] : memref<81xf32, #tpu.memory_space<smem>>
      %70 = vector.broadcast %69 : f32 to vector<8x1024xf32>
      %71 = arith.addf %66, %70 : vector<8x1024xf32>
      %72 = math.tanh %71 : vector<8x1024xf32>
      %73 = arith.index_cast %arg9 : i32 to index
      %c0_52 = arith.constant 0 : index
      %c0_53 = arith.constant 0 : index
      %74 = vector.load %arg8[%73, %c0_52, %c0_53] : memref<32x8x1024xf32, #tpu.memory_space<vmem>>, vector<1x8x1024xf32>
      %75 = vector.shape_cast %74 : vector<1x8x1024xf32> to vector<8x1024xf32>
      %76 = vector.shape_cast %72 : vector<8x1024xf32> to vector<1x8x1024xf32>
      tpu.vector_store %arg8[%73, %c0_52, %c0_53], %76 {strides = array<i32>} : memref<32x8x1024xf32, #tpu.memory_space<vmem>>, vector<1x8x1024xf32>,
    }
    %c8_i32_4 = arith.constant 8 : i32
    %c0_i32_5 = arith.constant 0 : i32
    %c16_i32 = arith.constant 16 : i32
    %6 = arith.addi %c0_i32_5, %c16_i32 : i32
    %c1_i32_6 = arith.constant 1 : i32
    scf.for %arg9 = %c0_i32_5 to %6 step %c1_i32_6  : i32 {
      %cst_42 = arith.constant 0.000000e+00 : f32
      %46 = vector.broadcast %cst_42 : f32 to vector<8x1024xf32>
      %c0_i32_43 = arith.constant 0 : i32
      %c8_i32_44 = arith.constant 8 : i32
      %47 = arith.addi %c0_i32_43, %c8_i32_44 : i32
      %c1_i32_45 = arith.constant 1 : i32
      %48 = scf.for %arg10 = %c0_i32_43 to %47 step %c1_i32_45 iter_args(%arg11 = %46) -> (vector<8x1024xf32>)  : i32 {
        %59 = arith.index_cast %arg10 : i32 to index
        %c0_50 = arith.constant 0 : index
        %c0_51 = arith.constant 0 : index
        %60 = vector.load %arg8[%59, %c0_50, %c0_51] : memref<32x8x1024xf32, #tpu.memory_space<vmem>>, vector<1x8x1024xf32>
        %61 = vector.shape_cast %60 : vector<1x8x1024xf32> to vector<8x1024xf32>
        %c1022_i32 = arith.constant 1022 : i32
        %62 = tpu.dynamic_rotate %61 by %c1022_i32 dim 1 : vector<8x1024xf32>, i32 -> vector<8x1024xf32>
        %c8_i32_52 = arith.constant 8 : i32
        %63 = arith.muli %arg9, %c8_i32_52 : i32
        %c16_i32_53 = arith.constant 16 : i32
        %64 = arith.addi %c16_i32_53, %63 : i32
        %65 = arith.addi %64, %arg10 : i32
        %66 = arith.index_cast %65 : i32 to index
        %67 = memref.load %arg2[%66] : memref<2592xf32, #tpu.memory_space<smem>>
        %c8_i32_54 = arith.constant 8 : i32
        %68 = arith.muli %arg9, %c8_i32_54 : i32
        %c144_i32 = arith.constant 144 : i32
        %69 = arith.addi %c144_i32, %68 : i32
        %70 = arith.addi %69, %arg10 : i32
        %71 = arith.index_cast %70 : i32 to index
        %72 = memref.load %arg2[%71] : memref<2592xf32, #tpu.memory_space<smem>>
        %73 = vector.broadcast %67 : f32 to vector<8x1024xf32>
        %74 = arith.mulf %73, %61 : vector<8x1024xf32>
        %75 = arith.addf %arg11, %74 : vector<8x1024xf32>
        %76 = vector.broadcast %72 : f32 to vector<8x1024xf32>
        %77 = arith.mulf %76, %62 : vector<8x1024xf32>
        %78 = arith.addf %75, %77 : vector<8x1024xf32>
        scf.yield %78 : vector<8x1024xf32>
      }
      %c8_i32_46 = arith.constant 8 : i32
      %c8_i32_47 = arith.constant 8 : i32
      %49 = arith.addi %c8_i32_47, %arg9 : i32
      %50 = arith.index_cast %49 : i32 to index
      %51 = memref.load %arg3[%50] : memref<81xf32, #tpu.memory_space<smem>>
      %52 = vector.broadcast %51 : f32 to vector<8x1024xf32>
      %53 = arith.addf %48, %52 : vector<8x1024xf32>
      %54 = math.tanh %53 : vector<8x1024xf32>
      %55 = arith.index_cast %arg9 : i32 to index
      %c0_48 = arith.constant 0 : index
      %c0_49 = arith.constant 0 : index
      %56 = vector.load %arg7[%55, %c0_48, %c0_49] : memref<32x8x1024xf32, #tpu.memory_space<vmem>>, vector<1x8x1024xf32>
      %57 = vector.shape_cast %56 : vector<1x8x1024xf32> to vector<8x1024xf32>
      %58 = vector.shape_cast %54 : vector<8x1024xf32> to vector<1x8x1024xf32>
      tpu.vector_store %arg7[%55, %c0_48, %c0_49], %58 {strides = array<i32>} : memref<32x8x1024xf32, #tpu.memory_space<vmem>>, vector<1x8x1024xf32>,
    }
    %c16_i32_7 = arith.constant 16 : i32
    %c0_i32_8 = arith.constant 0 : i32
    %c32_i32 = arith.constant 32 : i32
    %7 = arith.addi %c0_i32_8, %c32_i32 : i32
    %c1_i32_9 = arith.constant 1 : i32
    scf.for %arg9 = %c0_i32_8 to %7 step %c1_i32_9  : i32 {
      %cst_42 = arith.constant 0.000000e+00 : f32
      %46 = vector.broadcast %cst_42 : f32 to vector<8x1024xf32>
      %c0_i32_43 = arith.constant 0 : i32
      %c16_i32_44 = arith.constant 16 : i32
      %47 = arith.addi %c0_i32_43, %c16_i32_44 : i32
      %c1_i32_45 = arith.constant 1 : i32
      %48 = scf.for %arg10 = %c0_i32_43 to %47 step %c1_i32_45 iter_args(%arg11 = %46) -> (vector<8x1024xf32>)  : i32 {
        %59 = arith.index_cast %arg10 : i32 to index
        %c0_49 = arith.constant 0 : index
        %c0_50 = arith.constant 0 : index
        %60 = vector.load %arg7[%59, %c0_49, %c0_50] : memref<32x8x1024xf32, #tpu.memory_space<vmem>>, vector<1x8x1024xf32>
        %61 = vector.shape_cast %60 : vector<1x8x1024xf32> to vector<8x1024xf32>
        %c1020_i32 = arith.constant 1020 : i32
        %62 = tpu.dynamic_rotate %61 by %c1020_i32 dim 1 : vector<8x1024xf32>, i32 -> vector<8x1024xf32>
        %c16_i32_51 = arith.constant 16 : i32
        %63 = arith.muli %arg9, %c16_i32_51 : i32
        %c272_i32 = arith.constant 272 : i32
        %64 = arith.addi %c272_i32, %63 : i32
        %65 = arith.addi %64, %arg10 : i32
        %66 = arith.index_cast %65 : i32 to index
        %67 = memref.load %arg2[%66] : memref<2592xf32, #tpu.memory_space<smem>>
        %c16_i32_52 = arith.constant 16 : i32
        %68 = arith.muli %arg9, %c16_i32_52 : i32
        %c784_i32 = arith.constant 784 : i32
        %69 = arith.addi %c784_i32, %68 : i32
        %70 = arith.addi %69, %arg10 : i32
        %71 = arith.index_cast %70 : i32 to index
        %72 = memref.load %arg2[%71] : memref<2592xf32, #tpu.memory_space<smem>>
        %73 = vector.broadcast %67 : f32 to vector<8x1024xf32>
        %74 = arith.mulf %73, %61 : vector<8x1024xf32>
        %75 = arith.addf %arg11, %74 : vector<8x1024xf32>
        %76 = vector.broadcast %72 : f32 to vector<8x1024xf32>
        %77 = arith.mulf %76, %62 : vector<8x1024xf32>
        %78 = arith.addf %75, %77 : vector<8x1024xf32>
        scf.yield %78 : vector<8x1024xf32>
      }
      %c16_i32_46 = arith.constant 16 : i32
      %c24_i32 = arith.constant 24 : i32
      %49 = arith.addi %c24_i32, %arg9 : i32
      %50 = arith.index_cast %49 : i32 to index
      %51 = memref.load %arg3[%50] : memref<81xf32, #tpu.memory_space<smem>>
      %52 = vector.broadcast %51 : f32 to vector<8x1024xf32>
      %53 = arith.addf %48, %52 : vector<8x1024xf32>
      %54 = math.tanh %53 : vector<8x1024xf32>
      %55 = arith.index_cast %arg9 : i32 to index
      %c0_47 = arith.constant 0 : index
      %c0_48 = arith.constant 0 : index
      %56 = vector.load %arg8[%55, %c0_47, %c0_48] : memref<32x8x1024xf32, #tpu.memory_space<vmem>>, vector<1x8x1024xf32>
      %57 = vector.shape_cast %56 : vector<1x8x1024xf32> to vector<8x1024xf32>
      %58 = vector.shape_cast %54 : vector<8x1024xf32> to vector<1x8x1024xf32>
      tpu.vector_store %arg8[%55, %c0_47, %c0_48], %58 {strides = array<i32>} : memref<32x8x1024xf32, #tpu.memory_space<vmem>>, vector<1x8x1024xf32>,
    }
    %c32_i32_10 = arith.constant 32 : i32
    %c7_i32 = arith.constant 7 : i32
    %8 = vector.broadcast %c7_i32 : i32 to vector<8x1024xi32>
    %9 = arith.andi %0, %8 : vector<8x1024xi32>
    %c0_i32_11 = arith.constant 0 : i32
    %10 = vector.broadcast %c0_i32_11 : i32 to vector<8x1024xi32>
    %11 = arith.cmpi eq, %9, %10 : vector<8x1024xi32>
    %c0_i32_12 = arith.constant 0 : i32
    %c16_i32_13 = arith.constant 16 : i32
    %12 = arith.addi %c0_i32_12, %c16_i32_13 : i32
    %c1_i32_14 = arith.constant 1 : i32
    scf.for %arg9 = %c0_i32_12 to %12 step %c1_i32_14  : i32 {
      %cst_42 = arith.constant 0.000000e+00 : f32
      %46 = vector.broadcast %cst_42 : f32 to vector<8x1024xf32>
      %c0_i32_43 = arith.constant 0 : i32
      %c32_i32_44 = arith.constant 32 : i32
      %47 = arith.addi %c0_i32_43, %c32_i32_44 : i32
      %c1_i32_45 = arith.constant 1 : i32
      %48:2 = scf.for %arg10 = %c0_i32_43 to %47 step %c1_i32_45 iter_args(%arg11 = %46, %arg12 = %46) -> (vector<8x1024xf32>, vector<8x1024xf32>)  : i32 {
        %61 = arith.index_cast %arg10 : i32 to index
        %c0_49 = arith.constant 0 : index
        %c0_50 = arith.constant 0 : index
        %62 = vector.load %arg8[%61, %c0_49, %c0_50] : memref<32x8x1024xf32, #tpu.memory_space<vmem>>, vector<1x8x1024xf32>
        %63 = vector.shape_cast %62 : vector<1x8x1024xf32> to vector<8x1024xf32>
        %c32_i32_51 = arith.constant 32 : i32
        %64 = arith.muli %arg9, %c32_i32_51 : i32
        %c1296_i32 = arith.constant 1296 : i32
        %65 = arith.addi %c1296_i32, %64 : i32
        %66 = arith.addi %65, %arg10 : i32
        %67 = arith.index_cast %66 : i32 to index
        %68 = memref.load %arg2[%67] : memref<2592xf32, #tpu.memory_space<smem>>
        %c32_i32_52 = arith.constant 32 : i32
        %69 = arith.muli %arg9, %c32_i32_52 : i32
        %c1808_i32 = arith.constant 1808 : i32
        %70 = arith.addi %c1808_i32, %69 : i32
        %71 = arith.addi %70, %arg10 : i32
        %72 = arith.index_cast %71 : i32 to index
        %73 = memref.load %arg2[%72] : memref<2592xf32, #tpu.memory_space<smem>>
        %74 = vector.broadcast %68 : f32 to vector<8x1024xf32>
        %75 = arith.mulf %74, %63 : vector<8x1024xf32>
        %76 = arith.addf %arg11, %75 : vector<8x1024xf32>
        %77 = vector.broadcast %73 : f32 to vector<8x1024xf32>
        %78 = arith.mulf %77, %63 : vector<8x1024xf32>
        %79 = arith.addf %arg12, %78 : vector<8x1024xf32>
        scf.yield %76, %79 : vector<8x1024xf32>, vector<8x1024xf32>
      }
      %c32_i32_46 = arith.constant 32 : i32
      %c4_i32 = arith.constant 4 : i32
      %49 = tpu.dynamic_rotate %48#1 by %c4_i32 dim 1 : vector<8x1024xf32>, i32 -> vector<8x1024xf32>
      %50 = arith.select %11, %48#0, %49 : vector<8x1024xi1>, vector<8x1024xf32>
      %c56_i32 = arith.constant 56 : i32
      %51 = arith.addi %c56_i32, %arg9 : i32
      %52 = arith.index_cast %51 : i32 to index
      %53 = memref.load %arg3[%52] : memref<81xf32, #tpu.memory_space<smem>>
      %54 = vector.broadcast %53 : f32 to vector<8x1024xf32>
      %55 = arith.addf %50, %54 : vector<8x1024xf32>
      %56 = math.tanh %55 : vector<8x1024xf32>
      %57 = arith.index_cast %arg9 : i32 to index
      %c0_47 = arith.constant 0 : index
      %c0_48 = arith.constant 0 : index
      %58 = vector.load %arg7[%57, %c0_47, %c0_48] : memref<32x8x1024xf32, #tpu.memory_space<vmem>>, vector<1x8x1024xf32>
      %59 = vector.shape_cast %58 : vector<1x8x1024xf32> to vector<8x1024xf32>
      %60 = vector.shape_cast %56 : vector<8x1024xf32> to vector<1x8x1024xf32>
      tpu.vector_store %arg7[%57, %c0_47, %c0_48], %60 {strides = array<i32>} : memref<32x8x1024xf32, #tpu.memory_space<vmem>>, vector<1x8x1024xf32>,
    }
    %c16_i32_15 = arith.constant 16 : i32
    %c3_i32 = arith.constant 3 : i32
    %13 = vector.broadcast %c3_i32 : i32 to vector<8x1024xi32>
    %14 = arith.andi %0, %13 : vector<8x1024xi32>
    %c0_i32_16 = arith.constant 0 : i32
    %15 = vector.broadcast %c0_i32_16 : i32 to vector<8x1024xi32>
    %16 = arith.cmpi eq, %14, %15 : vector<8x1024xi32>
    %c0_i32_17 = arith.constant 0 : i32
    %c8_i32_18 = arith.constant 8 : i32
    %17 = arith.addi %c0_i32_17, %c8_i32_18 : i32
    %c1_i32_19 = arith.constant 1 : i32
    scf.for %arg9 = %c0_i32_17 to %17 step %c1_i32_19  : i32 {
      %cst_42 = arith.constant 0.000000e+00 : f32
      %46 = vector.broadcast %cst_42 : f32 to vector<8x1024xf32>
      %c0_i32_43 = arith.constant 0 : i32
      %c16_i32_44 = arith.constant 16 : i32
      %47 = arith.addi %c0_i32_43, %c16_i32_44 : i32
      %c1_i32_45 = arith.constant 1 : i32
      %48:2 = scf.for %arg10 = %c0_i32_43 to %47 step %c1_i32_45 iter_args(%arg11 = %46, %arg12 = %46) -> (vector<8x1024xf32>, vector<8x1024xf32>)  : i32 {
        %61 = arith.index_cast %arg10 : i32 to index
        %c0_49 = arith.constant 0 : index
        %c0_50 = arith.constant 0 : index
        %62 = vector.load %arg7[%61, %c0_49, %c0_50] : memref<32x8x1024xf32, #tpu.memory_space<vmem>>, vector<1x8x1024xf32>
        %63 = vector.shape_cast %62 : vector<1x8x1024xf32> to vector<8x1024xf32>
        %c16_i32_51 = arith.constant 16 : i32
        %64 = arith.muli %arg9, %c16_i32_51 : i32
        %c2320_i32 = arith.constant 2320 : i32
        %65 = arith.addi %c2320_i32, %64 : i32
        %66 = arith.addi %65, %arg10 : i32
        %67 = arith.index_cast %66 : i32 to index
        %68 = memref.load %arg2[%67] : memref<2592xf32, #tpu.memory_space<smem>>
        %c16_i32_52 = arith.constant 16 : i32
        %69 = arith.muli %arg9, %c16_i32_52 : i32
        %c2448_i32 = arith.constant 2448 : i32
        %70 = arith.addi %c2448_i32, %69 : i32
        %71 = arith.addi %70, %arg10 : i32
        %72 = arith.index_cast %71 : i32 to index
        %73 = memref.load %arg2[%72] : memref<2592xf32, #tpu.memory_space<smem>>
        %74 = vector.broadcast %68 : f32 to vector<8x1024xf32>
        %75 = arith.mulf %74, %63 : vector<8x1024xf32>
        %76 = arith.addf %arg11, %75 : vector<8x1024xf32>
        %77 = vector.broadcast %73 : f32 to vector<8x1024xf32>
        %78 = arith.mulf %77, %63 : vector<8x1024xf32>
        %79 = arith.addf %arg12, %78 : vector<8x1024xf32>
        scf.yield %76, %79 : vector<8x1024xf32>, vector<8x1024xf32>
      }
      %c16_i32_46 = arith.constant 16 : i32
      %c2_i32 = arith.constant 2 : i32
      %49 = tpu.dynamic_rotate %48#1 by %c2_i32 dim 1 : vector<8x1024xf32>, i32 -> vector<8x1024xf32>
      %50 = arith.select %16, %48#0, %49 : vector<8x1024xi1>, vector<8x1024xf32>
      %c72_i32 = arith.constant 72 : i32
      %51 = arith.addi %c72_i32, %arg9 : i32
      %52 = arith.index_cast %51 : i32 to index
      %53 = memref.load %arg3[%52] : memref<81xf32, #tpu.memory_space<smem>>
      %54 = vector.broadcast %53 : f32 to vector<8x1024xf32>
      %55 = arith.addf %50, %54 : vector<8x1024xf32>
      %56 = math.tanh %55 : vector<8x1024xf32>
      %57 = arith.index_cast %arg9 : i32 to index
      %c0_47 = arith.constant 0 : index
      %c0_48 = arith.constant 0 : index
      %58 = vector.load %arg8[%57, %c0_47, %c0_48] : memref<32x8x1024xf32, #tpu.memory_space<vmem>>, vector<1x8x1024xf32>
      %59 = vector.shape_cast %58 : vector<1x8x1024xf32> to vector<8x1024xf32>
      %60 = vector.shape_cast %56 : vector<8x1024xf32> to vector<1x8x1024xf32>
      tpu.vector_store %arg8[%57, %c0_47, %c0_48], %60 {strides = array<i32>} : memref<32x8x1024xf32, #tpu.memory_space<vmem>>, vector<1x8x1024xf32>,
    }
    %c8_i32_20 = arith.constant 8 : i32
    %c1_i32_21 = arith.constant 1 : i32
    %18 = vector.broadcast %c1_i32_21 : i32 to vector<8x1024xi32>
    %19 = arith.andi %0, %18 : vector<8x1024xi32>
    %c0_i32_22 = arith.constant 0 : i32
    %20 = vector.broadcast %c0_i32_22 : i32 to vector<8x1024xi32>
    %21 = arith.cmpi eq, %19, %20 : vector<8x1024xi32>
    %c0_i32_23 = arith.constant 0 : i32
    %cst = arith.constant 0.000000e+00 : f32
    %22 = vector.broadcast %cst : f32 to vector<8x1024xf32>
    %c0_i32_24 = arith.constant 0 : i32
    %c8_i32_25 = arith.constant 8 : i32
    %23 = arith.addi %c0_i32_24, %c8_i32_25 : i32
    %c1_i32_26 = arith.constant 1 : i32
    %24:2 = scf.for %arg9 = %c0_i32_24 to %23 step %c1_i32_26 iter_args(%arg10 = %22, %arg11 = %22) -> (vector<8x1024xf32>, vector<8x1024xf32>)  : i32 {
      %46 = arith.index_cast %arg9 : i32 to index
      %c0_42 = arith.constant 0 : index
      %c0_43 = arith.constant 0 : index
      %47 = vector.load %arg8[%46, %c0_42, %c0_43] : memref<32x8x1024xf32, #tpu.memory_space<vmem>>, vector<1x8x1024xf32>
      %48 = vector.shape_cast %47 : vector<1x8x1024xf32> to vector<8x1024xf32>
      %c8_i32_44 = arith.constant 8 : i32
      %49 = arith.muli %c0_i32_23, %c8_i32_44 : i32
      %c2576_i32 = arith.constant 2576 : i32
      %50 = arith.addi %c2576_i32, %49 : i32
      %51 = arith.addi %50, %arg9 : i32
      %52 = arith.index_cast %51 : i32 to index
      %53 = memref.load %arg2[%52] : memref<2592xf32, #tpu.memory_space<smem>>
      %c8_i32_45 = arith.constant 8 : i32
      %54 = arith.muli %c0_i32_23, %c8_i32_45 : i32
      %c2584_i32 = arith.constant 2584 : i32
      %55 = arith.addi %c2584_i32, %54 : i32
      %56 = arith.addi %55, %arg9 : i32
      %57 = arith.index_cast %56 : i32 to index
      %58 = memref.load %arg2[%57] : memref<2592xf32, #tpu.memory_space<smem>>
      %59 = vector.broadcast %53 : f32 to vector<8x1024xf32>
      %60 = arith.mulf %59, %48 : vector<8x1024xf32>
      %61 = arith.addf %arg10, %60 : vector<8x1024xf32>
      %62 = vector.broadcast %58 : f32 to vector<8x1024xf32>
      %63 = arith.mulf %62, %48 : vector<8x1024xf32>
      %64 = arith.addf %arg11, %63 : vector<8x1024xf32>
      scf.yield %61, %64 : vector<8x1024xf32>, vector<8x1024xf32>
    }
    %c8_i32_27 = arith.constant 8 : i32
    %c1_i32_28 = arith.constant 1 : i32
    %25 = tpu.dynamic_rotate %24#1 by %c1_i32_28 dim 1 : vector<8x1024xf32>, i32 -> vector<8x1024xf32>
    %26 = arith.select %21, %24#0, %25 : vector<8x1024xi1>, vector<8x1024xf32>
    %c80_i32 = arith.constant 80 : i32
    %27 = arith.addi %c80_i32, %c0_i32_23 : i32
    %28 = arith.index_cast %27 : i32 to index
    %29 = memref.load %arg3[%28] : memref<81xf32, #tpu.memory_space<smem>>
    %30 = vector.broadcast %29 : f32 to vector<8x1024xf32>
    %31 = arith.addf %26, %30 : vector<8x1024xf32>
    %32 = math.tanh %31 : vector<8x1024xf32>
    %33 = arith.index_cast %c0_i32_23 : i32 to index
    %c0_29 = arith.constant 0 : index
    %c0_30 = arith.constant 0 : index
    %34 = vector.load %arg7[%33, %c0_29, %c0_30] : memref<32x8x1024xf32, #tpu.memory_space<vmem>>, vector<1x8x1024xf32>
    %35 = vector.shape_cast %34 : vector<1x8x1024xf32> to vector<8x1024xf32>
    %36 = vector.shape_cast %32 : vector<8x1024xf32> to vector<1x8x1024xf32>
    tpu.vector_store %arg7[%33, %c0_29, %c0_30], %36 {strides = array<i32>} : memref<32x8x1024xf32, #tpu.memory_space<vmem>>, vector<1x8x1024xf32>,
    %c1_i32_31 = arith.constant 1 : i32
    %c0_32 = arith.constant 0 : index
    %c0_33 = arith.constant 0 : index
    %c0_34 = arith.constant 0 : index
    %37 = vector.load %arg7[%c0_32, %c0_33, %c0_34] : memref<32x8x1024xf32, #tpu.memory_space<vmem>>, vector<1x8x1024xf32>
    %38 = vector.shape_cast %37 : vector<1x8x1024xf32> to vector<8x1024xf32>
    %39 = arith.truncf %38 : vector<8x1024xf32> to vector<8x1024xbf16>
    %c0_35 = arith.constant 0 : index
    %c0_36 = arith.constant 0 : index
    %40 = vector.load %arg4[%c0_35, %c0_36] : memref<1024x1024xbf16, #tpu.memory_space<vmem>>, vector<1024x1024xbf16>
    %cst_37 = arith.constant dense<0.000000e+00> : vector<8x1024xf32>
    %41 = tpu.matmul %39, %40, %cst_37 {dimension_numbers = #tpu.dot_dimension_numbers<[1], [0], [0], [1], [0, 0, 1, 1], [], []>} : vector<8x1024xbf16>, vector<1024x1024xbf16>, vector<8x1024xf32> -> vector<8x1024xf32>
    %c0_38 = arith.constant 0 : index
    %c0_39 = arith.constant 0 : index
    %42 = vector.load %arg5[%c0_38, %c0_39] : memref<1x1024xf32, #tpu.memory_space<vmem>>, vector<1x1024xf32>
    %43 = vector.broadcast %42 : vector<1x1024xf32> to vector<8x1024xf32>
    %44 = arith.addf %41, %43 : vector<8x1024xf32>
    %c0_40 = arith.constant 0 : index
    %c0_41 = arith.constant 0 : index
    %45 = vector.load %arg6[%c0_40, %c0_41] : memref<8x1024xf32, #tpu.memory_space<vmem>>, vector<8x1024xf32>
    tpu.vector_store %arg6[%c0_40, %c0_41], %44 {strides = array<i32>} : memref<8x1024xf32, #tpu.memory_space<vmem>>, vector<8x1024xf32>,
    return
  }
  func.func @transform_0(%arg0: i32) -> (i32, i32) {
    %c0_i32 = arith.constant 0 : i32
    %c0_i32_0 = arith.constant 0 : i32
    return %arg0, %c0_i32 : i32, i32
  }
  func.func @transform_1(%arg0: i32) -> i32 {
    %c0_i32 = arith.constant 0 : i32
    %c0_i32_0 = arith.constant 0 : i32
    return %c0_i32 : i32
  }
  func.func @transform_2(%arg0: i32) -> i32 {
    %c0_i32 = arith.constant 0 : i32
    %c0_i32_0 = arith.constant 0 : i32
    return %c0_i32 : i32
  }
  func.func @transform_3(%arg0: i32) -> (i32, i32) {
    %c0_i32 = arith.constant 0 : i32
    %c0_i32_0 = arith.constant 0 : i32
    %c0_i32_1 = arith.constant 0 : i32
    return %c0_i32, %c0_i32_0 : i32, i32
  }
  func.func @transform_4(%arg0: i32) -> (i32, i32) {
    %c0_i32 = arith.constant 0 : i32
    %c0_i32_0 = arith.constant 0 : i32
    %c0_i32_1 = arith.constant 0 : i32
    return %c0_i32, %c0_i32_0 : i32, i32
  }
  func.func @transform_5(%arg0: i32) -> (i32, i32) {
    %c0_i32 = arith.constant 0 : i32
    %c0_i32_0 = arith.constant 0 : i32
    return %arg0, %c0_i32 : i32, i32
  }
}

</mosaic_0001>

<llo_original>
// kernel: tpu_custom_call.1
$region0: #{tpu_custom_call.1}
  #allocation0 [shape = 'u32[]', space=smem, size = 0x4, offset = 0x4, fixed_abs, tag = 'smem constant byte address 0x4 - core index']
  #allocation1 [shape = 'u32[144,128]{1,0:T(1,128)}', space=vmem, size = 0x12000, scoped, tag = 'internal scratch']
  #allocation2 [shape = 'f32[32,8,1024]{2,1,0:T(8,128)}', space=vmem, size = 0x100000, scoped, tag = 'scratch operand']
  #allocation3 [shape = 'f32[32,8,1024]{2,1,0:T(8,128)}', space=vmem, size = 0x100000, scoped, tag = 'scratch operand']
  %s0 = inlined_call_operand.hbm [shape: f32[8,1024], index: 0, kind: input, shape index: {}]
  %s1 = inlined_call_operand.hbm [shape: f32[2592], index: 1, kind: input, shape index: {}]
  %s2 = inlined_call_operand.hbm [shape: f32[81], index: 2, kind: input, shape index: {}]
  %s3 = inlined_call_operand.hbm [shape: bf16[1024,1024], index: 3, kind: input, shape index: {}]
  %s4 = inlined_call_operand.hbm [shape: f32[1,1024], index: 4, kind: input, shape index: {}]
  %s5 = inlined_call_operand.hbm [shape: f32[8,1024], index: 5, kind: output, shape index: {}]
  %s6 = sld [smem:[#allocation0]]
  $region120: #{tpu_custom_call.1} parent=0
    _
  %s8 = ssub.s32 1, %s6
  %s9 = scalar_select 0, %s8, %s6
  $region1: #{tpu_custom_call.1} parent=0
    #allocation4 [shape = 'u8[32768]{0}', space=vmem, size = 0x8000, scoped, tag = 'input window, operand 0, single buffered']
    #allocation5 [shape = 's32[1]{0}', space=sflag, size = 0x4, scoped, tag = 'scoped memory for tpu_custom_call.1']
    #allocation6 [shape = 's32[1]{0}', space=sflag, size = 0x4, scoped, tag = 'scoped memory for tpu_custom_call.1']
    #allocation7 [shape = 's32[1]{0}', space=sflag, size = 0x4, scoped, tag = 'scoped memory for tpu_custom_call.1']
    #allocation8 [shape = 'u8[10752]{0}', space=smem, size = 0x2a00, scoped, tag = 'input window, operand 1, single buffered']
    #allocation9 [shape = 'u8[512]{0}', space=smem, size = 0x200, scoped, tag = 'input window, operand 2, single buffered']
    #allocation10 [shape = 's32[1]{0}', space=sflag, size = 0x4, scoped, tag = 'scoped memory for tpu_custom_call.1']
    #allocation11 [shape = 'u8[2097152]{0}', space=vmem, size = 0x200000, scoped, tag = 'input window, operand 3, single buffered']
    #allocation12 [shape = 's32[1]{0}', space=sflag, size = 0x4, scoped, tag = 'scoped memory for tpu_custom_call.1']
    #allocation13 [shape = 'u8[4096]{0}', space=vmem, size = 0x1000, scoped, tag = 'input window, operand 4, single buffered']
    #allocation14 [shape = 'u8[32768]{0}', space=vmem, size = 0x8000, scoped, tag = 'output window, operand 0, single buffered']
    %10 = vsyncpa [#allocation5], 0
    %11 = vsyncpa [#allocation7], 0
    %12 = vsyncpa [#allocation10], 0
    %13 = vsyncpa [#allocation12], 0
    %14 = vsyncpa [#allocation6], 0
    // Predicated region
    $region2: #{tpu_custom_call.1} parent=1 // pred_check
      _
    $region3: #{tpu_custom_call.1} parent=1 // pred_check_branch
      %16 = sbr.rel (0) target = $region5
    $region4: #{tpu_custom_call.1} parent=1 // pred_region
      %s18 = ssub.s32 1024, 1024
      %19 = vsyncadd [#allocation5], %s18
      %s21 = sshll.u32 [#allocation4], 4
      %s22 = int_to_ptr.vmem [resolvable:$true] %s21
      %24 = dma.hbm_to_vmem [thread:$0]  %s0, 1024, %s22, [#allocation5]
    $region5: #{tpu_custom_call.1} parent=1 // pred_fallthru
      _
    // Predicated region
    $region6: #{tpu_custom_call.1} parent=1 // pred_check
      _
    $region7: #{tpu_custom_call.1} parent=1 // pred_check_branch
      %26 = sbr.rel (0) target = $region9
    $region8: #{tpu_custom_call.1} parent=1 // pred_region
      %s28 = ssub.s32 336, 336
      %29 = vsyncadd [#allocation7], %s28
      %32 = dma.hbm_to_smem %s1, 336, [#allocation8], [#allocation7]
    $region9: #{tpu_custom_call.1} parent=1 // pred_fallthru
      _
    // Predicated region
    $region10: #{tpu_custom_call.1} parent=1 // pred_check
      _
    $region11: #{tpu_custom_call.1} parent=1 // pred_check_branch
      %34 = sbr.rel (0) target = $region13
    $region12: #{tpu_custom_call.1} parent=1 // pred_region
      %s36 = ssub.s32 16, 16
      %37 = vsyncadd [#allocation10], %s36
      %40 = dma.hbm_to_smem %s2, 16, [#allocation9], [#allocation10]
    $region13: #{tpu_custom_call.1} parent=1 // pred_fallthru
      _
    // Predicated region
    $region14: #{tpu_custom_call.1} parent=1 // pred_check
      _
    $region15: #{tpu_custom_call.1} parent=1 // pred_check_branch
      %42 = sbr.rel (0) target = $region17
    $region16: #{tpu_custom_call.1} parent=1 // pred_region
      %s44 = ssub.s32 65536, 65536
      %45 = vsyncadd [#allocation12], %s44
      %s46 = sshll.u32 [#allocation11], 4
      %s47 = int_to_ptr.vmem [resolvable:$true] %s46
      %52 = dma.hbm_to_vmem [thread:$0]  %s3, 65536, %s47, [#allocation12], 512, 512, 32
    $region17: #{tpu_custom_call.1} parent=1 // pred_fallthru
      _
    // Predicated region
    $region18: #{tpu_custom_call.1} parent=1 // pred_check
      _
    $region19: #{tpu_custom_call.1} parent=1 // pred_check_branch
      %54 = sbr.rel (0) target = $region21
    $region20: #{tpu_custom_call.1} parent=1 // pred_region
      %s56 = ssub.s32 128, 128
      %57 = vsyncadd [#allocation12], %s56
      %s59 = sshll.u32 [#allocation13], 4
      %s60 = int_to_ptr.vmem [resolvable:$true] %s59
      %62 = dma.hbm_to_vmem [thread:$0]  %s4, 128, %s60, [#allocation12]
    $region21: #{tpu_custom_call.1} parent=1 // pred_fallthru
      _
    // Predicated region
    $region22: #{tpu_custom_call.1} parent=1 // pred_check
      _
    $region23: #{tpu_custom_call.1} parent=1 // pred_check_branch
      %64 = sbr.rel (0) target = $region25
    $region24: #{tpu_custom_call.1} parent=1 // pred_region
      %65 = dma.done [#allocation5], 1024
    $region25: #{tpu_custom_call.1} parent=1 // pred_fallthru
      _
    // Predicated region
    $region26: #{tpu_custom_call.1} parent=1 // pred_check
      _
    $region27: #{tpu_custom_call.1} parent=1 // pred_check_branch
      %67 = sbr.rel (0) target = $region29
    $region28: #{tpu_custom_call.1} parent=1 // pred_region
      %68 = dma.done [#allocation7], 336
    $region29: #{tpu_custom_call.1} parent=1 // pred_fallthru
      _
    // Predicated region
    $region30: #{tpu_custom_call.1} parent=1 // pred_check
      _
    $region31: #{tpu_custom_call.1} parent=1 // pred_check_branch
      %70 = sbr.rel (0) target = $region33
    $region32: #{tpu_custom_call.1} parent=1 // pred_region
      %71 = dma.done [#allocation10], 16
    $region33: #{tpu_custom_call.1} parent=1 // pred_fallthru
      _
    // Predicated region
    $region34: #{tpu_custom_call.1} parent=1 // pred_check
      _
    $region35: #{tpu_custom_call.1} parent=1 // pred_check_branch
      %73 = sbr.rel (0) target = $region37
    $region36: #{tpu_custom_call.1} parent=1 // pred_region
      %74 = dma.done [#allocation12], 65536
    $region37: #{tpu_custom_call.1} parent=1 // pred_fallthru
      _
    // Predicated region
    $region38: #{tpu_custom_call.1} parent=1 // pred_check
      _
    $region39: #{tpu_custom_call.1} parent=1 // pred_check_branch
      %76 = sbr.rel (0) target = $region41
    $region40: #{tpu_custom_call.1} parent=1 // pred_region
      %77 = dma.done [#allocation12], 128
    $region41: #{tpu_custom_call.1} parent=1 // pred_fallthru
      _
    %78 = sfence
    %v79 = vlaneseq
    %v80 = vand.u32 %v79, 127
    %v81 = vadd.s32 %v80, 128
    %v82 = vadd.s32 %v80, 256
    %v83 = vadd.s32 %v80, 384
    %v84 = vadd.s32 %v80, 512
    %v85 = vadd.s32 %v80, 640
    %v86 = vadd.s32 %v80, 768
    %v87 = vadd.s32 %v80, 896
    %v88 = vld [vmem:[#allocation4] sm:$0xff]
    %v89 = vld [vmem:[#allocation4 + $0x8] sm:$0xff]
    %v90 = vld [vmem:[#allocation4 + $0x10] sm:$0xff]
    %v91 = vld [vmem:[#allocation4 + $0x18] sm:$0xff]
    %v92 = vld [vmem:[#allocation4 + $0x20] sm:$0xff]
    %v93 = vld [vmem:[#allocation4 + $0x28] sm:$0xff]
    %v94 = vld [vmem:[#allocation4 + $0x30] sm:$0xff]
    %v95 = vld [vmem:[#allocation4 + $0x38] sm:$0xff]
    %96 = vst [vmem:[#allocation2] sm:$0xff] %v88
    %97 = vst [vmem:[#allocation2 + $0x8] sm:$0xff] %v89
    %98 = vst [vmem:[#allocation2 + $0x10] sm:$0xff] %v90
    %99 = vst [vmem:[#allocation2 + $0x18] sm:$0xff] %v91
    %100 = vst [vmem:[#allocation2 + $0x20] sm:$0xff] %v92
    %101 = vst [vmem:[#allocation2 + $0x28] sm:$0xff] %v93
    %102 = vst [vmem:[#allocation2 + $0x30] sm:$0xff] %v94
    %103 = vst [vmem:[#allocation2 + $0x38] sm:$0xff] %v95
    loop: start=0, step=1, limit=8
    $region42: #{tpu_custom_call.1} parent=1 // loop_pre_header
      _
    $region43: #{tpu_custom_call.1} parent=1 // loop_header
      %s105 = sphi 0, %s109
      %p106 = scmp.ge.s32.totalorder %s105, 8
    $region44: #{tpu_custom_call.1} parent=1 // loop_header_branch
      %108 = sbr.rel (%p106) target = $region48
    $region45: #{tpu_custom_call.1} parent=1 // loop_body
      %v110 = vld [vmem:[#allocation2] sm:$0xff]
      %v111 = vld [vmem:[#allocation2 + $0x8] sm:$0xff]
      %v112 = vld [vmem:[#allocation2 + $0x10] sm:$0xff]
      %v113 = vld [vmem:[#allocation2 + $0x18] sm:$0xff]
      %v114 = vld [vmem:[#allocation2 + $0x20] sm:$0xff]
      %v115 = vld [vmem:[#allocation2 + $0x28] sm:$0xff]
      %v116 = vld [vmem:[#allocation2 + $0x30] sm:$0xff]
      %v117 = vld [vmem:[#allocation2 + $0x38] sm:$0xff]
      %118 = vrot.lane.b32.xlu0 %v110, 127
      %v119 = vpop.permute.xlu0 %118
      %120 = vrot.lane.b32.xlu0 %v111, 127
      %v121 = vpop.permute.xlu0 %120
      %122 = vrot.lane.b32.xlu0 %v112, 127
      %v123 = vpop.permute.xlu0 %122
      %124 = vrot.lane.b32.xlu0 %v113, 127
      %v125 = vpop.permute.xlu0 %124
      %126 = vrot.lane.b32.xlu0 %v114, 127
      %v127 = vpop.permute.xlu0 %126
      %128 = vrot.lane.b32.xlu0 %v115, 127
      %v129 = vpop.permute.xlu0 %128
      %130 = vrot.lane.b32.xlu0 %v116, 127
      %v131 = vpop.permute.xlu0 %130
      %132 = vrot.lane.b32.xlu0 %v117, 127
      %v133 = vpop.permute.xlu0 %132
      %vm134 = vcmp.lt.s32.totalorder %v80, 127
      %v135 = vsel %vm134, %v131, %v133
      %v136 = vsel %vm134, %v129, %v131
      %v137 = vsel %vm134, %v127, %v129
      %v138 = vsel %vm134, %v125, %v127
      %v139 = vsel %vm134, %v123, %v125
      %v140 = vsel %vm134, %v121, %v123
      %v141 = vsel %vm134, %v119, %v121
      %v142 = vsel %vm134, %v133, %v119
      %s143 = sld [smem:[#allocation8 + %s105]]
      %s144 = sadd.s32 %s105, 8
      %s145 = sld [smem:[#allocation8 + %s144]]
      %v146 = vstv %s143
      %v147 = vmul.f32 %v146, %v110
      %v148 = vmul.f32 %v146, %v111
      %v149 = vmul.f32 %v146, %v112
      %v150 = vmul.f32 %v146, %v113
      %v151 = vmul.f32 %v146, %v114
      %v152 = vmul.f32 %v146, %v115
      %v153 = vmul.f32 %v146, %v116
      %v154 = vmul.f32 %v146, %v117
      %v155 = vadd.f32 %v147, 0.0
      %v156 = vadd.f32 %v148, 0.0
      %v157 = vadd.f32 %v149, 0.0
      %v158 = vadd.f32 %v150, 0.0
      %v159 = vadd.f32 %v151, 0.0
      %v160 = vadd.f32 %v152, 0.0
      %v161 = vadd.f32 %v153, 0.0
      %v162 = vadd.f32 %v154, 0.0
      %v163 = vstv %s145
      %v164 = vmul.f32 %v163, %v141
      %v165 = vmul.f32 %v163, %v140
      %v166 = vmul.f32 %v163, %v139
      %v167 = vmul.f32 %v163, %v138
      %v168 = vmul.f32 %v163, %v137
      %v169 = vmul.f32 %v163, %v136
      %v170 = vmul.f32 %v163, %v135
      %v171 = vmul.f32 %v163, %v142
      %v172 = vadd.f32 %v155, %v164
      %v173 = vadd.f32 %v156, %v165
      %v174 = vadd.f32 %v157, %v166
      %v175 = vadd.f32 %v158, %v167
      %v176 = vadd.f32 %v159, %v168
      %v177 = vadd.f32 %v160, %v169
      %v178 = vadd.f32 %v161, %v170
      %v179 = vadd.f32 %v162, %v171
      %s180 = sld [smem:[#allocation9 + %s105]]
      %v181 = vstv %s180
      %v182 = vadd.f32 %v172, %v181
      %v183 = vadd.f32 %v173, %v181
      %v184 = vadd.f32 %v174, %v181
      %v185 = vadd.f32 %v175, %v181
      %v186 = vadd.f32 %v176, %v181
      %v187 = vadd.f32 %v177, %v181
      %v188 = vadd.f32 %v178, %v181
      %v189 = vadd.f32 %v179, %v181
      %v190 = vtanh.pop %v182
      %v191 = vtanh.pop %v183
      %v192 = vtanh.pop %v184
      %v193 = vtanh.pop %v185
      %v194 = vtanh.pop %v186
      %v195 = vtanh.pop %v187
      %v196 = vtanh.pop %v188
      %v197 = vtanh.pop %v189
      %s198 = smul.u32 %s105, 8
      %s199 = smul.addr %s198, 8
      %s200 = scalar_lea.vmem [#allocation3], %s199
      %201 = vst [vmem:[%s200] sm:$0xff] %v190
      %202 = vst [vmem:[%s200 + $0x8] sm:$0xff] %v191
      %203 = vst [vmem:[%s200 + $0x10] sm:$0xff] %v192
      %204 = vst [vmem:[%s200 + $0x18] sm:$0xff] %v193
      %205 = vst [vmem:[%s200 + $0x20] sm:$0xff] %v194
      %206 = vst [vmem:[%s200 + $0x28] sm:$0xff] %v195
      %207 = vst [vmem:[%s200 + $0x30] sm:$0xff] %v196
      %208 = vst [vmem:[%s200 + $0x38] sm:$0xff] %v197
    $region46: #{tpu_custom_call.1} parent=1 // loop_footer
      %s109 = sadd.s32 1, %s105
    $region47: #{tpu_custom_call.1} parent=1 // loop_footer_branch
      %104 = sbr.rel target = $region43
    $region48: #{tpu_custom_call.1} parent=1 // loop_exit
      _
    loop: start=0, step=1, limit=16
    $region49: #{tpu_custom_call.1} parent=1 // loop_pre_header
      _
    $region50: #{tpu_custom_call.1} parent=1 // loop_header
      %s210 = sphi 0, %s214
      %p211 = scmp.ge.s32.totalorder %s210, 16
    $region51: #{tpu_custom_call.1} parent=1 // loop_header_branch
      %213 = sbr.rel (%p211) target = $region55
    $region52: #{tpu_custom_call.1} parent=1 // loop_body
      loop: start=0, step=1, limit=8
      $region56: #{tpu_custom_call.1} parent=52 // loop_pre_header
        _
      $region57: #{tpu_custom_call.1} parent=52 // loop_header
        %s216 = sphi 0, %s220
        %p217 = scmp.ge.s32.totalorder %s216, 8
        %v221 = vphi 0.0, %v298
        %v222 = vphi 0.0, %v299
        %v223 = vphi 0.0, %v300
        %v224 = vphi 0.0, %v301
        %v225 = vphi 0.0, %v302
        %v226 = vphi 0.0, %v303
        %v227 = vphi 0.0, %v304
        %v228 = vphi 0.0, %v305
      $region58: #{tpu_custom_call.1} parent=52 // loop_header_branch
        %219 = sbr.rel (%p217) target = $region62
      $region59: #{tpu_custom_call.1} parent=52 // loop_body
        %s229 = smul.u32 %s216, 8
        %s230 = smul.addr %s229, 8
        %s231 = scalar_lea.vmem [#allocation3], %s230
        %v232 = vld [vmem:[%s231] sm:$0xff]
        %v233 = vld [vmem:[%s231 + $0x8] sm:$0xff]
        %v234 = vld [vmem:[%s231 + $0x10] sm:$0xff]
        %v235 = vld [vmem:[%s231 + $0x18] sm:$0xff]
        %v236 = vld [vmem:[%s231 + $0x20] sm:$0xff]
        %v237 = vld [vmem:[%s231 + $0x28] sm:$0xff]
        %v238 = vld [vmem:[%s231 + $0x30] sm:$0xff]
        %v239 = vld [vmem:[%s231 + $0x38] sm:$0xff]
        %240 = vrot.lane.b32.xlu0 %v232, 126
        %v241 = vpop.permute.xlu0 %240
        %242 = vrot.lane.b32.xlu0 %v233, 126
        %v243 = vpop.permute.xlu0 %242
        %244 = vrot.lane.b32.xlu0 %v234, 126
        %v245 = vpop.permute.xlu0 %244
        %246 = vrot.lane.b32.xlu0 %v235, 126
        %v247 = vpop.permute.xlu0 %246
        %248 = vrot.lane.b32.xlu0 %v236, 126
        %v249 = vpop.permute.xlu0 %248
        %250 = vrot.lane.b32.xlu0 %v237, 126
        %v251 = vpop.permute.xlu0 %250
        %252 = vrot.lane.b32.xlu0 %v238, 126
        %v253 = vpop.permute.xlu0 %252
        %254 = vrot.lane.b32.xlu0 %v239, 126
        %v255 = vpop.permute.xlu0 %254
        %vm256 = vcmp.lt.s32.totalorder %v80, 126
        %v257 = vsel %vm256, %v253, %v255
        %v258 = vsel %vm256, %v251, %v253
        %v259 = vsel %vm256, %v249, %v251
        %v260 = vsel %vm256, %v247, %v249
        %v261 = vsel %vm256, %v245, %v247
        %v262 = vsel %vm256, %v243, %v245
        %v263 = vsel %vm256, %v241, %v243
        %v264 = vsel %vm256, %v255, %v241
        %s265 = smul.u32 %s210, 8
        %s266 = sadd.s32 %s265, 16
        %s267 = sadd.s32 %s266, %s216
        %s268 = sld [smem:[#allocation8 + %s267]]
        %s269 = sadd.s32 %s265, 144
        %s270 = sadd.s32 %s269, %s216
        %s271 = sld [smem:[#allocation8 + %s270]]
        %v272 = vstv %s268
        %v273 = vmul.f32 %v272, %v232
        %v274 = vmul.f32 %v272, %v233
        %v275 = vmul.f32 %v272, %v234
        %v276 = vmul.f32 %v272, %v235
        %v277 = vmul.f32 %v272, %v236
        %v278 = vmul.f32 %v272, %v237
        %v279 = vmul.f32 %v272, %v238
        %v280 = vmul.f32 %v272, %v239
        %v281 = vadd.f32 %v221, %v273
        %v282 = vadd.f32 %v222, %v274
        %v283 = vadd.f32 %v223, %v275
        %v284 = vadd.f32 %v224, %v276
        %v285 = vadd.f32 %v225, %v277
        %v286 = vadd.f32 %v226, %v278
        %v287 = vadd.f32 %v227, %v279
        %v288 = vadd.f32 %v228, %v280
        %v289 = vstv %s271
        %v290 = vmul.f32 %v289, %v263
        %v291 = vmul.f32 %v289, %v262
        %v292 = vmul.f32 %v289, %v261
        %v293 = vmul.f32 %v289, %v260
        %v294 = vmul.f32 %v289, %v259
        %v295 = vmul.f32 %v289, %v258
        %v296 = vmul.f32 %v289, %v257
        %v297 = vmul.f32 %v289, %v264
        %v298 = vadd.f32 %v281, %v290
        %v299 = vadd.f32 %v282, %v291
        %v300 = vadd.f32 %v283, %v292
        %v301 = vadd.f32 %v284, %v293
        %v302 = vadd.f32 %v285, %v294
        %v303 = vadd.f32 %v286, %v295
        %v304 = vadd.f32 %v287, %v296
        %v305 = vadd.f32 %v288, %v297
      $region60: #{tpu_custom_call.1} parent=52 // loop_footer
        %s220 = sadd.s32 1, %s216
      $region61: #{tpu_custom_call.1} parent=52 // loop_footer_branch
        %215 = sbr.rel target = $region57
      $region62: #{tpu_custom_call.1} parent=52 // loop_exit
        _
      %s306 = sadd.s32 %s210, 8
      %s307 = sld [smem:[#allocation9 + %s306]]
      %v308 = vstv %s307
      %v309 = vadd.f32 %v221, %v308
      %v310 = vadd.f32 %v222, %v308
      %v311 = vadd.f32 %v223, %v308
      %v312 = vadd.f32 %v224, %v308
      %v313 = vadd.f32 %v225, %v308
      %v314 = vadd.f32 %v226, %v308
      %v315 = vadd.f32 %v227, %v308
      %v316 = vadd.f32 %v228, %v308
      %v317 = vtanh.pop %v309
      %v318 = vtanh.pop %v310
      %v319 = vtanh.pop %v311
      %v320 = vtanh.pop %v312
      %v321 = vtanh.pop %v313
      %v322 = vtanh.pop %v314
      %v323 = vtanh.pop %v315
      %v324 = vtanh.pop %v316
      %s325 = smul.u32 %s210, 8
      %s326 = smul.addr %s325, 8
      %s327 = scalar_lea.vmem [#allocation2], %s326
      %328 = vst [vmem:[%s327] sm:$0xff] %v317
      %329 = vst [vmem:[%s327 + $0x8] sm:$0xff] %v318
      %330 = vst [vmem:[%s327 + $0x10] sm:$0xff] %v319
      %331 = vst [vmem:[%s327 + $0x18] sm:$0xff] %v320
      %332 = vst [vmem:[%s327 + $0x20] sm:$0xff] %v321
      %333 = vst [vmem:[%s327 + $0x28] sm:$0xff] %v322
      %334 = vst [vmem:[%s327 + $0x30] sm:$0xff] %v323
      %335 = vst [vmem:[%s327 + $0x38] sm:$0xff] %v324
    $region53: #{tpu_custom_call.1} parent=1 // loop_footer
      %s214 = sadd.s32 1, %s210
    $region54: #{tpu_custom_call.1} parent=1 // loop_footer_branch
      %209 = sbr.rel target = $region50
    $region55: #{tpu_custom_call.1} parent=1 // loop_exit
      _
    loop: start=0, step=1, limit=32
    $region63: #{tpu_custom_call.1} parent=1 // loop_pre_header
      _
    $region64: #{tpu_custom_call.1} parent=1 // loop_header
      %s337 = sphi 0, %s341
      %p338 = scmp.ge.s32.totalorder %s337, 32
    $region65: #{tpu_custom_call.1} parent=1 // loop_header_branch
      %340 = sbr.rel (%p338) target = $region69
    $region66: #{tpu_custom_call.1} parent=1 // loop_body
      loop: start=0, step=1, limit=16
      $region70: #{tpu_custom_call.1} parent=66 // loop_pre_header
        _
      $region71: #{tpu_custom_call.1} parent=66 // loop_header
        %s343 = sphi 0, %s347
        %p344 = scmp.ge.s32.totalorder %s343, 16
        %v348 = vphi 0.0, %v425
        %v349 = vphi 0.0, %v426
        %v350 = vphi 0.0, %v427
        %v351 = vphi 0.0, %v428
        %v352 = vphi 0.0, %v429
        %v353 = vphi 0.0, %v430
        %v354 = vphi 0.0, %v431
        %v355 = vphi 0.0, %v432
      $region72: #{tpu_custom_call.1} parent=66 // loop_header_branch
        %346 = sbr.rel (%p344) target = $region76
      $region73: #{tpu_custom_call.1} parent=66 // loop_body
        %s356 = smul.u32 %s343, 8
        %s357 = smul.addr %s356, 8
        %s358 = scalar_lea.vmem [#allocation2], %s357
        %v359 = vld [vmem:[%s358] sm:$0xff]
        %v360 = vld [vmem:[%s358 + $0x8] sm:$0xff]
        %v361 = vld [vmem:[%s358 + $0x10] sm:$0xff]
        %v362 = vld [vmem:[%s358 + $0x18] sm:$0xff]
        %v363 = vld [vmem:[%s358 + $0x20] sm:$0xff]
        %v364 = vld [vmem:[%s358 + $0x28] sm:$0xff]
        %v365 = vld [vmem:[%s358 + $0x30] sm:$0xff]
        %v366 = vld [vmem:[%s358 + $0x38] sm:$0xff]
        %367 = vrot.lane.b32.xlu0 %v359, 124
        %v368 = vpop.permute.xlu0 %367
        %369 = vrot.lane.b32.xlu0 %v360, 124
        %v370 = vpop.permute.xlu0 %369
        %371 = vrot.lane.b32.xlu0 %v361, 124
        %v372 = vpop.permute.xlu0 %371
        %373 = vrot.lane.b32.xlu0 %v362, 124
        %v374 = vpop.permute.xlu0 %373
        %375 = vrot.lane.b32.xlu0 %v363, 124
        %v376 = vpop.permute.xlu0 %375
        %377 = vrot.lane.b32.xlu0 %v364, 124
        %v378 = vpop.permute.xlu0 %377
        %379 = vrot.lane.b32.xlu0 %v365, 124
        %v380 = vpop.permute.xlu0 %379
        %381 = vrot.lane.b32.xlu0 %v366, 124
        %v382 = vpop.permute.xlu0 %381
        %vm383 = vcmp.lt.s32.totalorder %v80, 124
        %v384 = vsel %vm383, %v380, %v382
        %v385 = vsel %vm383, %v378, %v380
        %v386 = vsel %vm383, %v376, %v378
        %v387 = vsel %vm383, %v374, %v376
        %v388 = vsel %vm383, %v372, %v374
        %v389 = vsel %vm383, %v370, %v372
        %v390 = vsel %vm383, %v368, %v370
        %v391 = vsel %vm383, %v382, %v368
        %s392 = smul.u32 %s337, 16
        %s393 = sadd.s32 %s392, 272
        %s394 = sadd.s32 %s393, %s343
        %s395 = sld [smem:[#allocation8 + %s394]]
        %s396 = sadd.s32 %s392, 784
        %s397 = sadd.s32 %s396, %s343
        %s398 = sld [smem:[#allocation8 + %s397]]
        %v399 = vstv %s395
        %v400 = vmul.f32 %v399, %v359
        %v401 = vmul.f32 %v399, %v360
        %v402 = vmul.f32 %v399, %v361
        %v403 = vmul.f32 %v399, %v362
        %v404 = vmul.f32 %v399, %v363
        %v405 = vmul.f32 %v399, %v364
        %v406 = vmul.f32 %v399, %v365
        %v407 = vmul.f32 %v399, %v366
        %v408 = vadd.f32 %v348, %v400
        %v409 = vadd.f32 %v349, %v401
        %v410 = vadd.f32 %v350, %v402
        %v411 = vadd.f32 %v351, %v403
        %v412 = vadd.f32 %v352, %v404
        %v413 = vadd.f32 %v353, %v405
        %v414 = vadd.f32 %v354, %v406
        %v415 = vadd.f32 %v355, %v407
        %v416 = vstv %s398
        %v417 = vmul.f32 %v416, %v390
        %v418 = vmul.f32 %v416, %v389
        %v419 = vmul.f32 %v416, %v388
        %v420 = vmul.f32 %v416, %v387
        %v421 = vmul.f32 %v416, %v386
        %v422 = vmul.f32 %v416, %v385
        %v423 = vmul.f32 %v416, %v384
        %v424 = vmul.f32 %v416, %v391
        %v425 = vadd.f32 %v408, %v417
        %v426 = vadd.f32 %v409, %v418
        %v427 = vadd.f32 %v410, %v419
        %v428 = vadd.f32 %v411, %v420
        %v429 = vadd.f32 %v412, %v421
        %v430 = vadd.f32 %v413, %v422
        %v431 = vadd.f32 %v414, %v423
        %v432 = vadd.f32 %v415, %v424
      $region74: #{tpu_custom_call.1} parent=66 // loop_footer
        %s347 = sadd.s32 1, %s343
      $region75: #{tpu_custom_call.1} parent=66 // loop_footer_branch
        %342 = sbr.rel target = $region71
      $region76: #{tpu_custom_call.1} parent=66 // loop_exit
        _
      %s433 = sadd.s32 %s337, 24
      %s434 = sld [smem:[#allocation9 + %s433]]
      %v435 = vstv %s434
      %v436 = vadd.f32 %v348, %v435
      %v437 = vadd.f32 %v349, %v435
      %v438 = vadd.f32 %v350, %v435
      %v439 = vadd.f32 %v351, %v435
      %v440 = vadd.f32 %v352, %v435
      %v441 = vadd.f32 %v353, %v435
      %v442 = vadd.f32 %v354, %v435
      %v443 = vadd.f32 %v355, %v435
      %v444 = vtanh.pop %v436
      %v445 = vtanh.pop %v437
      %v446 = vtanh.pop %v438
      %v447 = vtanh.pop %v439
      %v448 = vtanh.pop %v440
      %v449 = vtanh.pop %v441
      %v450 = vtanh.pop %v442
      %v451 = vtanh.pop %v443
      %s452 = smul.u32 %s337, 8
      %s453 = smul.addr %s452, 8
      %s454 = scalar_lea.vmem [#allocation3], %s453
      %455 = vst [vmem:[%s454] sm:$0xff] %v444
      %456 = vst [vmem:[%s454 + $0x8] sm:$0xff] %v445
      %457 = vst [vmem:[%s454 + $0x10] sm:$0xff] %v446
      %458 = vst [vmem:[%s454 + $0x18] sm:$0xff] %v447
      %459 = vst [vmem:[%s454 + $0x20] sm:$0xff] %v448
      %460 = vst [vmem:[%s454 + $0x28] sm:$0xff] %v449
      %461 = vst [vmem:[%s454 + $0x30] sm:$0xff] %v450
      %462 = vst [vmem:[%s454 + $0x38] sm:$0xff] %v451
    $region67: #{tpu_custom_call.1} parent=1 // loop_footer
      %s341 = sadd.s32 1, %s337
    $region68: #{tpu_custom_call.1} parent=1 // loop_footer_branch
      %336 = sbr.rel target = $region64
    $region69: #{tpu_custom_call.1} parent=1 // loop_exit
      _
    %v463 = vand.u32 %v80, 7
    %v464 = vand.u32 %v81, 7
    %v465 = vand.u32 %v82, 7
    %v466 = vand.u32 %v83, 7
    %v467 = vand.u32 %v84, 7
    %v468 = vand.u32 %v85, 7
    %v469 = vand.u32 %v86, 7
    %v470 = vand.u32 %v87, 7
    %vm471 = vcmp.eq.s32.totalorder %v463, 0
    %vm472 = vcmp.eq.s32.totalorder %v464, 0
    %vm473 = vcmp.eq.s32.totalorder %v465, 0
    %vm474 = vcmp.eq.s32.totalorder %v466, 0
    %vm475 = vcmp.eq.s32.totalorder %v467, 0
    %vm476 = vcmp.eq.s32.totalorder %v468, 0
    %vm477 = vcmp.eq.s32.totalorder %v469, 0
    %vm478 = vcmp.eq.s32.totalorder %v470, 0
    loop: start=0, step=1, limit=16
    $region77: #{tpu_custom_call.1} parent=1 // loop_pre_header
      _
    $region78: #{tpu_custom_call.1} parent=1 // loop_header
      %s480 = sphi 0, %s484
      %p481 = scmp.ge.s32.totalorder %s480, 16
    $region79: #{tpu_custom_call.1} parent=1 // loop_header_branch
      %483 = sbr.rel (%p481) target = $region83
    $region80: #{tpu_custom_call.1} parent=1 // loop_body
      loop: start=0, step=1, limit=32
      $region84: #{tpu_custom_call.1} parent=80 // loop_pre_header
        _
      $region85: #{tpu_custom_call.1} parent=80 // loop_header
        %s486 = sphi 0, %s490
        %p487 = scmp.ge.s32.totalorder %s486, 32
        %v491 = vphi 0.0, %v534
        %v492 = vphi 0.0, %v535
        %v493 = vphi 0.0, %v536
        %v494 = vphi 0.0, %v537
        %v495 = vphi 0.0, %v538
        %v496 = vphi 0.0, %v539
        %v497 = vphi 0.0, %v540
        %v498 = vphi 0.0, %v541
        %v499 = vphi 0.0, %v551
        %v500 = vphi 0.0, %v552
        %v501 = vphi 0.0, %v553
        %v502 = vphi 0.0, %v554
        %v503 = vphi 0.0, %v555
        %v504 = vphi 0.0, %v556
        %v505 = vphi 0.0, %v557
        %v506 = vphi 0.0, %v558
      $region86: #{tpu_custom_call.1} parent=80 // loop_header_branch
        %489 = sbr.rel (%p487) target = $region90
      $region87: #{tpu_custom_call.1} parent=80 // loop_body
        %s507 = smul.u32 %s486, 8
        %s508 = smul.addr %s507, 8
        %s509 = scalar_lea.vmem [#allocation3], %s508
        %v510 = vld [vmem:[%s509] sm:$0xff]
        %v511 = vld [vmem:[%s509 + $0x8] sm:$0xff]
        %v512 = vld [vmem:[%s509 + $0x10] sm:$0xff]
        %v513 = vld [vmem:[%s509 + $0x18] sm:$0xff]
        %v514 = vld [vmem:[%s509 + $0x20] sm:$0xff]
        %v515 = vld [vmem:[%s509 + $0x28] sm:$0xff]
        %v516 = vld [vmem:[%s509 + $0x30] sm:$0xff]
        %v517 = vld [vmem:[%s509 + $0x38] sm:$0xff]
        %s518 = smul.u32 %s480, 32
        %s519 = sadd.s32 %s518, 1296
        %s520 = sadd.s32 %s519, %s486
        %s521 = sld [smem:[#allocation8 + %s520]]
        %s522 = sadd.s32 %s518, 1808
        %s523 = sadd.s32 %s522, %s486
        %s524 = sld [smem:[#allocation8 + %s523]]
        %v525 = vstv %s521
        %v526 = vmul.f32 %v525, %v510
        %v527 = vmul.f32 %v525, %v511
        %v528 = vmul.f32 %v525, %v512
        %v529 = vmul.f32 %v525, %v513
        %v530 = vmul.f32 %v525, %v514
        %v531 = vmul.f32 %v525, %v515
        %v532 = vmul.f32 %v525, %v516
        %v533 = vmul.f32 %v525, %v517
        %v534 = vadd.f32 %v491, %v526
        %v535 = vadd.f32 %v492, %v527
        %v536 = vadd.f32 %v493, %v528
        %v537 = vadd.f32 %v494, %v529
        %v538 = vadd.f32 %v495, %v530
        %v539 = vadd.f32 %v496, %v531
        %v540 = vadd.f32 %v497, %v532
        %v541 = vadd.f32 %v498, %v533
        %v542 = vstv %s524
        %v543 = vmul.f32 %v542, %v510
        %v544 = vmul.f32 %v542, %v511
        %v545 = vmul.f32 %v542, %v512
        %v546 = vmul.f32 %v542, %v513
        %v547 = vmul.f32 %v542, %v514
        %v548 = vmul.f32 %v542, %v515
        %v549 = vmul.f32 %v542, %v516
        %v550 = vmul.f32 %v542, %v517
        %v551 = vadd.f32 %v499, %v543
        %v552 = vadd.f32 %v500, %v544
        %v553 = vadd.f32 %v501, %v545
        %v554 = vadd.f32 %v502, %v546
        %v555 = vadd.f32 %v503, %v547
        %v556 = vadd.f32 %v504, %v548
        %v557 = vadd.f32 %v505, %v549
        %v558 = vadd.f32 %v506, %v550
      $region88: #{tpu_custom_call.1} parent=80 // loop_footer
        %s490 = sadd.s32 1, %s486
      $region89: #{tpu_custom_call.1} parent=80 // loop_footer_branch
        %485 = sbr.rel target = $region85
      $region90: #{tpu_custom_call.1} parent=80 // loop_exit
        _
      %559 = vrot.lane.b32.xlu0 %v499, 4
      %v560 = vpop.permute.xlu0 %559
      %561 = vrot.lane.b32.xlu0 %v500, 4
      %v562 = vpop.permute.xlu0 %561
      %563 = vrot.lane.b32.xlu0 %v501, 4
      %v564 = vpop.permute.xlu0 %563
      %565 = vrot.lane.b32.xlu0 %v502, 4
      %v566 = vpop.permute.xlu0 %565
      %567 = vrot.lane.b32.xlu0 %v503, 4
      %v568 = vpop.permute.xlu0 %567
      %569 = vrot.lane.b32.xlu0 %v504, 4
      %v570 = vpop.permute.xlu0 %569
      %571 = vrot.lane.b32.xlu0 %v505, 4
      %v572 = vpop.permute.xlu0 %571
      %573 = vrot.lane.b32.xlu0 %v506, 4
      %v574 = vpop.permute.xlu0 %573
      %vm575 = vcmp.lt.s32.totalorder %v80, 4
      %v576 = vsel %vm575, %v572, %v574
      %v577 = vsel %vm575, %v570, %v572
      %v578 = vsel %vm575, %v568, %v570
      %v579 = vsel %vm575, %v566, %v568
      %v580 = vsel %vm575, %v564, %v566
      %v581 = vsel %vm575, %v562, %v564
      %v582 = vsel %vm575, %v560, %v562
      %v583 = vsel %vm575, %v574, %v560
      %v584 = vsel %vm471, %v491, %v583
      %v585 = vsel %vm472, %v492, %v582
      %v586 = vsel %vm473, %v493, %v581
      %v587 = vsel %vm474, %v494, %v580
      %v588 = vsel %vm475, %v495, %v579
      %v589 = vsel %vm476, %v496, %v578
      %v590 = vsel %vm477, %v497, %v577
      %v591 = vsel %vm478, %v498, %v576
      %s592 = sadd.s32 %s480, 56
      %s593 = sld [smem:[#allocation9 + %s592]]
      %v594 = vstv %s593
      %v595 = vadd.f32 %v584, %v594
      %v596 = vadd.f32 %v585, %v594
      %v597 = vadd.f32 %v586, %v594
      %v598 = vadd.f32 %v587, %v594
      %v599 = vadd.f32 %v588, %v594
      %v600 = vadd.f32 %v589, %v594
      %v601 = vadd.f32 %v590, %v594
      %v602 = vadd.f32 %v591, %v594
      %v603 = vtanh.pop %v595
      %v604 = vtanh.pop %v596
      %v605 = vtanh.pop %v597
      %v606 = vtanh.pop %v598
      %v607 = vtanh.pop %v599
      %v608 = vtanh.pop %v600
      %v609 = vtanh.pop %v601
      %v610 = vtanh.pop %v602
      %s611 = smul.u32 %s480, 8
      %s612 = smul.addr %s611, 8
      %s613 = scalar_lea.vmem [#allocation2], %s612
      %614 = vst [vmem:[%s613] sm:$0xff] %v603
      %615 = vst [vmem:[%s613 + $0x8] sm:$0xff] %v604
      %616 = vst [vmem:[%s613 + $0x10] sm:$0xff] %v605
      %617 = vst [vmem:[%s613 + $0x18] sm:$0xff] %v606
      %618 = vst [vmem:[%s613 + $0x20] sm:$0xff] %v607
      %619 = vst [vmem:[%s613 + $0x28] sm:$0xff] %v608
      %620 = vst [vmem:[%s613 + $0x30] sm:$0xff] %v609
      %621 = vst [vmem:[%s613 + $0x38] sm:$0xff] %v610
    $region81: #{tpu_custom_call.1} parent=1 // loop_footer
      %s484 = sadd.s32 1, %s480
    $region82: #{tpu_custom_call.1} parent=1 // loop_footer_branch
      %479 = sbr.rel target = $region78
    $region83: #{tpu_custom_call.1} parent=1 // loop_exit
      _
    %v622 = vand.u32 %v80, 3
    %v623 = vand.u32 %v81, 3
    %v624 = vand.u32 %v82, 3
    %v625 = vand.u32 %v83, 3
    %v626 = vand.u32 %v84, 3
    %v627 = vand.u32 %v85, 3
    %v628 = vand.u32 %v86, 3
    %v629 = vand.u32 %v87, 3
    %vm630 = vcmp.eq.s32.totalorder %v622, 0
    %vm631 = vcmp.eq.s32.totalorder %v623, 0
    %vm632 = vcmp.eq.s32.totalorder %v624, 0
    %vm633 = vcmp.eq.s32.totalorder %v625, 0
    %vm634 = vcmp.eq.s32.totalorder %v626, 0
    %vm635 = vcmp.eq.s32.totalorder %v627, 0
    %vm636 = vcmp.eq.s32.totalorder %v628, 0
    %vm637 = vcmp.eq.s32.totalorder %v629, 0
    loop: start=0, step=1, limit=8
    $region91: #{tpu_custom_call.1} parent=1 // loop_pre_header
      _
    $region92: #{tpu_custom_call.1} parent=1 // loop_header
      %s639 = sphi 0, %s643
      %p640 = scmp.ge.s32.totalorder %s639, 8
    $region93: #{tpu_custom_call.1} parent=1 // loop_header_branch
      %642 = sbr.rel (%p640) target = $region97
    $region94: #{tpu_custom_call.1} parent=1 // loop_body
      loop: start=0, step=1, limit=16
      $region98: #{tpu_custom_call.1} parent=94 // loop_pre_header
        _
      $region99: #{tpu_custom_call.1} parent=94 // loop_header
        %s645 = sphi 0, %s649
        %p646 = scmp.ge.s32.totalorder %s645, 16
        %v650 = vphi 0.0, %v693
        %v651 = vphi 0.0, %v694
        %v652 = vphi 0.0, %v695
        %v653 = vphi 0.0, %v696
        %v654 = vphi 0.0, %v697
        %v655 = vphi 0.0, %v698
        %v656 = vphi 0.0, %v699
        %v657 = vphi 0.0, %v700
        %v658 = vphi 0.0, %v710
        %v659 = vphi 0.0, %v711
        %v660 = vphi 0.0, %v712
        %v661 = vphi 0.0, %v713
        %v662 = vphi 0.0, %v714
        %v663 = vphi 0.0, %v715
        %v664 = vphi 0.0, %v716
        %v665 = vphi 0.0, %v717
      $region100: #{tpu_custom_call.1} parent=94 // loop_header_branch
        %648 = sbr.rel (%p646) target = $region104
      $region101: #{tpu_custom_call.1} parent=94 // loop_body
        %s666 = smul.u32 %s645, 8
        %s667 = smul.addr %s666, 8
        %s668 = scalar_lea.vmem [#allocation2], %s667
        %v669 = vld [vmem:[%s668] sm:$0xff]
        %v670 = vld [vmem:[%s668 + $0x8] sm:$0xff]
        %v671 = vld [vmem:[%s668 + $0x10] sm:$0xff]
        %v672 = vld [vmem:[%s668 + $0x18] sm:$0xff]
        %v673 = vld [vmem:[%s668 + $0x20] sm:$0xff]
        %v674 = vld [vmem:[%s668 + $0x28] sm:$0xff]
        %v675 = vld [vmem:[%s668 + $0x30] sm:$0xff]
        %v676 = vld [vmem:[%s668 + $0x38] sm:$0xff]
        %s677 = smul.u32 %s639, 16
        %s678 = sadd.s32 %s677, 2320
        %s679 = sadd.s32 %s678, %s645
        %s680 = sld [smem:[#allocation8 + %s679]]
        %s681 = sadd.s32 %s677, 2448
        %s682 = sadd.s32 %s681, %s645
        %s683 = sld [smem:[#allocation8 + %s682]]
        %v684 = vstv %s680
        %v685 = vmul.f32 %v684, %v669
        %v686 = vmul.f32 %v684, %v670
        %v687 = vmul.f32 %v684, %v671
        %v688 = vmul.f32 %v684, %v672
        %v689 = vmul.f32 %v684, %v673
        %v690 = vmul.f32 %v684, %v674
        %v691 = vmul.f32 %v684, %v675
        %v692 = vmul.f32 %v684, %v676
        %v693 = vadd.f32 %v650, %v685
        %v694 = vadd.f32 %v651, %v686
        %v695 = vadd.f32 %v652, %v687
        %v696 = vadd.f32 %v653, %v688
        %v697 = vadd.f32 %v654, %v689
        %v698 = vadd.f32 %v655, %v690
        %v699 = vadd.f32 %v656, %v691
        %v700 = vadd.f32 %v657, %v692
        %v701 = vstv %s683
        %v702 = vmul.f32 %v701, %v669
        %v703 = vmul.f32 %v701, %v670
        %v704 = vmul.f32 %v701, %v671
        %v705 = vmul.f32 %v701, %v672
        %v706 = vmul.f32 %v701, %v673
        %v707 = vmul.f32 %v701, %v674
        %v708 = vmul.f32 %v701, %v675
        %v709 = vmul.f32 %v701, %v676
        %v710 = vadd.f32 %v658, %v702
        %v711 = vadd.f32 %v659, %v703
        %v712 = vadd.f32 %v660, %v704
        %v713 = vadd.f32 %v661, %v705
        %v714 = vadd.f32 %v662, %v706
        %v715 = vadd.f32 %v663, %v707
        %v716 = vadd.f32 %v664, %v708
        %v717 = vadd.f32 %v665, %v709
      $region102: #{tpu_custom_call.1} parent=94 // loop_footer
        %s649 = sadd.s32 1, %s645
      $region103: #{tpu_custom_call.1} parent=94 // loop_footer_branch
        %644 = sbr.rel target = $region99
      $region104: #{tpu_custom_call.1} parent=94 // loop_exit
        _
      %718 = vrot.lane.b32.xlu0 %v658, 2
      %v719 = vpop.permute.xlu0 %718
      %720 = vrot.lane.b32.xlu0 %v659, 2
      %v721 = vpop.permute.xlu0 %720
      %722 = vrot.lane.b32.xlu0 %v660, 2
      %v723 = vpop.permute.xlu0 %722
      %724 = vrot.lane.b32.xlu0 %v661, 2
      %v725 = vpop.permute.xlu0 %724
      %726 = vrot.lane.b32.xlu0 %v662, 2
      %v727 = vpop.permute.xlu0 %726
      %728 = vrot.lane.b32.xlu0 %v663, 2
      %v729 = vpop.permute.xlu0 %728
      %730 = vrot.lane.b32.xlu0 %v664, 2
      %v731 = vpop.permute.xlu0 %730
      %732 = vrot.lane.b32.xlu0 %v665, 2
      %v733 = vpop.permute.xlu0 %732
      %vm734 = vcmp.lt.s32.totalorder %v80, 2
      %v735 = vsel %vm734, %v731, %v733
      %v736 = vsel %vm734, %v729, %v731
      %v737 = vsel %vm734, %v727, %v729
      %v738 = vsel %vm734, %v725, %v727
      %v739 = vsel %vm734, %v723, %v725
      %v740 = vsel %vm734, %v721, %v723
      %v741 = vsel %vm734, %v719, %v721
      %v742 = vsel %vm734, %v733, %v719
      %v743 = vsel %vm630, %v650, %v742
      %v744 = vsel %vm631, %v651, %v741
      %v745 = vsel %vm632, %v652, %v740
      %v746 = vsel %vm633, %v653, %v739
      %v747 = vsel %vm634, %v654, %v738
      %v748 = vsel %vm635, %v655, %v737
      %v749 = vsel %vm636, %v656, %v736
      %v750 = vsel %vm637, %v657, %v735
      %s751 = sadd.s32 %s639, 72
      %s752 = sld [smem:[#allocation9 + %s751]]
      %v753 = vstv %s752
      %v754 = vadd.f32 %v743, %v753
      %v755 = vadd.f32 %v744, %v753
      %v756 = vadd.f32 %v745, %v753
      %v757 = vadd.f32 %v746, %v753
      %v758 = vadd.f32 %v747, %v753
      %v759 = vadd.f32 %v748, %v753
      %v760 = vadd.f32 %v749, %v753
      %v761 = vadd.f32 %v750, %v753
      %v762 = vtanh.pop %v754
      %v763 = vtanh.pop %v755
      %v764 = vtanh.pop %v756
      %v765 = vtanh.pop %v757
      %v766 = vtanh.pop %v758
      %v767 = vtanh.pop %v759
      %v768 = vtanh.pop %v760
      %v769 = vtanh.pop %v761
      %s770 = smul.u32 %s639, 8
      %s771 = smul.addr %s770, 8
      %s772 = scalar_lea.vmem [#allocation3], %s771
      %773 = vst [vmem:[%s772] sm:$0xff] %v762
      %774 = vst [vmem:[%s772 + $0x8] sm:$0xff] %v763
      %775 = vst [vmem:[%s772 + $0x10] sm:$0xff] %v764
      %776 = vst [vmem:[%s772 + $0x18] sm:$0xff] %v765
      %777 = vst [vmem:[%s772 + $0x20] sm:$0xff] %v766
      %778 = vst [vmem:[%s772 + $0x28] sm:$0xff] %v767
      %779 = vst [vmem:[%s772 + $0x30] sm:$0xff] %v768
      %780 = vst [vmem:[%s772 + $0x38] sm:$0xff] %v769
    $region95: #{tpu_custom_call.1} parent=1 // loop_footer
      %s643 = sadd.s32 1, %s639
    $region96: #{tpu_custom_call.1} parent=1 // loop_footer_branch
      %638 = sbr.rel target = $region92
    $region97: #{tpu_custom_call.1} parent=1 // loop_exit
      _
    %v781 = vand.u32 %v80, 1
    %v782 = vand.u32 %v81, 1
    %v783 = vand.u32 %v82, 1
    %v784 = vand.u32 %v83, 1
    %v785 = vand.u32 %v84, 1
    %v786 = vand.u32 %v85, 1
    %v787 = vand.u32 %v86, 1
    %v788 = vand.u32 %v87, 1
    %vm789 = vcmp.eq.s32.totalorder %v781, 0
    %vm790 = vcmp.eq.s32.totalorder %v782, 0
    %vm791 = vcmp.eq.s32.totalorder %v783, 0
    %vm792 = vcmp.eq.s32.totalorder %v784, 0
    %vm793 = vcmp.eq.s32.totalorder %v785, 0
    %vm794 = vcmp.eq.s32.totalorder %v786, 0
    %vm795 = vcmp.eq.s32.totalorder %v787, 0
    %vm796 = vcmp.eq.s32.totalorder %v788, 0
    loop: start=0, step=1, limit=8
    $region105: #{tpu_custom_call.1} parent=1 // loop_pre_header
      _
    $region106: #{tpu_custom_call.1} parent=1 // loop_header
      %s798 = sphi 0, %s802
      %p799 = scmp.ge.s32.totalorder %s798, 8
      %v803 = vphi 0.0, %v843
      %v804 = vphi 0.0, %v844
      %v805 = vphi 0.0, %v845
      %v806 = vphi 0.0, %v846
      %v807 = vphi 0.0, %v847
      %v808 = vphi 0.0, %v848
      %v809 = vphi 0.0, %v849
      %v810 = vphi 0.0, %v850
      %v811 = vphi 0.0, %v860
      %v812 = vphi 0.0, %v861
      %v813 = vphi 0.0, %v862
      %v814 = vphi 0.0, %v863
      %v815 = vphi 0.0, %v864
      %v816 = vphi 0.0, %v865
      %v817 = vphi 0.0, %v866
      %v818 = vphi 0.0, %v867
    $region107: #{tpu_custom_call.1} parent=1 // loop_header_branch
      %801 = sbr.rel (%p799) target = $region111
    $region108: #{tpu_custom_call.1} parent=1 // loop_body
      %s819 = smul.u32 %s798, 8
      %s820 = smul.addr %s819, 8
      %s821 = scalar_lea.vmem [#allocation3], %s820
      %v822 = vld [vmem:[%s821] sm:$0xff]
      %v823 = vld [vmem:[%s821 + $0x8] sm:$0xff]
      %v824 = vld [vmem:[%s821 + $0x10] sm:$0xff]
      %v825 = vld [vmem:[%s821 + $0x18] sm:$0xff]
      %v826 = vld [vmem:[%s821 + $0x20] sm:$0xff]
      %v827 = vld [vmem:[%s821 + $0x28] sm:$0xff]
      %v828 = vld [vmem:[%s821 + $0x30] sm:$0xff]
      %v829 = vld [vmem:[%s821 + $0x38] sm:$0xff]
      %s830 = sadd.s32 %s798, 2576
      %s831 = sld [smem:[#allocation8 + %s830]]
      %s832 = sadd.s32 %s798, 2584
      %s833 = sld [smem:[#allocation8 + %s832]]
      %v834 = vstv %s831
      %v835 = vmul.f32 %v834, %v822
      %v836 = vmul.f32 %v834, %v823
      %v837 = vmul.f32 %v834, %v824
      %v838 = vmul.f32 %v834, %v825
      %v839 = vmul.f32 %v834, %v826
      %v840 = vmul.f32 %v834, %v827
      %v841 = vmul.f32 %v834, %v828
      %v842 = vmul.f32 %v834, %v829
      %v843 = vadd.f32 %v803, %v835
      %v844 = vadd.f32 %v804, %v836
      %v845 = vadd.f32 %v805, %v837
      %v846 = vadd.f32 %v806, %v838
      %v847 = vadd.f32 %v807, %v839
      %v848 = vadd.f32 %v808, %v840
      %v849 = vadd.f32 %v809, %v841
      %v850 = vadd.f32 %v810, %v842
      %v851 = vstv %s833
      %v852 = vmul.f32 %v851, %v822
      %v853 = vmul.f32 %v851, %v823
      %v854 = vmul.f32 %v851, %v824
      %v855 = vmul.f32 %v851, %v825
      %v856 = vmul.f32 %v851, %v826
      %v857 = vmul.f32 %v851, %v827
      %v858 = vmul.f32 %v851, %v828
      %v859 = vmul.f32 %v851, %v829
      %v860 = vadd.f32 %v811, %v852
      %v861 = vadd.f32 %v812, %v853
      %v862 = vadd.f32 %v813, %v854
      %v863 = vadd.f32 %v814, %v855
      %v864 = vadd.f32 %v815, %v856
      %v865 = vadd.f32 %v816, %v857
      %v866 = vadd.f32 %v817, %v858
      %v867 = vadd.f32 %v818, %v859
    $region109: #{tpu_custom_call.1} parent=1 // loop_footer
      %s802 = sadd.s32 1, %s798
    $region110: #{tpu_custom_call.1} parent=1 // loop_footer_branch
      %797 = sbr.rel target = $region106
    $region111: #{tpu_custom_call.1} parent=1 // loop_exit
      _
    %868 = vrot.lane.b32.xlu0 %v811, 1
    %v869 = vpop.permute.xlu0 %868
    %870 = vrot.lane.b32.xlu0 %v812, 1
    %v871 = vpop.permute.xlu0 %870
    %872 = vrot.lane.b32.xlu0 %v813, 1
    %v873 = vpop.permute.xlu0 %872
    %874 = vrot.lane.b32.xlu0 %v814, 1
    %v875 = vpop.permute.xlu0 %874
    %876 = vrot.lane.b32.xlu0 %v815, 1
    %v877 = vpop.permute.xlu0 %876
    %878 = vrot.lane.b32.xlu0 %v816, 1
    %v879 = vpop.permute.xlu0 %878
    %880 = vrot.lane.b32.xlu0 %v817, 1
    %v881 = vpop.permute.xlu0 %880
    %882 = vrot.lane.b32.xlu0 %v818, 1
    %v883 = vpop.permute.xlu0 %882
    %vm884 = vcmp.lt.s32.totalorder %v80, 1
    %v885 = vsel %vm884, %v881, %v883
    %v886 = vsel %vm884, %v879, %v881
    %v887 = vsel %vm884, %v877, %v879
    %v888 = vsel %vm884, %v875, %v877
    %v889 = vsel %vm884, %v873, %v875
    %v890 = vsel %vm884, %v871, %v873
    %v891 = vsel %vm884, %v869, %v871
    %v892 = vsel %vm884, %v883, %v869
    %v893 = vsel %vm789, %v803, %v892
    %v894 = vsel %vm790, %v804, %v891
    %v895 = vsel %vm791, %v805, %v890
    %v896 = vsel %vm792, %v806, %v889
    %v897 = vsel %vm793, %v807, %v888
    %v898 = vsel %vm794, %v808, %v887
    %v899 = vsel %vm795, %v809, %v886
    %v900 = vsel %vm796, %v810, %v885
    %s901 = sld [smem:[#allocation9 + $0x50]]
    %v902 = vstv %s901
    %v903 = vadd.f32 %v893, %v902
    %v904 = vadd.f32 %v894, %v902
    %v905 = vadd.f32 %v895, %v902
    %v906 = vadd.f32 %v896, %v902
    %v907 = vadd.f32 %v897, %v902
    %v908 = vadd.f32 %v898, %v902
    %v909 = vadd.f32 %v899, %v902
    %v910 = vadd.f32 %v900, %v902
    %v911 = vtanh.pop %v903
    %v912 = vtanh.pop %v904
    %v913 = vtanh.pop %v905
    %v914 = vtanh.pop %v906
    %v915 = vtanh.pop %v907
    %v916 = vtanh.pop %v908
    %v917 = vtanh.pop %v909
    %v918 = vtanh.pop %v910
    %919 = vst [vmem:[#allocation2] sm:$0xff] %v911
    %920 = vst [vmem:[#allocation2 + $0x8] sm:$0xff] %v912
    %921 = vst [vmem:[#allocation2 + $0x10] sm:$0xff] %v913
    %922 = vst [vmem:[#allocation2 + $0x18] sm:$0xff] %v914
    %923 = vst [vmem:[#allocation2 + $0x20] sm:$0xff] %v915
    %924 = vst [vmem:[#allocation2 + $0x28] sm:$0xff] %v916
    %925 = vst [vmem:[#allocation2 + $0x30] sm:$0xff] %v917
    %926 = vst [vmem:[#allocation2 + $0x38] sm:$0xff] %v918
    %v927 = vld [vmem:[#allocation2] sm:$0xff]
    %v928 = vld [vmem:[#allocation2 + $0x8] sm:$0xff]
    %v929 = vld [vmem:[#allocation2 + $0x10] sm:$0xff]
    %v930 = vld [vmem:[#allocation2 + $0x18] sm:$0xff]
    %v931 = vld [vmem:[#allocation2 + $0x20] sm:$0xff]
    %v932 = vld [vmem:[#allocation2 + $0x28] sm:$0xff]
    %v933 = vld [vmem:[#allocation2 + $0x30] sm:$0xff]
    %v934 = vld [vmem:[#allocation2 + $0x38] sm:$0xff]
    %v935 = vpack.c.bf16 %v927, %v927
    %v936 = vpack.c.bf16 %v928, %v928
    %v937 = vpack.c.bf16 %v929, %v929
    %v938 = vpack.c.bf16 %v930, %v930
    %v939 = vpack.c.bf16 %v931, %v931
    %v940 = vpack.c.bf16 %v932, %v932
    %v941 = vpack.c.bf16 %v933, %v933
    %v942 = vpack.c.bf16 %v934, %v934
    %v943 = vld [vmem:[#allocation11] sm:$0xff]
    %v944 = vld [vmem:[#allocation11 + $0x8] sm:$0xff]
    %v945 = vld [vmem:[#allocation11 + $0x10] sm:$0xff]
    %v946 = vld [vmem:[#allocation11 + $0x18] sm:$0xff]
    %v947 = vld [vmem:[#allocation11 + $0x20] sm:$0xff]
    %v948 = vld [vmem:[#allocation11 + $0x28] sm:$0xff]
    %v949 = vld [vmem:[#allocation11 + $0x30] sm:$0xff]
    %v950 = vld [vmem:[#allocation11 + $0x38] sm:$0xff]
    %v951 = vld [vmem:[#allocation11 + $0x40] sm:$0xff]
    %v952 = vld [vmem:[#allocation11 + $0x48] sm:$0xff]
    %v953 = vld [vmem:[#allocation11 + $0x50] sm:$0xff]
    %v954 = vld [vmem:[#allocation11 + $0x58] sm:$0xff]
    %v955 = vld [vmem:[#allocation11 + $0x60] sm:$0xff]
    %v956 = vld [vmem:[#allocation11 + $0x68] sm:$0xff]
    %v957 = vld [vmem:[#allocation11 + $0x70] sm:$0xff]
    %v958 = vld [vmem:[#allocation11 + $0x78] sm:$0xff]
    %v959 = vld [vmem:[#allocation11 + $0x80] sm:$0xff]
    %v960 = vld [vmem:[#allocation11 + $0x88] sm:$0xff]
    %v961 = vld [vmem:[#allocation11 + $0x90] sm:$0xff]
    %v962 = vld [vmem:[#allocation11 + $0x98] sm:$0xff]
    %v963 = vld [vmem:[#allocation11 + $0xa0] sm:$0xff]
    %v964 = vld [vmem:[#allocation11 + $0xa8] sm:$0xff]
    %v965 = vld [vmem:[#allocation11 + $0xb0] sm:$0xff]
    %v966 = vld [vmem:[#allocation11 + $0xb8] sm:$0xff]
    %v967 = vld [vmem:[#allocation11 + $0xc0] sm:$0xff]
    %v968 = vld [vmem:[#allocation11 + $0xc8] sm:$0xff]
    %v969 = vld [vmem:[#allocation11 + $0xd0] sm:$0xff]
    %v970 = vld [vmem:[#allocation11 + $0xd8] sm:$0xff]
    %v971 = vld [vmem:[#allocation11 + $0xe0] sm:$0xff]
    %v972 = vld [vmem:[#allocation11 + $0xe8] sm:$0xff]
    %v973 = vld [vmem:[#allocation11 + $0xf0] sm:$0xff]
    %v974 = vld [vmem:[#allocation11 + $0xf8] sm:$0xff]
    %v975 = vld [vmem:[#allocation11 + $0x100] sm:$0xff]
    %v976 = vld [vmem:[#allocation11 + $0x108] sm:$0xff]
    %v977 = vld [vmem:[#allocation11 + $0x110] sm:$0xff]
    %v978 = vld [vmem:[#allocation11 + $0x118] sm:$0xff]
    %v979 = vld [vmem:[#allocation11 + $0x120] sm:$0xff]
    %v980 = vld [vmem:[#allocation11 + $0x128] sm:$0xff]
    %v981 = vld [vmem:[#allocation11 + $0x130] sm:$0xff]
    %v982 = vld [vmem:[#allocation11 + $0x138] sm:$0xff]
    %v983 = vld [vmem:[#allocation11 + $0x140] sm:$0xff]
    %v984 = vld [vmem:[#allocation11 + $0x148] sm:$0xff]
    %v985 = vld [vmem:[#allocation11 + $0x150] sm:$0xff]
    %v986 = vld [vmem:[#allocation11 + $0x158] sm:$0xff]
    %v987 = vld [vmem:[#allocation11 + $0x160] sm:$0xff]
    %v988 = vld [vmem:[#allocation11 + $0x168] sm:$0xff]
    %v989 = vld [vmem:[#allocation11 + $0x170] sm:$0xff]
    %v990 = vld [vmem:[#allocation11 + $0x178] sm:$0xff]
    %v991 = vld [vmem:[#allocation11 + $0x180] sm:$0xff]
    %v992 = vld [vmem:[#allocation11 + $0x188] sm:$0xff]
    %v993 = vld [vmem:[#allocation11 + $0x190] sm:$0xff]
    %v994 = vld [vmem:[#allocation11 + $0x198] sm:$0xff]
    %v995 = vld [vmem:[#allocation11 + $0x1a0] sm:$0xff]
    %v996 = vld [vmem:[#allocation11 + $0x1a8] sm:$0xff]
    %v997 = vld [vmem:[#allocation11 + $0x1b0] sm:$0xff]
    %v998 = vld [vmem:[#allocation11 + $0x1b8] sm:$0xff]
    %v999 = vld [vmem:[#allocation11 + $0x1c0] sm:$0xff]
    %v1000 = vld [vmem:[#allocation11 + $0x1c8] sm:$0xff]
    %v1001 = vld [vmem:[#allocation11 + $0x1d0] sm:$0xff]
    %v1002 = vld [vmem:[#allocation11 + $0x1d8] sm:$0xff]
    %v1003 = vld [vmem:[#allocation11 + $0x1e0] sm:$0xff]
    %v1004 = vld [vmem:[#allocation11 + $0x1e8] sm:$0xff]
    %v1005 = vld [vmem:[#allocation11 + $0x1f0] sm:$0xff]
    %v1006 = vld [vmem:[#allocation11 + $0x1f8] sm:$0xff]
    %v1007 = vld [vmem:[#allocation11 + $0x200] sm:$0xff]
    %v1008 = vld [vmem:[#allocation11 + $0x208] sm:$0xff]
    %v1009 = vld [vmem:[#allocation11 + $0x210] sm:$0xff]
    %v1010 = vld [vmem:[#allocation11 + $0x218] sm:$0xff]
    %v1011 = vld [vmem:[#allocation11 + $0x220] sm:$0xff]
    %v1012 = vld [vmem:[#allocation11 + $0x228] sm:$0xff]
    %v1013 = vld [vmem:[#allocation11 + $0x230] sm:$0xff]
    %v1014 = vld [vmem:[#allocation11 + $0x238] sm:$0xff]
    %v1015 = vld [vmem:[#allocation11 + $0x240] sm:$0xff]
    %v1016 = vld [vmem:[#allocation11 + $0x248] sm:$0xff]
    %v1017 = vld [vmem:[#allocation11 + $0x250] sm:$0xff]
    %v1018 = vld [vmem:[#allocation11 + $0x258] sm:$0xff]
    %v1019 = vld [vmem:[#allocation11 + $0x260] sm:$0xff]
    %v1020 = vld [vmem:[#allocation11 + $0x268] sm:$0xff]
    %v1021 = vld [vmem:[#allocation11 + $0x270] sm:$0xff]
    %v1022 = vld [vmem:[#allocation11 + $0x278] sm:$0xff]
    %v1023 = vld [vmem:[#allocation11 + $0x280] sm:$0xff]
    %v1024 = vld [vmem:[#allocation11 + $0x288] sm:$0xff]
    %v1025 = vld [vmem:[#allocation11 + $0x290] sm:$0xff]
    %v1026 = vld [vmem:[#allocation11 + $0x298] sm:$0xff]
    %v1027 = vld [vmem:[#allocation11 + $0x2a0] sm:$0xff]
    %v1028 = vld [vmem:[#allocation11 + $0x2a8] sm:$0xff]
    %v1029 = vld [vmem:[#allocation11 + $0x2b0] sm:$0xff]
    %v1030 = vld [vmem:[#allocation11 + $0x2b8] sm:$0xff]
    %v1031 = vld [vmem:[#allocation11 + $0x2c0] sm:$0xff]
    %v1032 = vld [vmem:[#allocation11 + $0x2c8] sm:$0xff]
    %v1033 = vld [vmem:[#allocation11 + $0x2d0] sm:$0xff]
    %v1034 = vld [vmem:[#allocation11 + $0x2d8] sm:$0xff]
    %v1035 = vld [vmem:[#allocation11 + $0x2e0] sm:$0xff]
    %v1036 = vld [vmem:[#allocation11 + $0x2e8] sm:$0xff]
    %v1037 = vld [vmem:[#allocation11 + $0x2f0] sm:$0xff]
    %v1038 = vld [vmem:[#allocation11 + $0x2f8] sm:$0xff]
    %v1039 = vld [vmem:[#allocation11 + $0x300] sm:$0xff]
    %v1040 = vld [vmem:[#allocation11 + $0x308] sm:$0xff]
    %v1041 = vld [vmem:[#allocation11 + $0x310] sm:$0xff]
    %v1042 = vld [vmem:[#allocation11 + $0x318] sm:$0xff]
    %v1043 = vld [vmem:[#allocation11 + $0x320] sm:$0xff]
    %v1044 = vld [vmem:[#allocation11 + $0x328] sm:$0xff]
    %v1045 = vld [vmem:[#allocation11 + $0x330] sm:$0xff]
    %v1046 = vld [vmem:[#allocation11 + $0x338] sm:$0xff]
    %v1047 = vld [vmem:[#allocation11 + $0x340] sm:$0xff]
    %v1048 = vld [vmem:[#allocation11 + $0x348] sm:$0xff]
    %v1049 = vld [vmem:[#allocation11 + $0x350] sm:$0xff]
    %v1050 = vld [vmem:[#allocation11 + $0x358] sm:$0xff]
    %v1051 = vld [vmem:[#allocation11 + $0x360] sm:$0xff]
    %v1052 = vld [vmem:[#allocation11 + $0x368] sm:$0xff]
    %v1053 = vld [vmem:[#allocation11 + $0x370] sm:$0xff]
    %v1054 = vld [vmem:[#allocation11 + $0x378] sm:$0xff]
    %v1055 = vld [vmem:[#allocation11 + $0x380] sm:$0xff]
    %v1056 = vld [vmem:[#allocation11 + $0x388] sm:$0xff]
    %v1057 = vld [vmem:[#allocation11 + $0x390] sm:$0xff]
    %v1058 = vld [vmem:[#allocation11 + $0x398] sm:$0xff]
    %v1059 = vld [vmem:[#allocation11 + $0x3a0] sm:$0xff]
    %v1060 = vld [vmem:[#allocation11 + $0x3a8] sm:$0xff]
    %v1061 = vld [vmem:[#allocation11 + $0x3b0] sm:$0xff]
    %v1062 = vld [vmem:[#allocation11 + $0x3b8] sm:$0xff]
    %v1063 = vld [vmem:[#allocation11 + $0x3c0] sm:$0xff]
    %v1064 = vld [vmem:[#allocation11 + $0x3c8] sm:$0xff]
    %v1065 = vld [vmem:[#allocation11 + $0x3d0] sm:$0xff]
    %v1066 = vld [vmem:[#allocation11 + $0x3d8] sm:$0xff]
    %v1067 = vld [vmem:[#allocation11 + $0x3e0] sm:$0xff]
    %v1068 = vld [vmem:[#allocation11 + $0x3e8] sm:$0xff]
    %v1069 = vld [vmem:[#allocation11 + $0x3f0] sm:$0xff]
    %v1070 = vld [vmem:[#allocation11 + $0x3f8] sm:$0xff]
    %v1071 = vld [vmem:[#allocation11 + $0x400] sm:$0xff]
    %v1072 = vld [vmem:[#allocation11 + $0x408] sm:$0xff]
    %v1073 = vld [vmem:[#allocation11 + $0x410] sm:$0xff]
    %v1074 = vld [vmem:[#allocation11 + $0x418] sm:$0xff]
    %v1075 = vld [vmem:[#allocation11 + $0x420] sm:$0xff]
    %v1076 = vld [vmem:[#allocation11 + $0x428] sm:$0xff]
    %v1077 = vld [vmem:[#allocation11 + $0x430] sm:$0xff]
    %v1078 = vld [vmem:[#allocation11 + $0x438] sm:$0xff]
    %v1079 = vld [vmem:[#allocation11 + $0x440] sm:$0xff]
    %v1080 = vld [vmem:[#allocation11 + $0x448] sm:$0xff]
    %v1081 = vld [vmem:[#allocation11 + $0x450] sm:$0xff]
    %v1082 = vld [vmem:[#allocation11 + $0x458] sm:$0xff]
    %v1083 = vld [vmem:[#allocation11 + $0x460] sm:$0xff]
    %v1084 = vld [vmem:[#allocation11 + $0x468] sm:$0xff]
    %v1085 = vld [vmem:[#allocation11 + $0x470] sm:$0xff]
    %v1086 = vld [vmem:[#allocation11 + $0x478] sm:$0xff]
    %v1087 = vld [vmem:[#allocation11 + $0x480] sm:$0xff]
    %v1088 = vld [vmem:[#allocation11 + $0x488] sm:$0xff]
    %v1089 = vld [vmem:[#allocation11 + $0x490] sm:$0xff]
    %v1090 = vld [vmem:[#allocation11 + $0x498] sm:$0xff]
    %v1091 = vld [vmem:[#allocation11 + $0x4a0] sm:$0xff]
    %v1092 = vld [vmem:[#allocation11 + $0x4a8] sm:$0xff]
    %v1093 = vld [vmem:[#allocation11 + $0x4b0] sm:$0xff]
    %v1094 = vld [vmem:[#allocation11 + $0x4b8] sm:$0xff]
    %v1095 = vld [vmem:[#allocation11 + $0x4c0] sm:$0xff]
    %v1096 = vld [vmem:[#allocation11 + $0x4c8] sm:$0xff]
    %v1097 = vld [vmem:[#allocation11 + $0x4d0] sm:$0xff]
    %v1098 = vld [vmem:[#allocation11 + $0x4d8] sm:$0xff]
    %v1099 = vld [vmem:[#allocation11 + $0x4e0] sm:$0xff]
    %v1100 = vld [vmem:[#allocation11 + $0x4e8] sm:$0xff]
    %v1101 = vld [vmem:[#allocation11 + $0x4f0] sm:$0xff]
    %v1102 = vld [vmem:[#allocation11 + $0x4f8] sm:$0xff]
    %v1103 = vld [vmem:[#allocation11 + $0x500] sm:$0xff]
    %v1104 = vld [vmem:[#allocation11 + $0x508] sm:$0xff]
    %v1105 = vld [vmem:[#allocation11 + $0x510] sm:$0xff]
    %v1106 = vld [vmem:[#allocation11 + $0x518] sm:$0xff]
    %v1107 = vld [vmem:[#allocation11 + $0x520] sm:$0xff]
    %v1108 = vld [vmem:[#allocation11 + $0x528] sm:$0xff]
    %v1109 = vld [vmem:[#allocation11 + $0x530] sm:$0xff]
    %v1110 = vld [vmem:[#allocation11 + $0x538] sm:$0xff]
    %v1111 = vld [vmem:[#allocation11 + $0x540] sm:$0xff]
    %v1112 = vld [vmem:[#allocation11 + $0x548] sm:$0xff]
    %v1113 = vld [vmem:[#allocation11 + $0x550] sm:$0xff]
    %v1114 = vld [vmem:[#allocation11 + $0x558] sm:$0xff]
    %v1115 = vld [vmem:[#allocation11 + $0x560] sm:$0xff]
    %v1116 = vld [vmem:[#allocation11 + $0x568] sm:$0xff]
    %v1117 = vld [vmem:[#allocation11 + $0x570] sm:$0xff]
    %v1118 = vld [vmem:[#allocation11 + $0x578] sm:$0xff]
    %v1119 = vld [vmem:[#allocation11 + $0x580] sm:$0xff]
    %v1120 = vld [vmem:[#allocation11 + $0x588] sm:$0xff]
    %v1121 = vld [vmem:[#allocation11 + $0x590] sm:$0xff]
    %v1122 = vld [vmem:[#allocation11 + $0x598] sm:$0xff]
    %v1123 = vld [vmem:[#allocation11 + $0x5a0] sm:$0xff]
    %v1124 = vld [vmem:[#allocation11 + $0x5a8] sm:$0xff]
    %v1125 = vld [vmem:[#allocation11 + $0x5b0] sm:$0xff]
    %v1126 = vld [vmem:[#allocation11 + $0x5b8] sm:$0xff]
    %v1127 = vld [vmem:[#allocation11 + $0x5c0] sm:$0xff]
    %v1128 = vld [vmem:[#allocation11 + $0x5c8] sm:$0xff]
    %v1129 = vld [vmem:[#allocation11 + $0x5d0] sm:$0xff]
    %v1130 = vld [vmem:[#allocation11 + $0x5d8] sm:$0xff]
    %v1131 = vld [vmem:[#allocation11 + $0x5e0] sm:$0xff]
    %v1132 = vld [vmem:[#allocation11 + $0x5e8] sm:$0xff]
    %v1133 = vld [vmem:[#allocation11 + $0x5f0] sm:$0xff]
    %v1134 = vld [vmem:[#allocation11 + $0x5f8] sm:$0xff]
    %v1135 = vld [vmem:[#allocation11 + $0x600] sm:$0xff]
    %v1136 = vld [vmem:[#allocation11 + $0x608] sm:$0xff]
    %v1137 = vld [vmem:[#allocation11 + $0x610] sm:$0xff]
    %v1138 = vld [vmem:[#allocation11 + $0x618] sm:$0xff]
    %v1139 = vld [vmem:[#allocation11 + $0x620] sm:$0xff]
    %v1140 = vld [vmem:[#allocation11 + $0x628] sm:$0xff]
    %v1141 = vld [vmem:[#allocation11 + $0x630] sm:$0xff]
    %v1142 = vld [vmem:[#allocation11 + $0x638] sm:$0xff]
    %v1143 = vld [vmem:[#allocation11 + $0x640] sm:$0xff]
    %v1144 = vld [vmem:[#allocation11 + $0x648] sm:$0xff]
    %v1145 = vld [vmem:[#allocation11 + $0x650] sm:$0xff]
    %v1146 = vld [vmem:[#allocation11 + $0x658] sm:$0xff]
    %v1147 = vld [vmem:[#allocation11 + $0x660] sm:$0xff]
    %v1148 = vld [vmem:[#allocation11 + $0x668] sm:$0xff]
    %v1149 = vld [vmem:[#allocation11 + $0x670] sm:$0xff]
    %v1150 = vld [vmem:[#allocation11 + $0x678] sm:$0xff]
    %v1151 = vld [vmem:[#allocation11 + $0x680] sm:$0xff]
    %v1152 = vld [vmem:[#allocation11 + $0x688] sm:$0xff]
    %v1153 = vld [vmem:[#allocation11 + $0x690] sm:$0xff]
    %v1154 = vld [vmem:[#allocation11 + $0x698] sm:$0xff]
    %v1155 = vld [vmem:[#allocation11 + $0x6a0] sm:$0xff]
    %v1156 = vld [vmem:[#allocation11 + $0x6a8] sm:$0xff]
    %v1157 = vld [vmem:[#allocation11 + $0x6b0] sm:$0xff]
    %v1158 = vld [vmem:[#allocation11 + $0x6b8] sm:$0xff]
    %v1159 = vld [vmem:[#allocation11 + $0x6c0] sm:$0xff]
    %v1160 = vld [vmem:[#allocation11 + $0x6c8] sm:$0xff]
    %v1161 = vld [vmem:[#allocation11 + $0x6d0] sm:$0xff]
    %v1162 = vld [vmem:[#allocation11 + $0x6d8] sm:$0xff]
    %v1163 = vld [vmem:[#allocation11 + $0x6e0] sm:$0xff]
    %v1164 = vld [vmem:[#allocation11 + $0x6e8] sm:$0xff]
    %v1165 = vld [vmem:[#allocation11 + $0x6f0] sm:$0xff]
    %v1166 = vld [vmem:[#allocation11 + $0x6f8] sm:$0xff]
    %v1167 = vld [vmem:[#allocation11 + $0x700] sm:$0xff]
    %v1168 = vld [vmem:[#allocation11 + $0x708] sm:$0xff]
    %v1169 = vld [vmem:[#allocation11 + $0x710] sm:$0xff]
    %v1170 = vld [vmem:[#allocation11 + $0x718] sm:$0xff]
    %v1171 = vld [vmem:[#allocation11 + $0x720] sm:$0xff]
    %v1172 = vld [vmem:[#allocation11 + $0x728] sm:$0xff]
    %v1173 = vld [vmem:[#allocation11 + $0x730] sm:$0xff]
    %v1174 = vld [vmem:[#allocation11 + $0x738] sm:$0xff]
    %v1175 = vld [vmem:[#allocation11 + $0x740] sm:$0xff]
    %v1176 = vld [vmem:[#allocation11 + $0x748] sm:$0xff]
    %v1177 = vld [vmem:[#allocation11 + $0x750] sm:$0xff]
    %v1178 = vld [vmem:[#allocation11 + $0x758] sm:$0xff]
    %v1179 = vld [vmem:[#allocation11 + $0x760] sm:$0xff]
    %v1180 = vld [vmem:[#allocation11 + $0x768] sm:$0xff]
    %v1181 = vld [vmem:[#allocation11 + $0x770] sm:$0xff]
    %v1182 = vld [vmem:[#allocation11 + $0x778] sm:$0xff]
    %v1183 = vld [vmem:[#allocation11 + $0x780] sm:$0xff]
    %v1184 = vld [vmem:[#allocation11 + $0x788] sm:$0xff]
    %v1185 = vld [vmem:[#allocation11 + $0x790] sm:$0xff]
    %v1186 = vld [vmem:[#allocation11 + $0x798] sm:$0xff]
    %v1187 = vld [vmem:[#allocation11 + $0x7a0] sm:$0xff]
    %v1188 = vld [vmem:[#allocation11 + $0x7a8] sm:$0xff]
    %v1189 = vld [vmem:[#allocation11 + $0x7b0] sm:$0xff]
    %v1190 = vld [vmem:[#allocation11 + $0x7b8] sm:$0xff]
    %v1191 = vld [vmem:[#allocation11 + $0x7c0] sm:$0xff]
    %v1192 = vld [vmem:[#allocation11 + $0x7c8] sm:$0xff]
    %v1193 = vld [vmem:[#allocation11 + $0x7d0] sm:$0xff]
    %v1194 = vld [vmem:[#allocation11 + $0x7d8] sm:$0xff]
    %v1195 = vld [vmem:[#allocation11 + $0x7e0] sm:$0xff]
    %v1196 = vld [vmem:[#allocation11 + $0x7e8] sm:$0xff]
    %v1197 = vld [vmem:[#allocation11 + $0x7f0] sm:$0xff]
    %v1198 = vld [vmem:[#allocation11 + $0x7f8] sm:$0xff]
    %v1199 = vld [vmem:[#allocation11 + $0x800] sm:$0xff]
    %v1200 = vld [vmem:[#allocation11 + $0x808] sm:$0xff]
    %v1201 = vld [vmem:[#allocation11 + $0x810] sm:$0xff]
    %v1202 = vld [vmem:[#allocation11 + $0x818] sm:$0xff]
    %v1203 = vld [vmem:[#allocation11 + $0x820] sm:$0xff]
    %v1204 = vld [vmem:[#allocation11 + $0x828] sm:$0xff]
    %v1205 = vld [vmem:[#allocation11 + $0x830] sm:$0xff]
    %v1206 = vld [vmem:[#allocation11 + $0x838] sm:$0xff]
    %v1207 = vld [vmem:[#allocation11 + $0x840] sm:$0xff]
    %v1208 = vld [vmem:[#allocation11 + $0x848] sm:$0xff]
    %v1209 = vld [vmem:[#allocation11 + $0x850] sm:$0xff]
    %v1210 = vld [vmem:[#allocation11 + $0x858] sm:$0xff]
    %v1211 = vld [vmem:[#allocation11 + $0x860] sm:$0xff]
    %v1212 = vld [vmem:[#allocation11 + $0x868] sm:$0xff]
    %v1213 = vld [vmem:[#allocation11 + $0x870] sm:$0xff]
    %v1214 = vld [vmem:[#allocation11 + $0x878] sm:$0xff]
    %v1215 = vld [vmem:[#allocation11 + $0x880] sm:$0xff]
    %v1216 = vld [vmem:[#allocation11 + $0x888] sm:$0xff]
    %v1217 = vld [vmem:[#allocation11 + $0x890] sm:$0xff]
    %v1218 = vld [vmem:[#allocation11 + $0x898] sm:$0xff]
    %v1219 = vld [vmem:[#allocation11 + $0x8a0] sm:$0xff]
    %v1220 = vld [vmem:[#allocation11 + $0x8a8] sm:$0xff]
    %v1221 = vld [vmem:[#allocation11 + $0x8b0] sm:$0xff]
    %v1222 = vld [vmem:[#allocation11 + $0x8b8] sm:$0xff]
    %v1223 = vld [vmem:[#allocation11 + $0x8c0] sm:$0xff]
    %v1224 = vld [vmem:[#allocation11 + $0x8c8] sm:$0xff]
    %v1225 = vld [vmem:[#allocation11 + $0x8d0] sm:$0xff]
    %v1226 = vld [vmem:[#allocation11 + $0x8d8] sm:$0xff]
    %v1227 = vld [vmem:[#allocation11 + $0x8e0] sm:$0xff]
    %v1228 = vld [vmem:[#allocation11 + $0x8e8] sm:$0xff]
    %v1229 = vld [vmem:[#allocation11 + $0x8f0] sm:$0xff]
    %v1230 = vld [vmem:[#allocation11 + $0x8f8] sm:$0xff]
    %v1231 = vld [vmem:[#allocation11 + $0x900] sm:$0xff]
    %v1232 = vld [vmem:[#allocation11 + $0x908] sm:$0xff]
    %v1233 = vld [vmem:[#allocation11 + $0x910] sm:$0xff]
    %v1234 = vld [vmem:[#allocation11 + $0x918] sm:$0xff]
    %v1235 = vld [vmem:[#allocation11 + $0x920] sm:$0xff]
    %v1236 = vld [vmem:[#allocation11 + $0x928] sm:$0xff]
    %v1237 = vld [vmem:[#allocation11 + $0x930] sm:$0xff]
    %v1238 = vld [vmem:[#allocation11 + $0x938] sm:$0xff]
    %v1239 = vld [vmem:[#allocation11 + $0x940] sm:$0xff]
    %v1240 = vld [vmem:[#allocation11 + $0x948] sm:$0xff]
    %v1241 = vld [vmem:[#allocation11 + $0x950] sm:$0xff]
    %v1242 = vld [vmem:[#allocation11 + $0x958] sm:$0xff]
    %v1243 = vld [vmem:[#allocation11 + $0x960] sm:$0xff]
    %v1244 = vld [vmem:[#allocation11 + $0x968] sm:$0xff]
    %v1245 = vld [vmem:[#allocation11 + $0x970] sm:$0xff]
    %v1246 = vld [vmem:[#allocation11 + $0x978] sm:$0xff]
    %v1247 = vld [vmem:[#allocation11 + $0x980] sm:$0xff]
    %v1248 = vld [vmem:[#allocation11 + $0x988] sm:$0xff]
    %v1249 = vld [vmem:[#allocation11 + $0x990] sm:$0xff]
    %v1250 = vld [vmem:[#allocation11 + $0x998] sm:$0xff]
    %v1251 = vld [vmem:[#allocation11 + $0x9a0] sm:$0xff]
    %v1252 = vld [vmem:[#allocation11 + $0x9a8] sm:$0xff]
    %v1253 = vld [vmem:[#allocation11 + $0x9b0] sm:$0xff]
    %v1254 = vld [vmem:[#allocation11 + $0x9b8] sm:$0xff]
    %v1255 = vld [vmem:[#allocation11 + $0x9c0] sm:$0xff]
    %v1256 = vld [vmem:[#allocation11 + $0x9c8] sm:$0xff]
    %v1257 = vld [vmem:[#allocation11 + $0x9d0] sm:$0xff]
    %v1258 = vld [vmem:[#allocation11 + $0x9d8] sm:$0xff]
    %v1259 = vld [vmem:[#allocation11 + $0x9e0] sm:$0xff]
    %v1260 = vld [vmem:[#allocation11 + $0x9e8] sm:$0xff]
    %v1261 = vld [vmem:[#allocation11 + $0x9f0] sm:$0xff]
    %v1262 = vld [vmem:[#allocation11 + $0x9f8] sm:$0xff]
    %v1263 = vld [vmem:[#allocation11 + $0xa00] sm:$0xff]
    %v1264 = vld [vmem:[#allocation11 + $0xa08] sm:$0xff]
    %v1265 = vld [vmem:[#allocation11 + $0xa10] sm:$0xff]
    %v1266 = vld [vmem:[#allocation11 + $0xa18] sm:$0xff]
    %v1267 = vld [vmem:[#allocation11 + $0xa20] sm:$0xff]
    %v1268 = vld [vmem:[#allocation11 + $0xa28] sm:$0xff]
    %v1269 = vld [vmem:[#allocation11 + $0xa30] sm:$0xff]
    %v1270 = vld [vmem:[#allocation11 + $0xa38] sm:$0xff]
    %v1271 = vld [vmem:[#allocation11 + $0xa40] sm:$0xff]
    %v1272 = vld [vmem:[#allocation11 + $0xa48] sm:$0xff]
    %v1273 = vld [vmem:[#allocation11 + $0xa50] sm:$0xff]
    %v1274 = vld [vmem:[#allocation11 + $0xa58] sm:$0xff]
    %v1275 = vld [vmem:[#allocation11 + $0xa60] sm:$0xff]
    %v1276 = vld [vmem:[#allocation11 + $0xa68] sm:$0xff]
    %v1277 = vld [vmem:[#allocation11 + $0xa70] sm:$0xff]
    %v1278 = vld [vmem:[#allocation11 + $0xa78] sm:$0xff]
    %v1279 = vld [vmem:[#allocation11 + $0xa80] sm:$0xff]
    %v1280 = vld [vmem:[#allocation11 + $0xa88] sm:$0xff]
    %v1281 = vld [vmem:[#allocation11 + $0xa90] sm:$0xff]
    %v1282 = vld [vmem:[#allocation11 + $0xa98] sm:$0xff]
    %v1283 = vld [vmem:[#allocation11 + $0xaa0] sm:$0xff]
    %v1284 = vld [vmem:[#allocation11 + $0xaa8] sm:$0xff]
    %v1285 = vld [vmem:[#allocation11 + $0xab0] sm:$0xff]
    %v1286 = vld [vmem:[#allocation11 + $0xab8] sm:$0xff]
    %v1287 = vld [vmem:[#allocation11 + $0xac0] sm:$0xff]
    %v1288 = vld [vmem:[#allocation11 + $0xac8] sm:$0xff]
    %v1289 = vld [vmem:[#allocation11 + $0xad0] sm:$0xff]
    %v1290 = vld [vmem:[#allocation11 + $0xad8] sm:$0xff]
    %v1291 = vld [vmem:[#allocation11 + $0xae0] sm:$0xff]
    %v1292 = vld [vmem:[#allocation11 + $0xae8] sm:$0xff]
    %v1293 = vld [vmem:[#allocation11 + $0xaf0] sm:$0xff]
    %v1294 = vld [vmem:[#allocation11 + $0xaf8] sm:$0xff]
    %v1295 = vld [vmem:[#allocation11 + $0xb00] sm:$0xff]
    %v1296 = vld [vmem:[#allocation11 + $0xb08] sm:$0xff]
    %v1297 = vld [vmem:[#allocation11 + $0xb10] sm:$0xff]
    %v1298 = vld [vmem:[#allocation11 + $0xb18] sm:$0xff]
    %v1299 = vld [vmem:[#allocation11 + $0xb20] sm:$0xff]
    %v1300 = vld [vmem:[#allocation11 + $0xb28] sm:$0xff]
    %v1301 = vld [vmem:[#allocation11 + $0xb30] sm:$0xff]
    %v1302 = vld [vmem:[#allocation11 + $0xb38] sm:$0xff]
    %v1303 = vld [vmem:[#allocation11 + $0xb40] sm:$0xff]
    %v1304 = vld [vmem:[#allocation11 + $0xb48] sm:$0xff]
    %v1305 = vld [vmem:[#allocation11 + $0xb50] sm:$0xff]
    %v1306 = vld [vmem:[#allocation11 + $0xb58] sm:$0xff]
    %v1307 = vld [vmem:[#allocation11 + $0xb60] sm:$0xff]
    %v1308 = vld [vmem:[#allocation11 + $0xb68] sm:$0xff]
    %v1309 = vld [vmem:[#allocation11 + $0xb70] sm:$0xff]
    %v1310 = vld [vmem:[#allocation11 + $0xb78] sm:$0xff]
    %v1311 = vld [vmem:[#allocation11 + $0xb80] sm:$0xff]
    %v1312 = vld [vmem:[#allocation11 + $0xb88] sm:$0xff]
    %v1313 = vld [vmem:[#allocation11 + $0xb90] sm:$0xff]
    %v1314 = vld [vmem:[#allocation11 + $0xb98] sm:$0xff]
    %v1315 = vld [vmem:[#allocation11 + $0xba0] sm:$0xff]
    %v1316 = vld [vmem:[#allocation11 + $0xba8] sm:$0xff]
    %v1317 = vld [vmem:[#allocation11 + $0xbb0] sm:$0xff]
    %v1318 = vld [vmem:[#allocation11 + $0xbb8] sm:$0xff]
    %v1319 = vld [vmem:[#allocation11 + $0xbc0] sm:$0xff]
    %v1320 = vld [vmem:[#allocation11 + $0xbc8] sm:$0xff]
    %v1321 = vld [vmem:[#allocation11 + $0xbd0] sm:$0xff]
    %v1322 = vld [vmem:[#allocation11 + $0xbd8] sm:$0xff]
    %v1323 = vld [vmem:[#allocation11 + $0xbe0] sm:$0xff]
    %v1324 = vld [vmem:[#allocation11 + $0xbe8] sm:$0xff]
    %v1325 = vld [vmem:[#allocation11 + $0xbf0] sm:$0xff]
    %v1326 = vld [vmem:[#allocation11 + $0xbf8] sm:$0xff]
    %v1327 = vld [vmem:[#allocation11 + $0xc00] sm:$0xff]
    %v1328 = vld [vmem:[#allocation11 + $0xc08] sm:$0xff]
    %v1329 = vld [vmem:[#allocation11 + $0xc10] sm:$0xff]
    %v1330 = vld [vmem:[#allocation11 + $0xc18] sm:$0xff]
    %v1331 = vld [vmem:[#allocation11 + $0xc20] sm:$0xff]
    %v1332 = vld [vmem:[#allocation11 + $0xc28] sm:$0xff]
    %v1333 = vld [vmem:[#allocation11 + $0xc30] sm:$0xff]
    %v1334 = vld [vmem:[#allocation11 + $0xc38] sm:$0xff]
    %v1335 = vld [vmem:[#allocation11 + $0xc40] sm:$0xff]
    %v1336 = vld [vmem:[#allocation11 + $0xc48] sm:$0xff]
    %v1337 = vld [vmem:[#allocation11 + $0xc50] sm:$0xff]
    %v1338 = vld [vmem:[#allocation11 + $0xc58] sm:$0xff]
    %v1339 = vld [vmem:[#allocation11 + $0xc60] sm:$0xff]
    %v1340 = vld [vmem:[#allocation11 + $0xc68] sm:$0xff]
    %v1341 = vld [vmem:[#allocation11 + $0xc70] sm:$0xff]
    %v1342 = vld [vmem:[#allocation11 + $0xc78] sm:$0xff]
    %v1343 = vld [vmem:[#allocation11 + $0xc80] sm:$0xff]
    %v1344 = vld [vmem:[#allocation11 + $0xc88] sm:$0xff]
    %v1345 = vld [vmem:[#allocation11 + $0xc90] sm:$0xff]
    %v1346 = vld [vmem:[#allocation11 + $0xc98] sm:$0xff]
    %v1347 = vld [vmem:[#allocation11 + $0xca0] sm:$0xff]
    %v1348 = vld [vmem:[#allocation11 + $0xca8] sm:$0xff]
    %v1349 = vld [vmem:[#allocation11 + $0xcb0] sm:$0xff]
    %v1350 = vld [vmem:[#allocation11 + $0xcb8] sm:$0xff]
    %v1351 = vld [vmem:[#allocation11 + $0xcc0] sm:$0xff]
    %v1352 = vld [vmem:[#allocation11 + $0xcc8] sm:$0xff]
    %v1353 = vld [vmem:[#allocation11 + $0xcd0] sm:$0xff]
    %v1354 = vld [vmem:[#allocation11 + $0xcd8] sm:$0xff]
    %v1355 = vld [vmem:[#allocation11 + $0xce0] sm:$0xff]
    %v1356 = vld [vmem:[#allocation11 + $0xce8] sm:$0xff]
    %v1357 = vld [vmem:[#allocation11 + $0xcf0] sm:$0xff]
    %v1358 = vld [vmem:[#allocation11 + $0xcf8] sm:$0xff]
    %v1359 = vld [vmem:[#allocation11 + $0xd00] sm:$0xff]
    %v1360 = vld [vmem:[#allocation11 + $0xd08] sm:$0xff]
    %v1361 = vld [vmem:[#allocation11 + $0xd10] sm:$0xff]
    %v1362 = vld [vmem:[#allocation11 + $0xd18] sm:$0xff]
    %v1363 = vld [vmem:[#allocation11 + $0xd20] sm:$0xff]
    %v1364 = vld [vmem:[#allocation11 + $0xd28] sm:$0xff]
    %v1365 = vld [vmem:[#allocation11 + $0xd30] sm:$0xff]
    %v1366 = vld [vmem:[#allocation11 + $0xd38] sm:$0xff]
    %v1367 = vld [vmem:[#allocation11 + $0xd40] sm:$0xff]
    %v1368 = vld [vmem:[#allocation11 + $0xd48] sm:$0xff]
    %v1369 = vld [vmem:[#allocation11 + $0xd50] sm:$0xff]
    %v1370 = vld [vmem:[#allocation11 + $0xd58] sm:$0xff]
    %v1371 = vld [vmem:[#allocation11 + $0xd60] sm:$0xff]
    %v1372 = vld [vmem:[#allocation11 + $0xd68] sm:$0xff]
    %v1373 = vld [vmem:[#allocation11 + $0xd70] sm:$0xff]
    %v1374 = vld [vmem:[#allocation11 + $0xd78] sm:$0xff]
    %v1375 = vld [vmem:[#allocation11 + $0xd80] sm:$0xff]
    %v1376 = vld [vmem:[#allocation11 + $0xd88] sm:$0xff]
    %v1377 = vld [vmem:[#allocation11 + $0xd90] sm:$0xff]
    %v1378 = vld [vmem:[#allocation11 + $0xd98] sm:$0xff]
    %v1379 = vld [vmem:[#allocation11 + $0xda0] sm:$0xff]
    %v1380 = vld [vmem:[#allocation11 + $0xda8] sm:$0xff]
    %v1381 = vld [vmem:[#allocation11 + $0xdb0] sm:$0xff]
    %v1382 = vld [vmem:[#allocation11 + $0xdb8] sm:$0xff]
    %v1383 = vld [vmem:[#allocation11 + $0xdc0] sm:$0xff]
    %v1384 = vld [vmem:[#allocation11 + $0xdc8] sm:$0xff]
    %v1385 = vld [vmem:[#allocation11 + $0xdd0] sm:$0xff]
    %v1386 = vld [vmem:[#allocation11 + $0xdd8] sm:$0xff]
    %v1387 = vld [vmem:[#allocation11 + $0xde0] sm:$0xff]
    %v1388 = vld [vmem:[#allocation11 + $0xde8] sm:$0xff]
    %v1389 = vld [vmem:[#allocation11 + $0xdf0] sm:$0xff]
    %v1390 = vld [vmem:[#allocation11 + $0xdf8] sm:$0xff]
    %v1391 = vld [vmem:[#allocation11 + $0xe00] sm:$0xff]
    %v1392 = vld [vmem:[#allocation11 + $0xe08] sm:$0xff]
    %v1393 = vld [vmem:[#allocation11 + $0xe10] sm:$0xff]
    %v1394 = vld [vmem:[#allocation11 + $0xe18] sm:$0xff]
    %v1395 = vld [vmem:[#allocation11 + $0xe20] sm:$0xff]
    %v1396 = vld [vmem:[#allocation11 + $0xe28] sm:$0xff]
    %v1397 = vld [vmem:[#allocation11 + $0xe30] sm:$0xff]
    %v1398 = vld [vmem:[#allocation11 + $0xe38] sm:$0xff]
    %v1399 = vld [vmem:[#allocation11 + $0xe40] sm:$0xff]
    %v1400 = vld [vmem:[#allocation11 + $0xe48] sm:$0xff]
    %v1401 = vld [vmem:[#allocation11 + $0xe50] sm:$0xff]
    %v1402 = vld [vmem:[#allocation11 + $0xe58] sm:$0xff]
    %v1403 = vld [vmem:[#allocation11 + $0xe60] sm:$0xff]
    %v1404 = vld [vmem:[#allocation11 + $0xe68] sm:$0xff]
    %v1405 = vld [vmem:[#allocation11 + $0xe70] sm:$0xff]
    %v1406 = vld [vmem:[#allocation11 + $0xe78] sm:$0xff]
    %v1407 = vld [vmem:[#allocation11 + $0xe80] sm:$0xff]
    %v1408 = vld [vmem:[#allocation11 + $0xe88] sm:$0xff]
    %v1409 = vld [vmem:[#allocation11 + $0xe90] sm:$0xff]
    %v1410 = vld [vmem:[#allocation11 + $0xe98] sm:$0xff]
    %v1411 = vld [vmem:[#allocation11 + $0xea0] sm:$0xff]
    %v1412 = vld [vmem:[#allocation11 + $0xea8] sm:$0xff]
    %v1413 = vld [vmem:[#allocation11 + $0xeb0] sm:$0xff]
    %v1414 = vld [vmem:[#allocation11 + $0xeb8] sm:$0xff]
    %v1415 = vld [vmem:[#allocation11 + $0xec0] sm:$0xff]
    %v1416 = vld [vmem:[#allocation11 + $0xec8] sm:$0xff]
    %v1417 = vld [vmem:[#allocation11 + $0xed0] sm:$0xff]
    %v1418 = vld [vmem:[#allocation11 + $0xed8] sm:$0xff]
    %v1419 = vld [vmem:[#allocation11 + $0xee0] sm:$0xff]
    %v1420 = vld [vmem:[#allocation11 + $0xee8] sm:$0xff]
    %v1421 = vld [vmem:[#allocation11 + $0xef0] sm:$0xff]
    %v1422 = vld [vmem:[#allocation11 + $0xef8] sm:$0xff]
    %v1423 = vld [vmem:[#allocation11 + $0xf00] sm:$0xff]
    %v1424 = vld [vmem:[#allocation11 + $0xf08] sm:$0xff]
    %v1425 = vld [vmem:[#allocation11 + $0xf10] sm:$0xff]
    %v1426 = vld [vmem:[#allocation11 + $0xf18] sm:$0xff]
    %v1427 = vld [vmem:[#allocation11 + $0xf20] sm:$0xff]
    %v1428 = vld [vmem:[#allocation11 + $0xf28] sm:$0xff]
    %v1429 = vld [vmem:[#allocation11 + $0xf30] sm:$0xff]
    %v1430 = vld [vmem:[#allocation11 + $0xf38] sm:$0xff]
    %v1431 = vld [vmem:[#allocation11 + $0xf40] sm:$0xff]
    %v1432 = vld [vmem:[#allocation11 + $0xf48] sm:$0xff]
    %v1433 = vld [vmem:[#allocation11 + $0xf50] sm:$0xff]
    %v1434 = vld [vmem:[#allocation11 + $0xf58] sm:$0xff]
    %v1435 = vld [vmem:[#allocation11 + $0xf60] sm:$0xff]
    %v1436 = vld [vmem:[#allocation11 + $0xf68] sm:$0xff]
    %v1437 = vld [vmem:[#allocation11 + $0xf70] sm:$0xff]
    %v1438 = vld [vmem:[#allocation11 + $0xf78] sm:$0xff]
    %v1439 = vld [vmem:[#allocation11 + $0xf80] sm:$0xff]
    %v1440 = vld [vmem:[#allocation11 + $0xf88] sm:$0xff]
    %v1441 = vld [vmem:[#allocation11 + $0xf90] sm:$0xff]
    %v1442 = vld [vmem:[#allocation11 + $0xf98] sm:$0xff]
    %v1443 = vld [vmem:[#allocation11 + $0xfa0] sm:$0xff]
    %v1444 = vld [vmem:[#allocation11 + $0xfa8] sm:$0xff]
    %v1445 = vld [vmem:[#allocation11 + $0xfb0] sm:$0xff]
    %v1446 = vld [vmem:[#allocation11 + $0xfb8] sm:$0xff]
    %v1447 = vld [vmem:[#allocation11 + $0xfc0] sm:$0xff]
    %v1448 = vld [vmem:[#allocation11 + $0xfc8] sm:$0xff]
    %v1449 = vld [vmem:[#allocation11 + $0xfd0] sm:$0xff]
    %v1450 = vld [vmem:[#allocation11 + $0xfd8] sm:$0xff]
    %v1451 = vld [vmem:[#allocation11 + $0xfe0] sm:$0xff]
    %v1452 = vld [vmem:[#allocation11 + $0xfe8] sm:$0xff]
    %v1453 = vld [vmem:[#allocation11 + $0xff0] sm:$0xff]
    %v1454 = vld [vmem:[#allocation11 + $0xff8] sm:$0xff]
    %v1455 = vld [vmem:[#allocation13] sm:$0xff]
    %v1457 = vlaneseq
    %v1458 = vshrl.u32 %v1457, 7
    %v1459 = vsub.s32 0, %v1458
    %v1460 = vrot.slane %v1455, %v1459
    %v1461 = vlaneseq
    %v1462 = vshrl.u32 %v1461, 7
    %v1463 = vsub.s32 1, %v1462
    %v1464 = vrot.slane %v1455, %v1463
    %v1465 = vlaneseq
    %v1466 = vshrl.u32 %v1465, 7
    %v1467 = vsub.s32 2, %v1466
    %v1468 = vrot.slane %v1455, %v1467
    %v1469 = vlaneseq
    %v1470 = vshrl.u32 %v1469, 7
    %v1471 = vsub.s32 3, %v1470
    %v1472 = vrot.slane %v1455, %v1471
    %v1473 = vlaneseq
    %v1474 = vshrl.u32 %v1473, 7
    %v1475 = vsub.s32 4, %v1474
    %v1476 = vrot.slane %v1455, %v1475
    %v1477 = vlaneseq
    %v1478 = vshrl.u32 %v1477, 7
    %v1479 = vsub.s32 5, %v1478
    %v1480 = vrot.slane %v1455, %v1479
    %v1481 = vlaneseq
    %v1482 = vshrl.u32 %v1481, 7
    %v1483 = vsub.s32 6, %v1482
    %v1484 = vrot.slane %v1455, %v1483
    %v1485 = vlaneseq
    %v1486 = vshrl.u32 %v1485, 7
    %v1487 = vsub.s32 7, %v1486
    %v1488 = vrot.slane %v1455, %v1487
    %v2009 = vunpack.c.l.b16 %v943
    %v2010 = vunpack.c.h.b16 %v943
    %v2011 = vunpack.c.l.b16 %v944
    %v2012 = vunpack.c.h.b16 %v944
    %v2013 = vunpack.c.l.b16 %v945
    %v2014 = vunpack.c.h.b16 %v945
    %v2015 = vunpack.c.l.b16 %v946
    %v2016 = vunpack.c.h.b16 %v946
    %v2017 = vunpack.c.l.b16 %v947
    %v2018 = vunpack.c.h.b16 %v947
    %v2019 = vunpack.c.l.b16 %v948
    %v2020 = vunpack.c.h.b16 %v948
    %v2021 = vunpack.c.l.b16 %v949
    %v2022 = vunpack.c.h.b16 %v949
    %v2023 = vunpack.c.l.b16 %v950
    %v2024 = vunpack.c.h.b16 %v950
    %v2025 = vunpack.c.l.b16 %v951
    %v2026 = vunpack.c.h.b16 %v951
    %v2027 = vunpack.c.l.b16 %v952
    %v2028 = vunpack.c.h.b16 %v952
    %v2029 = vunpack.c.l.b16 %v953
    %v2030 = vunpack.c.h.b16 %v953
    %v2031 = vunpack.c.l.b16 %v954
    %v2032 = vunpack.c.h.b16 %v954
    %v2033 = vunpack.c.l.b16 %v955
    %v2034 = vunpack.c.h.b16 %v955
    %v2035 = vunpack.c.l.b16 %v956
    %v2036 = vunpack.c.h.b16 %v956
    %v2037 = vunpack.c.l.b16 %v957
    %v2038 = vunpack.c.h.b16 %v957
    %v2039 = vunpack.c.l.b16 %v958
    %v2040 = vunpack.c.h.b16 %v958
    %v2041 = vunpack.c.l.b16 %v959
    %v2042 = vunpack.c.h.b16 %v959
    %v2043 = vunpack.c.l.b16 %v960
    %v2044 = vunpack.c.h.b16 %v960
    %v2045 = vunpack.c.l.b16 %v961
    %v2046 = vunpack.c.h.b16 %v961
    %v2047 = vunpack.c.l.b16 %v962
    %v2048 = vunpack.c.h.b16 %v962
    %v2049 = vunpack.c.l.b16 %v963
    %v2050 = vunpack.c.h.b16 %v963
    %v2051 = vunpack.c.l.b16 %v964
    %v2052 = vunpack.c.h.b16 %v964
    %v2053 = vunpack.c.l.b16 %v965
    %v2054 = vunpack.c.h.b16 %v965
    %v2055 = vunpack.c.l.b16 %v966
    %v2056 = vunpack.c.h.b16 %v966
    %v2057 = vunpack.c.l.b16 %v967
    %v2058 = vunpack.c.h.b16 %v967
    %v2059 = vunpack.c.l.b16 %v968
    %v2060 = vunpack.c.h.b16 %v968
    %v2061 = vunpack.c.l.b16 %v969
    %v2062 = vunpack.c.h.b16 %v969
    %v2063 = vunpack.c.l.b16 %v970
    %v2064 = vunpack.c.h.b16 %v970
    %v2065 = vunpack.c.l.b16 %v971
    %v2066 = vunpack.c.h.b16 %v971
    %v2067 = vunpack.c.l.b16 %v972
    %v2068 = vunpack.c.h.b16 %v972
    %v2069 = vunpack.c.l.b16 %v973
    %v2070 = vunpack.c.h.b16 %v973
    %v2071 = vunpack.c.l.b16 %v974
    %v2072 = vunpack.c.h.b16 %v974
    %v2073 = vunpack.c.l.b16 %v975
    %v2074 = vunpack.c.h.b16 %v975
    %v2075 = vunpack.c.l.b16 %v976
    %v2076 = vunpack.c.h.b16 %v976
    %v2077 = vunpack.c.l.b16 %v977
    %v2078 = vunpack.c.h.b16 %v977
    %v2079 = vunpack.c.l.b16 %v978
    %v2080 = vunpack.c.h.b16 %v978
    %v2081 = vunpack.c.l.b16 %v979
    %v2082 = vunpack.c.h.b16 %v979
    %v2083 = vunpack.c.l.b16 %v980
    %v2084 = vunpack.c.h.b16 %v980
    %v2085 = vunpack.c.l.b16 %v981
    %v2086 = vunpack.c.h.b16 %v981
    %v2087 = vunpack.c.l.b16 %v982
    %v2088 = vunpack.c.h.b16 %v982
    %v2089 = vunpack.c.l.b16 %v983
    %v2090 = vunpack.c.h.b16 %v983
    %v2091 = vunpack.c.l.b16 %v984
    %v2092 = vunpack.c.h.b16 %v984
    %v2093 = vunpack.c.l.b16 %v985
    %v2094 = vunpack.c.h.b16 %v985
    %v2095 = vunpack.c.l.b16 %v986
    %v2096 = vunpack.c.h.b16 %v986
    %v2097 = vunpack.c.l.b16 %v987
    %v2098 = vunpack.c.h.b16 %v987
    %v2099 = vunpack.c.l.b16 %v988
    %v2100 = vunpack.c.h.b16 %v988
    %v2101 = vunpack.c.l.b16 %v989
    %v2102 = vunpack.c.h.b16 %v989
    %v2103 = vunpack.c.l.b16 %v990
    %v2104 = vunpack.c.h.b16 %v990
    %v2105 = vunpack.c.l.b16 %v991
    %v2106 = vunpack.c.h.b16 %v991
    %v2107 = vunpack.c.l.b16 %v992
    %v2108 = vunpack.c.h.b16 %v992
    %v2109 = vunpack.c.l.b16 %v993
    %v2110 = vunpack.c.h.b16 %v993
    %v2111 = vunpack.c.l.b16 %v994
    %v2112 = vunpack.c.h.b16 %v994
    %v2113 = vunpack.c.l.b16 %v995
    %v2114 = vunpack.c.h.b16 %v995
    %v2115 = vunpack.c.l.b16 %v996
    %v2116 = vunpack.c.h.b16 %v996
    %v2117 = vunpack.c.l.b16 %v997
    %v2118 = vunpack.c.h.b16 %v997
    %v2119 = vunpack.c.l.b16 %v998
    %v2120 = vunpack.c.h.b16 %v998
    %v2121 = vunpack.c.l.b16 %v999
    %v2122 = vunpack.c.h.b16 %v999
    %v2123 = vunpack.c.l.b16 %v1000
    %v2124 = vunpack.c.h.b16 %v1000
    %v2125 = vunpack.c.l.b16 %v1001
    %v2126 = vunpack.c.h.b16 %v1001
    %v2127 = vunpack.c.l.b16 %v1002
    %v2128 = vunpack.c.h.b16 %v1002
    %v2129 = vunpack.c.l.b16 %v1003
    %v2130 = vunpack.c.h.b16 %v1003
    %v2131 = vunpack.c.l.b16 %v1004
    %v2132 = vunpack.c.h.b16 %v1004
    %v2133 = vunpack.c.l.b16 %v1005
    %v2134 = vunpack.c.h.b16 %v1005
    %v2135 = vunpack.c.l.b16 %v1006
    %v2136 = vunpack.c.h.b16 %v1006
    %v2137 = vunpack.c.l.b16 %v1007
    %v2138 = vunpack.c.h.b16 %v1007
    %v2139 = vunpack.c.l.b16 %v1008
    %v2140 = vunpack.c.h.b16 %v1008
    %v2141 = vunpack.c.l.b16 %v1009
    %v2142 = vunpack.c.h.b16 %v1009
    %v2143 = vunpack.c.l.b16 %v1010
    %v2144 = vunpack.c.h.b16 %v1010
    %v2145 = vunpack.c.l.b16 %v1011
    %v2146 = vunpack.c.h.b16 %v1011
    %v2147 = vunpack.c.l.b16 %v1012
    %v2148 = vunpack.c.h.b16 %v1012
    %v2149 = vunpack.c.l.b16 %v1013
    %v2150 = vunpack.c.h.b16 %v1013
    %v2151 = vunpack.c.l.b16 %v1014
    %v2152 = vunpack.c.h.b16 %v1014
    %v2153 = vunpack.c.l.b16 %v1015
    %v2154 = vunpack.c.h.b16 %v1015
    %v2155 = vunpack.c.l.b16 %v1016
    %v2156 = vunpack.c.h.b16 %v1016
    %v2157 = vunpack.c.l.b16 %v1017
    %v2158 = vunpack.c.h.b16 %v1017
    %v2159 = vunpack.c.l.b16 %v1018
    %v2160 = vunpack.c.h.b16 %v1018
    %v2161 = vunpack.c.l.b16 %v1019
    %v2162 = vunpack.c.h.b16 %v1019
    %v2163 = vunpack.c.l.b16 %v1020
    %v2164 = vunpack.c.h.b16 %v1020
    %v2165 = vunpack.c.l.b16 %v1021
    %v2166 = vunpack.c.h.b16 %v1021
    %v2167 = vunpack.c.l.b16 %v1022
    %v2168 = vunpack.c.h.b16 %v1022
    %v2169 = vunpack.c.l.b16 %v1023
    %v2170 = vunpack.c.h.b16 %v1023
    %v2171 = vunpack.c.l.b16 %v1024
    %v2172 = vunpack.c.h.b16 %v1024
    %v2173 = vunpack.c.l.b16 %v1025
    %v2174 = vunpack.c.h.b16 %v1025
    %v2175 = vunpack.c.l.b16 %v1026
    %v2176 = vunpack.c.h.b16 %v1026
    %v2177 = vunpack.c.l.b16 %v1027
    %v2178 = vunpack.c.h.b16 %v1027
    %v2179 = vunpack.c.l.b16 %v1028
    %v2180 = vunpack.c.h.b16 %v1028
    %v2181 = vunpack.c.l.b16 %v1029
    %v2182 = vunpack.c.h.b16 %v1029
    %v2183 = vunpack.c.l.b16 %v1030
    %v2184 = vunpack.c.h.b16 %v1030
    %v2185 = vunpack.c.l.b16 %v1031
    %v2186 = vunpack.c.h.b16 %v1031
    %v2187 = vunpack.c.l.b16 %v1032
    %v2188 = vunpack.c.h.b16 %v1032
    %v2189 = vunpack.c.l.b16 %v1033
    %v2190 = vunpack.c.h.b16 %v1033
    %v2191 = vunpack.c.l.b16 %v1034
    %v2192 = vunpack.c.h.b16 %v1034
    %v2193 = vunpack.c.l.b16 %v1035
    %v2194 = vunpack.c.h.b16 %v1035
    %v2195 = vunpack.c.l.b16 %v1036
    %v2196 = vunpack.c.h.b16 %v1036
    %v2197 = vunpack.c.l.b16 %v1037
    %v2198 = vunpack.c.h.b16 %v1037
    %v2199 = vunpack.c.l.b16 %v1038
    %v2200 = vunpack.c.h.b16 %v1038
    %v2201 = vunpack.c.l.b16 %v1039
    %v2202 = vunpack.c.h.b16 %v1039
    %v2203 = vunpack.c.l.b16 %v1040
    %v2204 = vunpack.c.h.b16 %v1040
    %v2205 = vunpack.c.l.b16 %v1041
    %v2206 = vunpack.c.h.b16 %v1041
    %v2207 = vunpack.c.l.b16 %v1042
    %v2208 = vunpack.c.h.b16 %v1042
    %v2209 = vunpack.c.l.b16 %v1043
    %v2210 = vunpack.c.h.b16 %v1043
    %v2211 = vunpack.c.l.b16 %v1044
    %v2212 = vunpack.c.h.b16 %v1044
    %v2213 = vunpack.c.l.b16 %v1045
    %v2214 = vunpack.c.h.b16 %v1045
    %v2215 = vunpack.c.l.b16 %v1046
    %v2216 = vunpack.c.h.b16 %v1046
    %v2217 = vunpack.c.l.b16 %v1047
    %v2218 = vunpack.c.h.b16 %v1047
    %v2219 = vunpack.c.l.b16 %v1048
    %v2220 = vunpack.c.h.b16 %v1048
    %v2221 = vunpack.c.l.b16 %v1049
    %v2222 = vunpack.c.h.b16 %v1049
    %v2223 = vunpack.c.l.b16 %v1050
    %v2224 = vunpack.c.h.b16 %v1050
    %v2225 = vunpack.c.l.b16 %v1051
    %v2226 = vunpack.c.h.b16 %v1051
    %v2227 = vunpack.c.l.b16 %v1052
    %v2228 = vunpack.c.h.b16 %v1052
    %v2229 = vunpack.c.l.b16 %v1053
    %v2230 = vunpack.c.h.b16 %v1053
    %v2231 = vunpack.c.l.b16 %v1054
    %v2232 = vunpack.c.h.b16 %v1054
    %v2233 = vunpack.c.l.b16 %v1055
    %v2234 = vunpack.c.h.b16 %v1055
    %v2235 = vunpack.c.l.b16 %v1056
    %v2236 = vunpack.c.h.b16 %v1056
    %v2237 = vunpack.c.l.b16 %v1057
    %v2238 = vunpack.c.h.b16 %v1057
    %v2239 = vunpack.c.l.b16 %v1058
    %v2240 = vunpack.c.h.b16 %v1058
    %v2241 = vunpack.c.l.b16 %v1059
    %v2242 = vunpack.c.h.b16 %v1059
    %v2243 = vunpack.c.l.b16 %v1060
    %v2244 = vunpack.c.h.b16 %v1060
    %v2245 = vunpack.c.l.b16 %v1061
    %v2246 = vunpack.c.h.b16 %v1061
    %v2247 = vunpack.c.l.b16 %v1062
    %v2248 = vunpack.c.h.b16 %v1062
    %v2249 = vunpack.c.l.b16 %v1063
    %v2250 = vunpack.c.h.b16 %v1063
    %v2251 = vunpack.c.l.b16 %v1064
    %v2252 = vunpack.c.h.b16 %v1064
    %v2253 = vunpack.c.l.b16 %v1065
    %v2254 = vunpack.c.h.b16 %v1065
    %v2255 = vunpack.c.l.b16 %v1066
    %v2256 = vunpack.c.h.b16 %v1066
    %v2257 = vunpack.c.l.b16 %v1067
    %v2258 = vunpack.c.h.b16 %v1067
    %v2259 = vunpack.c.l.b16 %v1068
    %v2260 = vunpack.c.h.b16 %v1068
    %v2261 = vunpack.c.l.b16 %v1069
    %v2262 = vunpack.c.h.b16 %v1069
    %v2263 = vunpack.c.l.b16 %v1070
    %v2264 = vunpack.c.h.b16 %v1070
    %v2265 = vunpack.c.l.b16 %v1071
    %v2266 = vunpack.c.h.b16 %v1071
    %v2267 = vunpack.c.l.b16 %v1072
    %v2268 = vunpack.c.h.b16 %v1072
    %v2269 = vunpack.c.l.b16 %v1073
    %v2270 = vunpack.c.h.b16 %v1073
    %v2271 = vunpack.c.l.b16 %v1074
    %v2272 = vunpack.c.h.b16 %v1074
    %v2273 = vunpack.c.l.b16 %v1075
    %v2274 = vunpack.c.h.b16 %v1075
    %v2275 = vunpack.c.l.b16 %v1076
    %v2276 = vunpack.c.h.b16 %v1076
    %v2277 = vunpack.c.l.b16 %v1077
    %v2278 = vunpack.c.h.b16 %v1077
    %v2279 = vunpack.c.l.b16 %v1078
    %v2280 = vunpack.c.h.b16 %v1078
    %v2281 = vunpack.c.l.b16 %v1079
    %v2282 = vunpack.c.h.b16 %v1079
    %v2283 = vunpack.c.l.b16 %v1080
    %v2284 = vunpack.c.h.b16 %v1080
    %v2285 = vunpack.c.l.b16 %v1081
    %v2286 = vunpack.c.h.b16 %v1081
    %v2287 = vunpack.c.l.b16 %v1082
    %v2288 = vunpack.c.h.b16 %v1082
    %v2289 = vunpack.c.l.b16 %v1083
    %v2290 = vunpack.c.h.b16 %v1083
    %v2291 = vunpack.c.l.b16 %v1084
    %v2292 = vunpack.c.h.b16 %v1084
    %v2293 = vunpack.c.l.b16 %v1085
    %v2294 = vunpack.c.h.b16 %v1085
    %v2295 = vunpack.c.l.b16 %v1086
    %v2296 = vunpack.c.h.b16 %v1086
    %v2297 = vunpack.c.l.b16 %v1087
    %v2298 = vunpack.c.h.b16 %v1087
    %v2299 = vunpack.c.l.b16 %v1088
    %v2300 = vunpack.c.h.b16 %v1088
    %v2301 = vunpack.c.l.b16 %v1089
    %v2302 = vunpack.c.h.b16 %v1089
    %v2303 = vunpack.c.l.b16 %v1090
    %v2304 = vunpack.c.h.b16 %v1090
    %v2305 = vunpack.c.l.b16 %v1091
    %v2306 = vunpack.c.h.b16 %v1091
    %v2307 = vunpack.c.l.b16 %v1092
    %v2308 = vunpack.c.h.b16 %v1092
    %v2309 = vunpack.c.l.b16 %v1093
    %v2310 = vunpack.c.h.b16 %v1093
    %v2311 = vunpack.c.l.b16 %v1094
    %v2312 = vunpack.c.h.b16 %v1094
    %v2313 = vunpack.c.l.b16 %v1095
    %v2314 = vunpack.c.h.b16 %v1095
    %v2315 = vunpack.c.l.b16 %v1096
    %v2316 = vunpack.c.h.b16 %v1096
    %v2317 = vunpack.c.l.b16 %v1097
    %v2318 = vunpack.c.h.b16 %v1097
    %v2319 = vunpack.c.l.b16 %v1098
    %v2320 = vunpack.c.h.b16 %v1098
    %v2321 = vunpack.c.l.b16 %v1099
    %v2322 = vunpack.c.h.b16 %v1099
    %v2323 = vunpack.c.l.b16 %v1100
    %v2324 = vunpack.c.h.b16 %v1100
    %v2325 = vunpack.c.l.b16 %v1101
    %v2326 = vunpack.c.h.b16 %v1101
    %v2327 = vunpack.c.l.b16 %v1102
    %v2328 = vunpack.c.h.b16 %v1102
    %v2329 = vunpack.c.l.b16 %v1103
    %v2330 = vunpack.c.h.b16 %v1103
    %v2331 = vunpack.c.l.b16 %v1104
    %v2332 = vunpack.c.h.b16 %v1104
    %v2333 = vunpack.c.l.b16 %v1105
    %v2334 = vunpack.c.h.b16 %v1105
    %v2335 = vunpack.c.l.b16 %v1106
    %v2336 = vunpack.c.h.b16 %v1106
    %v2337 = vunpack.c.l.b16 %v1107
    %v2338 = vunpack.c.h.b16 %v1107
    %v2339 = vunpack.c.l.b16 %v1108
    %v2340 = vunpack.c.h.b16 %v1108
    %v2341 = vunpack.c.l.b16 %v1109
    %v2342 = vunpack.c.h.b16 %v1109
    %v2343 = vunpack.c.l.b16 %v1110
    %v2344 = vunpack.c.h.b16 %v1110
    %v2345 = vunpack.c.l.b16 %v1111
    %v2346 = vunpack.c.h.b16 %v1111
    %v2347 = vunpack.c.l.b16 %v1112
    %v2348 = vunpack.c.h.b16 %v1112
    %v2349 = vunpack.c.l.b16 %v1113
    %v2350 = vunpack.c.h.b16 %v1113
    %v2351 = vunpack.c.l.b16 %v1114
    %v2352 = vunpack.c.h.b16 %v1114
    %v2353 = vunpack.c.l.b16 %v1115
    %v2354 = vunpack.c.h.b16 %v1115
    %v2355 = vunpack.c.l.b16 %v1116
    %v2356 = vunpack.c.h.b16 %v1116
    %v2357 = vunpack.c.l.b16 %v1117
    %v2358 = vunpack.c.h.b16 %v1117
    %v2359 = vunpack.c.l.b16 %v1118
    %v2360 = vunpack.c.h.b16 %v1118
    %v2361 = vunpack.c.l.b16 %v1119
    %v2362 = vunpack.c.h.b16 %v1119
    %v2363 = vunpack.c.l.b16 %v1120
    %v2364 = vunpack.c.h.b16 %v1120
    %v2365 = vunpack.c.l.b16 %v1121
    %v2366 = vunpack.c.h.b16 %v1121
    %v2367 = vunpack.c.l.b16 %v1122
    %v2368 = vunpack.c.h.b16 %v1122
    %v2369 = vunpack.c.l.b16 %v1123
    %v2370 = vunpack.c.h.b16 %v1123
    %v2371 = vunpack.c.l.b16 %v1124
    %v2372 = vunpack.c.h.b16 %v1124
    %v2373 = vunpack.c.l.b16 %v1125
    %v2374 = vunpack.c.h.b16 %v1125
    %v2375 = vunpack.c.l.b16 %v1126
    %v2376 = vunpack.c.h.b16 %v1126
    %v2377 = vunpack.c.l.b16 %v1127
    %v2378 = vunpack.c.h.b16 %v1127
    %v2379 = vunpack.c.l.b16 %v1128
    %v2380 = vunpack.c.h.b16 %v1128
    %v2381 = vunpack.c.l.b16 %v1129
    %v2382 = vunpack.c.h.b16 %v1129
    %v2383 = vunpack.c.l.b16 %v1130
    %v2384 = vunpack.c.h.b16 %v1130
    %v2385 = vunpack.c.l.b16 %v1131
    %v2386 = vunpack.c.h.b16 %v1131
    %v2387 = vunpack.c.l.b16 %v1132
    %v2388 = vunpack.c.h.b16 %v1132
    %v2389 = vunpack.c.l.b16 %v1133
    %v2390 = vunpack.c.h.b16 %v1133
    %v2391 = vunpack.c.l.b16 %v1134
    %v2392 = vunpack.c.h.b16 %v1134
    %v2393 = vunpack.c.l.b16 %v1135
    %v2394 = vunpack.c.h.b16 %v1135
    %v2395 = vunpack.c.l.b16 %v1136
    %v2396 = vunpack.c.h.b16 %v1136
    %v2397 = vunpack.c.l.b16 %v1137
    %v2398 = vunpack.c.h.b16 %v1137
    %v2399 = vunpack.c.l.b16 %v1138
    %v2400 = vunpack.c.h.b16 %v1138
    %v2401 = vunpack.c.l.b16 %v1139
    %v2402 = vunpack.c.h.b16 %v1139
    %v2403 = vunpack.c.l.b16 %v1140
    %v2404 = vunpack.c.h.b16 %v1140
    %v2405 = vunpack.c.l.b16 %v1141
    %v2406 = vunpack.c.h.b16 %v1141
    %v2407 = vunpack.c.l.b16 %v1142
    %v2408 = vunpack.c.h.b16 %v1142
    %v2409 = vunpack.c.l.b16 %v1143
    %v2410 = vunpack.c.h.b16 %v1143
    %v2411 = vunpack.c.l.b16 %v1144
    %v2412 = vunpack.c.h.b16 %v1144
    %v2413 = vunpack.c.l.b16 %v1145
    %v2414 = vunpack.c.h.b16 %v1145
    %v2415 = vunpack.c.l.b16 %v1146
    %v2416 = vunpack.c.h.b16 %v1146
    %v2417 = vunpack.c.l.b16 %v1147
    %v2418 = vunpack.c.h.b16 %v1147
    %v2419 = vunpack.c.l.b16 %v1148
    %v2420 = vunpack.c.h.b16 %v1148
    %v2421 = vunpack.c.l.b16 %v1149
    %v2422 = vunpack.c.h.b16 %v1149
    %v2423 = vunpack.c.l.b16 %v1150
    %v2424 = vunpack.c.h.b16 %v1150
    %v2425 = vunpack.c.l.b16 %v1151
    %v2426 = vunpack.c.h.b16 %v1151
    %v2427 = vunpack.c.l.b16 %v1152
    %v2428 = vunpack.c.h.b16 %v1152
    %v2429 = vunpack.c.l.b16 %v1153
    %v2430 = vunpack.c.h.b16 %v1153
    %v2431 = vunpack.c.l.b16 %v1154
    %v2432 = vunpack.c.h.b16 %v1154
    %v2433 = vunpack.c.l.b16 %v1155
    %v2434 = vunpack.c.h.b16 %v1155
    %v2435 = vunpack.c.l.b16 %v1156
    %v2436 = vunpack.c.h.b16 %v1156
    %v2437 = vunpack.c.l.b16 %v1157
    %v2438 = vunpack.c.h.b16 %v1157
    %v2439 = vunpack.c.l.b16 %v1158
    %v2440 = vunpack.c.h.b16 %v1158
    %v2441 = vunpack.c.l.b16 %v1159
    %v2442 = vunpack.c.h.b16 %v1159
    %v2443 = vunpack.c.l.b16 %v1160
    %v2444 = vunpack.c.h.b16 %v1160
    %v2445 = vunpack.c.l.b16 %v1161
    %v2446 = vunpack.c.h.b16 %v1161
    %v2447 = vunpack.c.l.b16 %v1162
    %v2448 = vunpack.c.h.b16 %v1162
    %v2449 = vunpack.c.l.b16 %v1163
    %v2450 = vunpack.c.h.b16 %v1163
    %v2451 = vunpack.c.l.b16 %v1164
    %v2452 = vunpack.c.h.b16 %v1164
    %v2453 = vunpack.c.l.b16 %v1165
    %v2454 = vunpack.c.h.b16 %v1165
    %v2455 = vunpack.c.l.b16 %v1166
    %v2456 = vunpack.c.h.b16 %v1166
    %v2457 = vunpack.c.l.b16 %v1167
    %v2458 = vunpack.c.h.b16 %v1167
    %v2459 = vunpack.c.l.b16 %v1168
    %v2460 = vunpack.c.h.b16 %v1168
    %v2461 = vunpack.c.l.b16 %v1169
    %v2462 = vunpack.c.h.b16 %v1169
    %v2463 = vunpack.c.l.b16 %v1170
    %v2464 = vunpack.c.h.b16 %v1170
    %v2465 = vunpack.c.l.b16 %v1171
    %v2466 = vunpack.c.h.b16 %v1171
    %v2467 = vunpack.c.l.b16 %v1172
    %v2468 = vunpack.c.h.b16 %v1172
    %v2469 = vunpack.c.l.b16 %v1173
    %v2470 = vunpack.c.h.b16 %v1173
    %v2471 = vunpack.c.l.b16 %v1174
    %v2472 = vunpack.c.h.b16 %v1174
    %v2473 = vunpack.c.l.b16 %v1175
    %v2474 = vunpack.c.h.b16 %v1175
    %v2475 = vunpack.c.l.b16 %v1176
    %v2476 = vunpack.c.h.b16 %v1176
    %v2477 = vunpack.c.l.b16 %v1177
    %v2478 = vunpack.c.h.b16 %v1177
    %v2479 = vunpack.c.l.b16 %v1178
    %v2480 = vunpack.c.h.b16 %v1178
    %v2481 = vunpack.c.l.b16 %v1179
    %v2482 = vunpack.c.h.b16 %v1179
    %v2483 = vunpack.c.l.b16 %v1180
    %v2484 = vunpack.c.h.b16 %v1180
    %v2485 = vunpack.c.l.b16 %v1181
    %v2486 = vunpack.c.h.b16 %v1181
    %v2487 = vunpack.c.l.b16 %v1182
    %v2488 = vunpack.c.h.b16 %v1182
    %v2489 = vunpack.c.l.b16 %v1183
    %v2490 = vunpack.c.h.b16 %v1183
    %v2491 = vunpack.c.l.b16 %v1184
    %v2492 = vunpack.c.h.b16 %v1184
    %v2493 = vunpack.c.l.b16 %v1185
    %v2494 = vunpack.c.h.b16 %v1185
    %v2495 = vunpack.c.l.b16 %v1186
    %v2496 = vunpack.c.h.b16 %v1186
    %v2497 = vunpack.c.l.b16 %v1187
    %v2498 = vunpack.c.h.b16 %v1187
    %v2499 = vunpack.c.l.b16 %v1188
    %v2500 = vunpack.c.h.b16 %v1188
    %v2501 = vunpack.c.l.b16 %v1189
    %v2502 = vunpack.c.h.b16 %v1189
    %v2503 = vunpack.c.l.b16 %v1190
    %v2504 = vunpack.c.h.b16 %v1190
    %v2505 = vunpack.c.l.b16 %v1191
    %v2506 = vunpack.c.h.b16 %v1191
    %v2507 = vunpack.c.l.b16 %v1192
    %v2508 = vunpack.c.h.b16 %v1192
    %v2509 = vunpack.c.l.b16 %v1193
    %v2510 = vunpack.c.h.b16 %v1193
    %v2511 = vunpack.c.l.b16 %v1194
    %v2512 = vunpack.c.h.b16 %v1194
    %v2513 = vunpack.c.l.b16 %v1195
    %v2514 = vunpack.c.h.b16 %v1195
    %v2515 = vunpack.c.l.b16 %v1196
    %v2516 = vunpack.c.h.b16 %v1196
    %v2517 = vunpack.c.l.b16 %v1197
    %v2518 = vunpack.c.h.b16 %v1197
    %v2519 = vunpack.c.l.b16 %v1198
    %v2520 = vunpack.c.h.b16 %v1198
    %v2521 = vunpack.c.l.b16 %v1199
    %v2522 = vunpack.c.h.b16 %v1199
    %v2523 = vunpack.c.l.b16 %v1200
    %v2524 = vunpack.c.h.b16 %v1200
    %v2525 = vunpack.c.l.b16 %v1201
    %v2526 = vunpack.c.h.b16 %v1201
    %v2527 = vunpack.c.l.b16 %v1202
    %v2528 = vunpack.c.h.b16 %v1202
    %v2529 = vunpack.c.l.b16 %v1203
    %v2530 = vunpack.c.h.b16 %v1203
    %v2531 = vunpack.c.l.b16 %v1204
    %v2532 = vunpack.c.h.b16 %v1204
    %v2533 = vunpack.c.l.b16 %v1205
    %v2534 = vunpack.c.h.b16 %v1205
    %v2535 = vunpack.c.l.b16 %v1206
    %v2536 = vunpack.c.h.b16 %v1206
    %v2537 = vunpack.c.l.b16 %v1207
    %v2538 = vunpack.c.h.b16 %v1207
    %v2539 = vunpack.c.l.b16 %v1208
    %v2540 = vunpack.c.h.b16 %v1208
    %v2541 = vunpack.c.l.b16 %v1209
    %v2542 = vunpack.c.h.b16 %v1209
    %v2543 = vunpack.c.l.b16 %v1210
    %v2544 = vunpack.c.h.b16 %v1210
    %v2545 = vunpack.c.l.b16 %v1211
    %v2546 = vunpack.c.h.b16 %v1211
    %v2547 = vunpack.c.l.b16 %v1212
    %v2548 = vunpack.c.h.b16 %v1212
    %v2549 = vunpack.c.l.b16 %v1213
    %v2550 = vunpack.c.h.b16 %v1213
    %v2551 = vunpack.c.l.b16 %v1214
    %v2552 = vunpack.c.h.b16 %v1214
    %v2553 = vunpack.c.l.b16 %v1215
    %v2554 = vunpack.c.h.b16 %v1215
    %v2555 = vunpack.c.l.b16 %v1216
    %v2556 = vunpack.c.h.b16 %v1216
    %v2557 = vunpack.c.l.b16 %v1217
    %v2558 = vunpack.c.h.b16 %v1217
    %v2559 = vunpack.c.l.b16 %v1218
    %v2560 = vunpack.c.h.b16 %v1218
    %v2561 = vunpack.c.l.b16 %v1219
    %v2562 = vunpack.c.h.b16 %v1219
    %v2563 = vunpack.c.l.b16 %v1220
    %v2564 = vunpack.c.h.b16 %v1220
    %v2565 = vunpack.c.l.b16 %v1221
    %v2566 = vunpack.c.h.b16 %v1221
    %v2567 = vunpack.c.l.b16 %v1222
    %v2568 = vunpack.c.h.b16 %v1222
    %v2569 = vunpack.c.l.b16 %v1223
    %v2570 = vunpack.c.h.b16 %v1223
    %v2571 = vunpack.c.l.b16 %v1224
    %v2572 = vunpack.c.h.b16 %v1224
    %v2573 = vunpack.c.l.b16 %v1225
    %v2574 = vunpack.c.h.b16 %v1225
    %v2575 = vunpack.c.l.b16 %v1226
    %v2576 = vunpack.c.h.b16 %v1226
    %v2577 = vunpack.c.l.b16 %v1227
    %v2578 = vunpack.c.h.b16 %v1227
    %v2579 = vunpack.c.l.b16 %v1228
    %v2580 = vunpack.c.h.b16 %v1228
    %v2581 = vunpack.c.l.b16 %v1229
    %v2582 = vunpack.c.h.b16 %v1229
    %v2583 = vunpack.c.l.b16 %v1230
    %v2584 = vunpack.c.h.b16 %v1230
    %v2585 = vunpack.c.l.b16 %v1231
    %v2586 = vunpack.c.h.b16 %v1231
    %v2587 = vunpack.c.l.b16 %v1232
    %v2588 = vunpack.c.h.b16 %v1232
    %v2589 = vunpack.c.l.b16 %v1233
    %v2590 = vunpack.c.h.b16 %v1233
    %v2591 = vunpack.c.l.b16 %v1234
    %v2592 = vunpack.c.h.b16 %v1234
    %v2593 = vunpack.c.l.b16 %v1235
    %v2594 = vunpack.c.h.b16 %v1235
    %v2595 = vunpack.c.l.b16 %v1236
    %v2596 = vunpack.c.h.b16 %v1236
    %v2597 = vunpack.c.l.b16 %v1237
    %v2598 = vunpack.c.h.b16 %v1237
    %v2599 = vunpack.c.l.b16 %v1238
    %v2600 = vunpack.c.h.b16 %v1238
    %v2601 = vunpack.c.l.b16 %v1239
    %v2602 = vunpack.c.h.b16 %v1239
    %v2603 = vunpack.c.l.b16 %v1240
    %v2604 = vunpack.c.h.b16 %v1240
    %v2605 = vunpack.c.l.b16 %v1241
    %v2606 = vunpack.c.h.b16 %v1241
    %v2607 = vunpack.c.l.b16 %v1242
    %v2608 = vunpack.c.h.b16 %v1242
    %v2609 = vunpack.c.l.b16 %v1243
    %v2610 = vunpack.c.h.b16 %v1243
    %v2611 = vunpack.c.l.b16 %v1244
    %v2612 = vunpack.c.h.b16 %v1244
    %v2613 = vunpack.c.l.b16 %v1245
    %v2614 = vunpack.c.h.b16 %v1245
    %v2615 = vunpack.c.l.b16 %v1246
    %v2616 = vunpack.c.h.b16 %v1246
    %v2617 = vunpack.c.l.b16 %v1247
    %v2618 = vunpack.c.h.b16 %v1247
    %v2619 = vunpack.c.l.b16 %v1248
    %v2620 = vunpack.c.h.b16 %v1248
    %v2621 = vunpack.c.l.b16 %v1249
    %v2622 = vunpack.c.h.b16 %v1249
    %v2623 = vunpack.c.l.b16 %v1250
    %v2624 = vunpack.c.h.b16 %v1250
    %v2625 = vunpack.c.l.b16 %v1251
    %v2626 = vunpack.c.h.b16 %v1251
    %v2627 = vunpack.c.l.b16 %v1252
    %v2628 = vunpack.c.h.b16 %v1252
    %v2629 = vunpack.c.l.b16 %v1253
    %v2630 = vunpack.c.h.b16 %v1253
    %v2631 = vunpack.c.l.b16 %v1254
    %v2632 = vunpack.c.h.b16 %v1254
    %v2633 = vunpack.c.l.b16 %v1255
    %v2634 = vunpack.c.h.b16 %v1255
    %v2635 = vunpack.c.l.b16 %v1256
    %v2636 = vunpack.c.h.b16 %v1256
    %v2637 = vunpack.c.l.b16 %v1257
    %v2638 = vunpack.c.h.b16 %v1257
    %v2639 = vunpack.c.l.b16 %v1258
    %v2640 = vunpack.c.h.b16 %v1258
    %v2641 = vunpack.c.l.b16 %v1259
    %v2642 = vunpack.c.h.b16 %v1259
    %v2643 = vunpack.c.l.b16 %v1260
    %v2644 = vunpack.c.h.b16 %v1260
    %v2645 = vunpack.c.l.b16 %v1261
    %v2646 = vunpack.c.h.b16 %v1261
    %v2647 = vunpack.c.l.b16 %v1262
    %v2648 = vunpack.c.h.b16 %v1262
    %v2649 = vunpack.c.l.b16 %v1263
    %v2650 = vunpack.c.h.b16 %v1263
    %v2651 = vunpack.c.l.b16 %v1264
    %v2652 = vunpack.c.h.b16 %v1264
    %v2653 = vunpack.c.l.b16 %v1265
    %v2654 = vunpack.c.h.b16 %v1265
    %v2655 = vunpack.c.l.b16 %v1266
    %v2656 = vunpack.c.h.b16 %v1266
    %v2657 = vunpack.c.l.b16 %v1267
    %v2658 = vunpack.c.h.b16 %v1267
    %v2659 = vunpack.c.l.b16 %v1268
    %v2660 = vunpack.c.h.b16 %v1268
    %v2661 = vunpack.c.l.b16 %v1269
    %v2662 = vunpack.c.h.b16 %v1269
    %v2663 = vunpack.c.l.b16 %v1270
    %v2664 = vunpack.c.h.b16 %v1270
    %v2665 = vunpack.c.l.b16 %v1271
    %v2666 = vunpack.c.h.b16 %v1271
    %v2667 = vunpack.c.l.b16 %v1272
    %v2668 = vunpack.c.h.b16 %v1272
    %v2669 = vunpack.c.l.b16 %v1273
    %v2670 = vunpack.c.h.b16 %v1273
    %v2671 = vunpack.c.l.b16 %v1274
    %v2672 = vunpack.c.h.b16 %v1274
    %v2673 = vunpack.c.l.b16 %v1275
    %v2674 = vunpack.c.h.b16 %v1275
    %v2675 = vunpack.c.l.b16 %v1276
    %v2676 = vunpack.c.h.b16 %v1276
    %v2677 = vunpack.c.l.b16 %v1277
    %v2678 = vunpack.c.h.b16 %v1277
    %v2679 = vunpack.c.l.b16 %v1278
    %v2680 = vunpack.c.h.b16 %v1278
    %v2681 = vunpack.c.l.b16 %v1279
    %v2682 = vunpack.c.h.b16 %v1279
    %v2683 = vunpack.c.l.b16 %v1280
    %v2684 = vunpack.c.h.b16 %v1280
    %v2685 = vunpack.c.l.b16 %v1281
    %v2686 = vunpack.c.h.b16 %v1281
    %v2687 = vunpack.c.l.b16 %v1282
    %v2688 = vunpack.c.h.b16 %v1282
    %v2689 = vunpack.c.l.b16 %v1283
    %v2690 = vunpack.c.h.b16 %v1283
    %v2691 = vunpack.c.l.b16 %v1284
    %v2692 = vunpack.c.h.b16 %v1284
    %v2693 = vunpack.c.l.b16 %v1285
    %v2694 = vunpack.c.h.b16 %v1285
    %v2695 = vunpack.c.l.b16 %v1286
    %v2696 = vunpack.c.h.b16 %v1286
    %v2697 = vunpack.c.l.b16 %v1287
    %v2698 = vunpack.c.h.b16 %v1287
    %v2699 = vunpack.c.l.b16 %v1288
    %v2700 = vunpack.c.h.b16 %v1288
    %v2701 = vunpack.c.l.b16 %v1289
    %v2702 = vunpack.c.h.b16 %v1289
    %v2703 = vunpack.c.l.b16 %v1290
    %v2704 = vunpack.c.h.b16 %v1290
    %v2705 = vunpack.c.l.b16 %v1291
    %v2706 = vunpack.c.h.b16 %v1291
    %v2707 = vunpack.c.l.b16 %v1292
    %v2708 = vunpack.c.h.b16 %v1292
    %v2709 = vunpack.c.l.b16 %v1293
    %v2710 = vunpack.c.h.b16 %v1293
    %v2711 = vunpack.c.l.b16 %v1294
    %v2712 = vunpack.c.h.b16 %v1294
    %v2713 = vunpack.c.l.b16 %v1295
    %v2714 = vunpack.c.h.b16 %v1295
    %v2715 = vunpack.c.l.b16 %v1296
    %v2716 = vunpack.c.h.b16 %v1296
    %v2717 = vunpack.c.l.b16 %v1297
    %v2718 = vunpack.c.h.b16 %v1297
    %v2719 = vunpack.c.l.b16 %v1298
    %v2720 = vunpack.c.h.b16 %v1298
    %v2721 = vunpack.c.l.b16 %v1299
    %v2722 = vunpack.c.h.b16 %v1299
    %v2723 = vunpack.c.l.b16 %v1300
    %v2724 = vunpack.c.h.b16 %v1300
    %v2725 = vunpack.c.l.b16 %v1301
    %v2726 = vunpack.c.h.b16 %v1301
    %v2727 = vunpack.c.l.b16 %v1302
    %v2728 = vunpack.c.h.b16 %v1302
    %v2729 = vunpack.c.l.b16 %v1303
    %v2730 = vunpack.c.h.b16 %v1303
    %v2731 = vunpack.c.l.b16 %v1304
    %v2732 = vunpack.c.h.b16 %v1304
    %v2733 = vunpack.c.l.b16 %v1305
    %v2734 = vunpack.c.h.b16 %v1305
    %v2735 = vunpack.c.l.b16 %v1306
    %v2736 = vunpack.c.h.b16 %v1306
    %v2737 = vunpack.c.l.b16 %v1307
    %v2738 = vunpack.c.h.b16 %v1307
    %v2739 = vunpack.c.l.b16 %v1308
    %v2740 = vunpack.c.h.b16 %v1308
    %v2741 = vunpack.c.l.b16 %v1309
    %v2742 = vunpack.c.h.b16 %v1309
    %v2743 = vunpack.c.l.b16 %v1310
    %v2744 = vunpack.c.h.b16 %v1310
    %v2745 = vunpack.c.l.b16 %v1311
    %v2746 = vunpack.c.h.b16 %v1311
    %v2747 = vunpack.c.l.b16 %v1312
    %v2748 = vunpack.c.h.b16 %v1312
    %v2749 = vunpack.c.l.b16 %v1313
    %v2750 = vunpack.c.h.b16 %v1313
    %v2751 = vunpack.c.l.b16 %v1314
    %v2752 = vunpack.c.h.b16 %v1314
    %v2753 = vunpack.c.l.b16 %v1315
    %v2754 = vunpack.c.h.b16 %v1315
    %v2755 = vunpack.c.l.b16 %v1316
    %v2756 = vunpack.c.h.b16 %v1316
    %v2757 = vunpack.c.l.b16 %v1317
    %v2758 = vunpack.c.h.b16 %v1317
    %v2759 = vunpack.c.l.b16 %v1318
    %v2760 = vunpack.c.h.b16 %v1318
    %v2761 = vunpack.c.l.b16 %v1319
    %v2762 = vunpack.c.h.b16 %v1319
    %v2763 = vunpack.c.l.b16 %v1320
    %v2764 = vunpack.c.h.b16 %v1320
    %v2765 = vunpack.c.l.b16 %v1321
    %v2766 = vunpack.c.h.b16 %v1321
    %v2767 = vunpack.c.l.b16 %v1322
    %v2768 = vunpack.c.h.b16 %v1322
    %v2769 = vunpack.c.l.b16 %v1323
    %v2770 = vunpack.c.h.b16 %v1323
    %v2771 = vunpack.c.l.b16 %v1324
    %v2772 = vunpack.c.h.b16 %v1324
    %v2773 = vunpack.c.l.b16 %v1325
    %v2774 = vunpack.c.h.b16 %v1325
    %v2775 = vunpack.c.l.b16 %v1326
    %v2776 = vunpack.c.h.b16 %v1326
    %v2777 = vunpack.c.l.b16 %v1327
    %v2778 = vunpack.c.h.b16 %v1327
    %v2779 = vunpack.c.l.b16 %v1328
    %v2780 = vunpack.c.h.b16 %v1328
    %v2781 = vunpack.c.l.b16 %v1329
    %v2782 = vunpack.c.h.b16 %v1329
    %v2783 = vunpack.c.l.b16 %v1330
    %v2784 = vunpack.c.h.b16 %v1330
    %v2785 = vunpack.c.l.b16 %v1331
    %v2786 = vunpack.c.h.b16 %v1331
    %v2787 = vunpack.c.l.b16 %v1332
    %v2788 = vunpack.c.h.b16 %v1332
    %v2789 = vunpack.c.l.b16 %v1333
    %v2790 = vunpack.c.h.b16 %v1333
    %v2791 = vunpack.c.l.b16 %v1334
    %v2792 = vunpack.c.h.b16 %v1334
    %v2793 = vunpack.c.l.b16 %v1335
    %v2794 = vunpack.c.h.b16 %v1335
    %v2795 = vunpack.c.l.b16 %v1336
    %v2796 = vunpack.c.h.b16 %v1336
    %v2797 = vunpack.c.l.b16 %v1337
    %v2798 = vunpack.c.h.b16 %v1337
    %v2799 = vunpack.c.l.b16 %v1338
    %v2800 = vunpack.c.h.b16 %v1338
    %v2801 = vunpack.c.l.b16 %v1339
    %v2802 = vunpack.c.h.b16 %v1339
    %v2803 = vunpack.c.l.b16 %v1340
    %v2804 = vunpack.c.h.b16 %v1340
    %v2805 = vunpack.c.l.b16 %v1341
    %v2806 = vunpack.c.h.b16 %v1341
    %v2807 = vunpack.c.l.b16 %v1342
    %v2808 = vunpack.c.h.b16 %v1342
    %v2809 = vunpack.c.l.b16 %v1343
    %v2810 = vunpack.c.h.b16 %v1343
    %v2811 = vunpack.c.l.b16 %v1344
    %v2812 = vunpack.c.h.b16 %v1344
    %v2813 = vunpack.c.l.b16 %v1345
    %v2814 = vunpack.c.h.b16 %v1345
    %v2815 = vunpack.c.l.b16 %v1346
    %v2816 = vunpack.c.h.b16 %v1346
    %v2817 = vunpack.c.l.b16 %v1347
    %v2818 = vunpack.c.h.b16 %v1347
    %v2819 = vunpack.c.l.b16 %v1348
    %v2820 = vunpack.c.h.b16 %v1348
    %v2821 = vunpack.c.l.b16 %v1349
    %v2822 = vunpack.c.h.b16 %v1349
    %v2823 = vunpack.c.l.b16 %v1350
    %v2824 = vunpack.c.h.b16 %v1350
    %v2825 = vunpack.c.l.b16 %v1351
    %v2826 = vunpack.c.h.b16 %v1351
    %v2827 = vunpack.c.l.b16 %v1352
    %v2828 = vunpack.c.h.b16 %v1352
    %v2829 = vunpack.c.l.b16 %v1353
    %v2830 = vunpack.c.h.b16 %v1353
    %v2831 = vunpack.c.l.b16 %v1354
    %v2832 = vunpack.c.h.b16 %v1354
    %v2833 = vunpack.c.l.b16 %v1355
    %v2834 = vunpack.c.h.b16 %v1355
    %v2835 = vunpack.c.l.b16 %v1356
    %v2836 = vunpack.c.h.b16 %v1356
    %v2837 = vunpack.c.l.b16 %v1357
    %v2838 = vunpack.c.h.b16 %v1357
    %v2839 = vunpack.c.l.b16 %v1358
    %v2840 = vunpack.c.h.b16 %v1358
    %v2841 = vunpack.c.l.b16 %v1359
    %v2842 = vunpack.c.h.b16 %v1359
    %v2843 = vunpack.c.l.b16 %v1360
    %v2844 = vunpack.c.h.b16 %v1360
    %v2845 = vunpack.c.l.b16 %v1361
    %v2846 = vunpack.c.h.b16 %v1361
    %v2847 = vunpack.c.l.b16 %v1362
    %v2848 = vunpack.c.h.b16 %v1362
    %v2849 = vunpack.c.l.b16 %v1363
    %v2850 = vunpack.c.h.b16 %v1363
    %v2851 = vunpack.c.l.b16 %v1364
    %v2852 = vunpack.c.h.b16 %v1364
    %v2853 = vunpack.c.l.b16 %v1365
    %v2854 = vunpack.c.h.b16 %v1365
    %v2855 = vunpack.c.l.b16 %v1366
    %v2856 = vunpack.c.h.b16 %v1366
    %v2857 = vunpack.c.l.b16 %v1367
    %v2858 = vunpack.c.h.b16 %v1367
    %v2859 = vunpack.c.l.b16 %v1368
    %v2860 = vunpack.c.h.b16 %v1368
    %v2861 = vunpack.c.l.b16 %v1369
    %v2862 = vunpack.c.h.b16 %v1369
    %v2863 = vunpack.c.l.b16 %v1370
    %v2864 = vunpack.c.h.b16 %v1370
    %v2865 = vunpack.c.l.b16 %v1371
    %v2866 = vunpack.c.h.b16 %v1371
    %v2867 = vunpack.c.l.b16 %v1372
    %v2868 = vunpack.c.h.b16 %v1372
    %v2869 = vunpack.c.l.b16 %v1373
    %v2870 = vunpack.c.h.b16 %v1373
    %v2871 = vunpack.c.l.b16 %v1374
    %v2872 = vunpack.c.h.b16 %v1374
    %v2873 = vunpack.c.l.b16 %v1375
    %v2874 = vunpack.c.h.b16 %v1375
    %v2875 = vunpack.c.l.b16 %v1376
    %v2876 = vunpack.c.h.b16 %v1376
    %v2877 = vunpack.c.l.b16 %v1377
    %v2878 = vunpack.c.h.b16 %v1377
    %v2879 = vunpack.c.l.b16 %v1378
    %v2880 = vunpack.c.h.b16 %v1378
    %v2881 = vunpack.c.l.b16 %v1379
    %v2882 = vunpack.c.h.b16 %v1379
    %v2883 = vunpack.c.l.b16 %v1380
    %v2884 = vunpack.c.h.b16 %v1380
    %v2885 = vunpack.c.l.b16 %v1381
    %v2886 = vunpack.c.h.b16 %v1381
    %v2887 = vunpack.c.l.b16 %v1382
    %v2888 = vunpack.c.h.b16 %v1382
    %v2889 = vunpack.c.l.b16 %v1383
    %v2890 = vunpack.c.h.b16 %v1383
    %v2891 = vunpack.c.l.b16 %v1384
    %v2892 = vunpack.c.h.b16 %v1384
    %v2893 = vunpack.c.l.b16 %v1385
    %v2894 = vunpack.c.h.b16 %v1385
    %v2895 = vunpack.c.l.b16 %v1386
    %v2896 = vunpack.c.h.b16 %v1386
    %v2897 = vunpack.c.l.b16 %v1387
    %v2898 = vunpack.c.h.b16 %v1387
    %v2899 = vunpack.c.l.b16 %v1388
    %v2900 = vunpack.c.h.b16 %v1388
    %v2901 = vunpack.c.l.b16 %v1389
    %v2902 = vunpack.c.h.b16 %v1389
    %v2903 = vunpack.c.l.b16 %v1390
    %v2904 = vunpack.c.h.b16 %v1390
    %v2905 = vunpack.c.l.b16 %v1391
    %v2906 = vunpack.c.h.b16 %v1391
    %v2907 = vunpack.c.l.b16 %v1392
    %v2908 = vunpack.c.h.b16 %v1392
    %v2909 = vunpack.c.l.b16 %v1393
    %v2910 = vunpack.c.h.b16 %v1393
    %v2911 = vunpack.c.l.b16 %v1394
    %v2912 = vunpack.c.h.b16 %v1394
    %v2913 = vunpack.c.l.b16 %v1395
    %v2914 = vunpack.c.h.b16 %v1395
    %v2915 = vunpack.c.l.b16 %v1396
    %v2916 = vunpack.c.h.b16 %v1396
    %v2917 = vunpack.c.l.b16 %v1397
    %v2918 = vunpack.c.h.b16 %v1397
    %v2919 = vunpack.c.l.b16 %v1398
    %v2920 = vunpack.c.h.b16 %v1398
    %v2921 = vunpack.c.l.b16 %v1399
    %v2922 = vunpack.c.h.b16 %v1399
    %v2923 = vunpack.c.l.b16 %v1400
    %v2924 = vunpack.c.h.b16 %v1400
    %v2925 = vunpack.c.l.b16 %v1401
    %v2926 = vunpack.c.h.b16 %v1401
    %v2927 = vunpack.c.l.b16 %v1402
    %v2928 = vunpack.c.h.b16 %v1402
    %v2929 = vunpack.c.l.b16 %v1403
    %v2930 = vunpack.c.h.b16 %v1403
    %v2931 = vunpack.c.l.b16 %v1404
    %v2932 = vunpack.c.h.b16 %v1404
    %v2933 = vunpack.c.l.b16 %v1405
    %v2934 = vunpack.c.h.b16 %v1405
    %v2935 = vunpack.c.l.b16 %v1406
    %v2936 = vunpack.c.h.b16 %v1406
    %v2937 = vunpack.c.l.b16 %v1407
    %v2938 = vunpack.c.h.b16 %v1407
    %v2939 = vunpack.c.l.b16 %v1408
    %v2940 = vunpack.c.h.b16 %v1408
    %v2941 = vunpack.c.l.b16 %v1409
    %v2942 = vunpack.c.h.b16 %v1409
    %v2943 = vunpack.c.l.b16 %v1410
    %v2944 = vunpack.c.h.b16 %v1410
    %v2945 = vunpack.c.l.b16 %v1411
    %v2946 = vunpack.c.h.b16 %v1411
    %v2947 = vunpack.c.l.b16 %v1412
    %v2948 = vunpack.c.h.b16 %v1412
    %v2949 = vunpack.c.l.b16 %v1413
    %v2950 = vunpack.c.h.b16 %v1413
    %v2951 = vunpack.c.l.b16 %v1414
    %v2952 = vunpack.c.h.b16 %v1414
    %v2953 = vunpack.c.l.b16 %v1415
    %v2954 = vunpack.c.h.b16 %v1415
    %v2955 = vunpack.c.l.b16 %v1416
    %v2956 = vunpack.c.h.b16 %v1416
    %v2957 = vunpack.c.l.b16 %v1417
    %v2958 = vunpack.c.h.b16 %v1417
    %v2959 = vunpack.c.l.b16 %v1418
    %v2960 = vunpack.c.h.b16 %v1418
    %v2961 = vunpack.c.l.b16 %v1419
    %v2962 = vunpack.c.h.b16 %v1419
    %v2963 = vunpack.c.l.b16 %v1420
    %v2964 = vunpack.c.h.b16 %v1420
    %v2965 = vunpack.c.l.b16 %v1421
    %v2966 = vunpack.c.h.b16 %v1421
    %v2967 = vunpack.c.l.b16 %v1422
    %v2968 = vunpack.c.h.b16 %v1422
    %v2969 = vunpack.c.l.b16 %v1423
    %v2970 = vunpack.c.h.b16 %v1423
    %v2971 = vunpack.c.l.b16 %v1424
    %v2972 = vunpack.c.h.b16 %v1424
    %v2973 = vunpack.c.l.b16 %v1425
    %v2974 = vunpack.c.h.b16 %v1425
    %v2975 = vunpack.c.l.b16 %v1426
    %v2976 = vunpack.c.h.b16 %v1426
    %v2977 = vunpack.c.l.b16 %v1427
    %v2978 = vunpack.c.h.b16 %v1427
    %v2979 = vunpack.c.l.b16 %v1428
    %v2980 = vunpack.c.h.b16 %v1428
    %v2981 = vunpack.c.l.b16 %v1429
    %v2982 = vunpack.c.h.b16 %v1429
    %v2983 = vunpack.c.l.b16 %v1430
    %v2984 = vunpack.c.h.b16 %v1430
    %v2985 = vunpack.c.l.b16 %v1431
    %v2986 = vunpack.c.h.b16 %v1431
    %v2987 = vunpack.c.l.b16 %v1432
    %v2988 = vunpack.c.h.b16 %v1432
    %v2989 = vunpack.c.l.b16 %v1433
    %v2990 = vunpack.c.h.b16 %v1433
    %v2991 = vunpack.c.l.b16 %v1434
    %v2992 = vunpack.c.h.b16 %v1434
    %v2993 = vunpack.c.l.b16 %v1435
    %v2994 = vunpack.c.h.b16 %v1435
    %v2995 = vunpack.c.l.b16 %v1436
    %v2996 = vunpack.c.h.b16 %v1436
    %v2997 = vunpack.c.l.b16 %v1437
    %v2998 = vunpack.c.h.b16 %v1437
    %v2999 = vunpack.c.l.b16 %v1438
    %v3000 = vunpack.c.h.b16 %v1438
    %v3001 = vunpack.c.l.b16 %v1439
    %v3002 = vunpack.c.h.b16 %v1439
    %v3003 = vunpack.c.l.b16 %v1440
    %v3004 = vunpack.c.h.b16 %v1440
    %v3005 = vunpack.c.l.b16 %v1441
    %v3006 = vunpack.c.h.b16 %v1441
    %v3007 = vunpack.c.l.b16 %v1442
    %v3008 = vunpack.c.h.b16 %v1442
    %v3009 = vunpack.c.l.b16 %v1443
    %v3010 = vunpack.c.h.b16 %v1443
    %v3011 = vunpack.c.l.b16 %v1444
    %v3012 = vunpack.c.h.b16 %v1444
    %v3013 = vunpack.c.l.b16 %v1445
    %v3014 = vunpack.c.h.b16 %v1445
    %v3015 = vunpack.c.l.b16 %v1446
    %v3016 = vunpack.c.h.b16 %v1446
    %v3017 = vunpack.c.l.b16 %v1447
    %v3018 = vunpack.c.h.b16 %v1447
    %v3019 = vunpack.c.l.b16 %v1448
    %v3020 = vunpack.c.h.b16 %v1448
    %v3021 = vunpack.c.l.b16 %v1449
    %v3022 = vunpack.c.h.b16 %v1449
    %v3023 = vunpack.c.l.b16 %v1450
    %v3024 = vunpack.c.h.b16 %v1450
    %v3025 = vunpack.c.l.b16 %v1451
    %v3026 = vunpack.c.h.b16 %v1451
    %v3027 = vunpack.c.l.b16 %v1452
    %v3028 = vunpack.c.h.b16 %v1452
    %v3029 = vunpack.c.l.b16 %v1453
    %v3030 = vunpack.c.h.b16 %v1453
    %v3031 = vunpack.c.l.b16 %v1454
    %v3032 = vunpack.c.h.b16 %v1454
    %v3033 = vpack.c.b16 %v2017, %v2009
    %v3034 = vpack.c.b16 %v2018, %v2010
    %v3035 = vpack.c.b16 %v2019, %v2011
    %v3036 = vpack.c.b16 %v2020, %v2012
    %v3037 = vpack.c.b16 %v2021, %v2013
    %v3038 = vpack.c.b16 %v2022, %v2014
    %v3039 = vpack.c.b16 %v2023, %v2015
    %v3040 = vpack.c.b16 %v2024, %v2016
    %v3041 = vpack.c.b16 %v2033, %v2025
    %v3042 = vpack.c.b16 %v2034, %v2026
    %v3043 = vpack.c.b16 %v2035, %v2027
    %v3044 = vpack.c.b16 %v2036, %v2028
    %v3045 = vpack.c.b16 %v2037, %v2029
    %v3046 = vpack.c.b16 %v2038, %v2030
    %v3047 = vpack.c.b16 %v2039, %v2031
    %v3048 = vpack.c.b16 %v2040, %v2032
    %v3049 = vpack.c.b16 %v2049, %v2041
    %v3050 = vpack.c.b16 %v2050, %v2042
    %v3051 = vpack.c.b16 %v2051, %v2043
    %v3052 = vpack.c.b16 %v2052, %v2044
    %v3053 = vpack.c.b16 %v2053, %v2045
    %v3054 = vpack.c.b16 %v2054, %v2046
    %v3055 = vpack.c.b16 %v2055, %v2047
    %v3056 = vpack.c.b16 %v2056, %v2048
    %v3057 = vpack.c.b16 %v2065, %v2057
    %v3058 = vpack.c.b16 %v2066, %v2058
    %v3059 = vpack.c.b16 %v2067, %v2059
    %v3060 = vpack.c.b16 %v2068, %v2060
    %v3061 = vpack.c.b16 %v2069, %v2061
    %v3062 = vpack.c.b16 %v2070, %v2062
    %v3063 = vpack.c.b16 %v2071, %v2063
    %v3064 = vpack.c.b16 %v2072, %v2064
    %v3065 = vpack.c.b16 %v2081, %v2073
    %v3066 = vpack.c.b16 %v2082, %v2074
    %v3067 = vpack.c.b16 %v2083, %v2075
    %v3068 = vpack.c.b16 %v2084, %v2076
    %v3069 = vpack.c.b16 %v2085, %v2077
    %v3070 = vpack.c.b16 %v2086, %v2078
    %v3071 = vpack.c.b16 %v2087, %v2079
    %v3072 = vpack.c.b16 %v2088, %v2080
    %v3073 = vpack.c.b16 %v2097, %v2089
    %v3074 = vpack.c.b16 %v2098, %v2090
    %v3075 = vpack.c.b16 %v2099, %v2091
    %v3076 = vpack.c.b16 %v2100, %v2092
    %v3077 = vpack.c.b16 %v2101, %v2093
    %v3078 = vpack.c.b16 %v2102, %v2094
    %v3079 = vpack.c.b16 %v2103, %v2095
    %v3080 = vpack.c.b16 %v2104, %v2096
    %v3081 = vpack.c.b16 %v2113, %v2105
    %v3082 = vpack.c.b16 %v2114, %v2106
    %v3083 = vpack.c.b16 %v2115, %v2107
    %v3084 = vpack.c.b16 %v2116, %v2108
    %v3085 = vpack.c.b16 %v2117, %v2109
    %v3086 = vpack.c.b16 %v2118, %v2110
    %v3087 = vpack.c.b16 %v2119, %v2111
    %v3088 = vpack.c.b16 %v2120, %v2112
    %v3089 = vpack.c.b16 %v2129, %v2121
    %v3090 = vpack.c.b16 %v2130, %v2122
    %v3091 = vpack.c.b16 %v2131, %v2123
    %v3092 = vpack.c.b16 %v2132, %v2124
    %v3093 = vpack.c.b16 %v2133, %v2125
    %v3094 = vpack.c.b16 %v2134, %v2126
    %v3095 = vpack.c.b16 %v2135, %v2127
    %v3096 = vpack.c.b16 %v2136, %v2128
    %v3097 = vpack.c.b16 %v2145, %v2137
    %v3098 = vpack.c.b16 %v2146, %v2138
    %v3099 = vpack.c.b16 %v2147, %v2139
    %v3100 = vpack.c.b16 %v2148, %v2140
    %v3101 = vpack.c.b16 %v2149, %v2141
    %v3102 = vpack.c.b16 %v2150, %v2142
    %v3103 = vpack.c.b16 %v2151, %v2143
    %v3104 = vpack.c.b16 %v2152, %v2144
    %v3105 = vpack.c.b16 %v2161, %v2153
    %v3106 = vpack.c.b16 %v2162, %v2154
    %v3107 = vpack.c.b16 %v2163, %v2155
    %v3108 = vpack.c.b16 %v2164, %v2156
    %v3109 = vpack.c.b16 %v2165, %v2157
    %v3110 = vpack.c.b16 %v2166, %v2158
    %v3111 = vpack.c.b16 %v2167, %v2159
    %v3112 = vpack.c.b16 %v2168, %v2160
    %v3113 = vpack.c.b16 %v2177, %v2169
    %v3114 = vpack.c.b16 %v2178, %v2170
    %v3115 = vpack.c.b16 %v2179, %v2171
    %v3116 = vpack.c.b16 %v2180, %v2172
    %v3117 = vpack.c.b16 %v2181, %v2173
    %v3118 = vpack.c.b16 %v2182, %v2174
    %v3119 = vpack.c.b16 %v2183, %v2175
    %v3120 = vpack.c.b16 %v2184, %v2176
    %v3121 = vpack.c.b16 %v2193, %v2185
    %v3122 = vpack.c.b16 %v2194, %v2186
    %v3123 = vpack.c.b16 %v2195, %v2187
    %v3124 = vpack.c.b16 %v2196, %v2188
    %v3125 = vpack.c.b16 %v2197, %v2189
    %v3126 = vpack.c.b16 %v2198, %v2190
    %v3127 = vpack.c.b16 %v2199, %v2191
    %v3128 = vpack.c.b16 %v2200, %v2192
    %v3129 = vpack.c.b16 %v2209, %v2201
    %v3130 = vpack.c.b16 %v2210, %v2202
    %v3131 = vpack.c.b16 %v2211, %v2203
    %v3132 = vpack.c.b16 %v2212, %v2204
    %v3133 = vpack.c.b16 %v2213, %v2205
    %v3134 = vpack.c.b16 %v2214, %v2206
    %v3135 = vpack.c.b16 %v2215, %v2207
    %v3136 = vpack.c.b16 %v2216, %v2208
    %v3137 = vpack.c.b16 %v2225, %v2217
    %v3138 = vpack.c.b16 %v2226, %v2218
    %v3139 = vpack.c.b16 %v2227, %v2219
    %v3140 = vpack.c.b16 %v2228, %v2220
    %v3141 = vpack.c.b16 %v2229, %v2221
    %v3142 = vpack.c.b16 %v2230, %v2222
    %v3143 = vpack.c.b16 %v2231, %v2223
    %v3144 = vpack.c.b16 %v2232, %v2224
    %v3145 = vpack.c.b16 %v2241, %v2233
    %v3146 = vpack.c.b16 %v2242, %v2234
    %v3147 = vpack.c.b16 %v2243, %v2235
    %v3148 = vpack.c.b16 %v2244, %v2236
    %v3149 = vpack.c.b16 %v2245, %v2237
    %v3150 = vpack.c.b16 %v2246, %v2238
    %v3151 = vpack.c.b16 %v2247, %v2239
    %v3152 = vpack.c.b16 %v2248, %v2240
    %v3153 = vpack.c.b16 %v2257, %v2249
    %v3154 = vpack.c.b16 %v2258, %v2250
    %v3155 = vpack.c.b16 %v2259, %v2251
    %v3156 = vpack.c.b16 %v2260, %v2252
    %v3157 = vpack.c.b16 %v2261, %v2253
    %v3158 = vpack.c.b16 %v2262, %v2254
    %v3159 = vpack.c.b16 %v2263, %v2255
    %v3160 = vpack.c.b16 %v2264, %v2256
    %v3161 = vpack.c.b16 %v2273, %v2265
    %v3162 = vpack.c.b16 %v2274, %v2266
    %v3163 = vpack.c.b16 %v2275, %v2267
    %v3164 = vpack.c.b16 %v2276, %v2268
    %v3165 = vpack.c.b16 %v2277, %v2269
    %v3166 = vpack.c.b16 %v2278, %v2270
    %v3167 = vpack.c.b16 %v2279, %v2271
    %v3168 = vpack.c.b16 %v2280, %v2272
    %v3169 = vpack.c.b16 %v2289, %v2281
    %v3170 = vpack.c.b16 %v2290, %v2282
    %v3171 = vpack.c.b16 %v2291, %v2283
    %v3172 = vpack.c.b16 %v2292, %v2284
    %v3173 = vpack.c.b16 %v2293, %v2285
    %v3174 = vpack.c.b16 %v2294, %v2286
    %v3175 = vpack.c.b16 %v2295, %v2287
    %v3176 = vpack.c.b16 %v2296, %v2288
    %v3177 = vpack.c.b16 %v2305, %v2297
    %v3178 = vpack.c.b16 %v2306, %v2298
    %v3179 = vpack.c.b16 %v2307, %v2299
    %v3180 = vpack.c.b16 %v2308, %v2300
    %v3181 = vpack.c.b16 %v2309, %v2301
    %v3182 = vpack.c.b16 %v2310, %v2302
    %v3183 = vpack.c.b16 %v2311, %v2303
    %v3184 = vpack.c.b16 %v2312, %v2304
    %v3185 = vpack.c.b16 %v2321, %v2313
    %v3186 = vpack.c.b16 %v2322, %v2314
    %v3187 = vpack.c.b16 %v2323, %v2315
    %v3188 = vpack.c.b16 %v2324, %v2316
    %v3189 = vpack.c.b16 %v2325, %v2317
    %v3190 = vpack.c.b16 %v2326, %v2318
    %v3191 = vpack.c.b16 %v2327, %v2319
    %v3192 = vpack.c.b16 %v2328, %v2320
    %v3193 = vpack.c.b16 %v2337, %v2329
    %v3194 = vpack.c.b16 %v2338, %v2330
    %v3195 = vpack.c.b16 %v2339, %v2331
    %v3196 = vpack.c.b16 %v2340, %v2332
    %v3197 = vpack.c.b16 %v2341, %v2333
    %v3198 = vpack.c.b16 %v2342, %v2334
    %v3199 = vpack.c.b16 %v2343, %v2335
    %v3200 = vpack.c.b16 %v2344, %v2336
    %v3201 = vpack.c.b16 %v2353, %v2345
    %v3202 = vpack.c.b16 %v2354, %v2346
    %v3203 = vpack.c.b16 %v2355, %v2347
    %v3204 = vpack.c.b16 %v2356, %v2348
    %v3205 = vpack.c.b16 %v2357, %v2349
    %v3206 = vpack.c.b16 %v2358, %v2350
    %v3207 = vpack.c.b16 %v2359, %v2351
    %v3208 = vpack.c.b16 %v2360, %v2352
    %v3209 = vpack.c.b16 %v2369, %v2361
    %v3210 = vpack.c.b16 %v2370, %v2362
    %v3211 = vpack.c.b16 %v2371, %v2363
    %v3212 = vpack.c.b16 %v2372, %v2364
    %v3213 = vpack.c.b16 %v2373, %v2365
    %v3214 = vpack.c.b16 %v2374, %v2366
    %v3215 = vpack.c.b16 %v2375, %v2367
    %v3216 = vpack.c.b16 %v2376, %v2368
    %v3217 = vpack.c.b16 %v2385, %v2377
    %v3218 = vpack.c.b16 %v2386, %v2378
    %v3219 = vpack.c.b16 %v2387, %v2379
    %v3220 = vpack.c.b16 %v2388, %v2380
    %v3221 = vpack.c.b16 %v2389, %v2381
    %v3222 = vpack.c.b16 %v2390, %v2382
    %v3223 = vpack.c.b16 %v2391, %v2383
    %v3224 = vpack.c.b16 %v2392, %v2384
    %v3225 = vpack.c.b16 %v2401, %v2393
    %v3226 = vpack.c.b16 %v2402, %v2394
    %v3227 = vpack.c.b16 %v2403, %v2395
    %v3228 = vpack.c.b16 %v2404, %v2396
    %v3229 = vpack.c.b16 %v2405, %v2397
    %v3230 = vpack.c.b16 %v2406, %v2398
    %v3231 = vpack.c.b16 %v2407, %v2399
    %v3232 = vpack.c.b16 %v2408, %v2400
    %v3233 = vpack.c.b16 %v2417, %v2409
    %v3234 = vpack.c.b16 %v2418, %v2410
    %v3235 = vpack.c.b16 %v2419, %v2411
    %v3236 = vpack.c.b16 %v2420, %v2412
    %v3237 = vpack.c.b16 %v2421, %v2413
    %v3238 = vpack.c.b16 %v2422, %v2414
    %v3239 = vpack.c.b16 %v2423, %v2415
    %v3240 = vpack.c.b16 %v2424, %v2416
    %v3241 = vpack.c.b16 %v2433, %v2425
    %v3242 = vpack.c.b16 %v2434, %v2426
    %v3243 = vpack.c.b16 %v2435, %v2427
    %v3244 = vpack.c.b16 %v2436, %v2428
    %v3245 = vpack.c.b16 %v2437, %v2429
    %v3246 = vpack.c.b16 %v2438, %v2430
    %v3247 = vpack.c.b16 %v2439, %v2431
    %v3248 = vpack.c.b16 %v2440, %v2432
    %v3249 = vpack.c.b16 %v2449, %v2441
    %v3250 = vpack.c.b16 %v2450, %v2442
    %v3251 = vpack.c.b16 %v2451, %v2443
    %v3252 = vpack.c.b16 %v2452, %v2444
    %v3253 = vpack.c.b16 %v2453, %v2445
    %v3254 = vpack.c.b16 %v2454, %v2446
    %v3255 = vpack.c.b16 %v2455, %v2447
    %v3256 = vpack.c.b16 %v2456, %v2448
    %v3257 = vpack.c.b16 %v2465, %v2457
    %v3258 = vpack.c.b16 %v2466, %v2458
    %v3259 = vpack.c.b16 %v2467, %v2459
    %v3260 = vpack.c.b16 %v2468, %v2460
    %v3261 = vpack.c.b16 %v2469, %v2461
    %v3262 = vpack.c.b16 %v2470, %v2462
    %v3263 = vpack.c.b16 %v2471, %v2463
    %v3264 = vpack.c.b16 %v2472, %v2464
    %v3265 = vpack.c.b16 %v2481, %v2473
    %v3266 = vpack.c.b16 %v2482, %v2474
    %v3267 = vpack.c.b16 %v2483, %v2475
    %v3268 = vpack.c.b16 %v2484, %v2476
    %v3269 = vpack.c.b16 %v2485, %v2477
    %v3270 = vpack.c.b16 %v2486, %v2478
    %v3271 = vpack.c.b16 %v2487, %v2479
    %v3272 = vpack.c.b16 %v2488, %v2480
    %v3273 = vpack.c.b16 %v2497, %v2489
    %v3274 = vpack.c.b16 %v2498, %v2490
    %v3275 = vpack.c.b16 %v2499, %v2491
    %v3276 = vpack.c.b16 %v2500, %v2492
    %v3277 = vpack.c.b16 %v2501, %v2493
    %v3278 = vpack.c.b16 %v2502, %v2494
    %v3279 = vpack.c.b16 %v2503, %v2495
    %v3280 = vpack.c.b16 %v2504, %v2496
    %v3281 = vpack.c.b16 %v2513, %v2505
    %v3282 = vpack.c.b16 %v2514, %v2506
    %v3283 = vpack.c.b16 %v2515, %v2507
    %v3284 = vpack.c.b16 %v2516, %v2508
    %v3285 = vpack.c.b16 %v2517, %v2509
    %v3286 = vpack.c.b16 %v2518, %v2510
    %v3287 = vpack.c.b16 %v2519, %v2511
    %v3288 = vpack.c.b16 %v2520, %v2512
    %v3289 = vpack.c.b16 %v2529, %v2521
    %v3290 = vpack.c.b16 %v2530, %v2522
    %v3291 = vpack.c.b16 %v2531, %v2523
    %v3292 = vpack.c.b16 %v2532, %v2524
    %v3293 = vpack.c.b16 %v2533, %v2525
    %v3294 = vpack.c.b16 %v2534, %v2526
    %v3295 = vpack.c.b16 %v2535, %v2527
    %v3296 = vpack.c.b16 %v2536, %v2528
    %v3297 = vpack.c.b16 %v2545, %v2537
    %v3298 = vpack.c.b16 %v2546, %v2538
    %v3299 = vpack.c.b16 %v2547, %v2539
    %v3300 = vpack.c.b16 %v2548, %v2540
    %v3301 = vpack.c.b16 %v2549, %v2541
    %v3302 = vpack.c.b16 %v2550, %v2542
    %v3303 = vpack.c.b16 %v2551, %v2543
    %v3304 = vpack.c.b16 %v2552, %v2544
    %v3305 = vpack.c.b16 %v2561, %v2553
    %v3306 = vpack.c.b16 %v2562, %v2554
    %v3307 = vpack.c.b16 %v2563, %v2555
    %v3308 = vpack.c.b16 %v2564, %v2556
    %v3309 = vpack.c.b16 %v2565, %v2557
    %v3310 = vpack.c.b16 %v2566, %v2558
    %v3311 = vpack.c.b16 %v2567, %v2559
    %v3312 = vpack.c.b16 %v2568, %v2560
    %v3313 = vpack.c.b16 %v2577, %v2569
    %v3314 = vpack.c.b16 %v2578, %v2570
    %v3315 = vpack.c.b16 %v2579, %v2571
    %v3316 = vpack.c.b16 %v2580, %v2572
    %v3317 = vpack.c.b16 %v2581, %v2573
    %v3318 = vpack.c.b16 %v2582, %v2574
    %v3319 = vpack.c.b16 %v2583, %v2575
    %v3320 = vpack.c.b16 %v2584, %v2576
    %v3321 = vpack.c.b16 %v2593, %v2585
    %v3322 = vpack.c.b16 %v2594, %v2586
    %v3323 = vpack.c.b16 %v2595, %v2587
    %v3324 = vpack.c.b16 %v2596, %v2588
    %v3325 = vpack.c.b16 %v2597, %v2589
    %v3326 = vpack.c.b16 %v2598, %v2590
    %v3327 = vpack.c.b16 %v2599, %v2591
    %v3328 = vpack.c.b16 %v2600, %v2592
    %v3329 = vpack.c.b16 %v2609, %v2601
    %v3330 = vpack.c.b16 %v2610, %v2602
    %v3331 = vpack.c.b16 %v2611, %v2603
    %v3332 = vpack.c.b16 %v2612, %v2604
    %v3333 = vpack.c.b16 %v2613, %v2605
    %v3334 = vpack.c.b16 %v2614, %v2606
    %v3335 = vpack.c.b16 %v2615, %v2607
    %v3336 = vpack.c.b16 %v2616, %v2608
    %v3337 = vpack.c.b16 %v2625, %v2617
    %v3338 = vpack.c.b16 %v2626, %v2618
    %v3339 = vpack.c.b16 %v2627, %v2619
    %v3340 = vpack.c.b16 %v2628, %v2620
    %v3341 = vpack.c.b16 %v2629, %v2621
    %v3342 = vpack.c.b16 %v2630, %v2622
    %v3343 = vpack.c.b16 %v2631, %v2623
    %v3344 = vpack.c.b16 %v2632, %v2624
    %v3345 = vpack.c.b16 %v2641, %v2633
    %v3346 = vpack.c.b16 %v2642, %v2634
    %v3347 = vpack.c.b16 %v2643, %v2635
    %v3348 = vpack.c.b16 %v2644, %v2636
    %v3349 = vpack.c.b16 %v2645, %v2637
    %v3350 = vpack.c.b16 %v2646, %v2638
    %v3351 = vpack.c.b16 %v2647, %v2639
    %v3352 = vpack.c.b16 %v2648, %v2640
    %v3353 = vpack.c.b16 %v2657, %v2649
    %v3354 = vpack.c.b16 %v2658, %v2650
    %v3355 = vpack.c.b16 %v2659, %v2651
    %v3356 = vpack.c.b16 %v2660, %v2652
    %v3357 = vpack.c.b16 %v2661, %v2653
    %v3358 = vpack.c.b16 %v2662, %v2654
    %v3359 = vpack.c.b16 %v2663, %v2655
    %v3360 = vpack.c.b16 %v2664, %v2656
    %v3361 = vpack.c.b16 %v2673, %v2665
    %v3362 = vpack.c.b16 %v2674, %v2666
    %v3363 = vpack.c.b16 %v2675, %v2667
    %v3364 = vpack.c.b16 %v2676, %v2668
    %v3365 = vpack.c.b16 %v2677, %v2669
    %v3366 = vpack.c.b16 %v2678, %v2670
    %v3367 = vpack.c.b16 %v2679, %v2671
    %v3368 = vpack.c.b16 %v2680, %v2672
    %v3369 = vpack.c.b16 %v2689, %v2681
    %v3370 = vpack.c.b16 %v2690, %v2682
    %v3371 = vpack.c.b16 %v2691, %v2683
    %v3372 = vpack.c.b16 %v2692, %v2684
    %v3373 = vpack.c.b16 %v2693, %v2685
    %v3374 = vpack.c.b16 %v2694, %v2686
    %v3375 = vpack.c.b16 %v2695, %v2687
    %v3376 = vpack.c.b16 %v2696, %v2688
    %v3377 = vpack.c.b16 %v2705, %v2697
    %v3378 = vpack.c.b16 %v2706, %v2698
    %v3379 = vpack.c.b16 %v2707, %v2699
    %v3380 = vpack.c.b16 %v2708, %v2700
    %v3381 = vpack.c.b16 %v2709, %v2701
    %v3382 = vpack.c.b16 %v2710, %v2702
    %v3383 = vpack.c.b16 %v2711, %v2703
    %v3384 = vpack.c.b16 %v2712, %v2704
    %v3385 = vpack.c.b16 %v2721, %v2713
    %v3386 = vpack.c.b16 %v2722, %v2714
    %v3387 = vpack.c.b16 %v2723, %v2715
    %v3388 = vpack.c.b16 %v2724, %v2716
    %v3389 = vpack.c.b16 %v2725, %v2717
    %v3390 = vpack.c.b16 %v2726, %v2718
    %v3391 = vpack.c.b16 %v2727, %v2719
    %v3392 = vpack.c.b16 %v2728, %v2720
    %v3393 = vpack.c.b16 %v2737, %v2729
    %v3394 = vpack.c.b16 %v2738, %v2730
    %v3395 = vpack.c.b16 %v2739, %v2731
    %v3396 = vpack.c.b16 %v2740, %v2732
    %v3397 = vpack.c.b16 %v2741, %v2733
    %v3398 = vpack.c.b16 %v2742, %v2734
    %v3399 = vpack.c.b16 %v2743, %v2735
    %v3400 = vpack.c.b16 %v2744, %v2736
    %v3401 = vpack.c.b16 %v2753, %v2745
    %v3402 = vpack.c.b16 %v2754, %v2746
    %v3403 = vpack.c.b16 %v2755, %v2747
    %v3404 = vpack.c.b16 %v2756, %v2748
    %v3405 = vpack.c.b16 %v2757, %v2749
    %v3406 = vpack.c.b16 %v2758, %v2750
    %v3407 = vpack.c.b16 %v2759, %v2751
    %v3408 = vpack.c.b16 %v2760, %v2752
    %v3409 = vpack.c.b16 %v2769, %v2761
    %v3410 = vpack.c.b16 %v2770, %v2762
    %v3411 = vpack.c.b16 %v2771, %v2763
    %v3412 = vpack.c.b16 %v2772, %v2764
    %v3413 = vpack.c.b16 %v2773, %v2765
    %v3414 = vpack.c.b16 %v2774, %v2766
    %v3415 = vpack.c.b16 %v2775, %v2767
    %v3416 = vpack.c.b16 %v2776, %v2768
    %v3417 = vpack.c.b16 %v2785, %v2777
    %v3418 = vpack.c.b16 %v2786, %v2778
    %v3419 = vpack.c.b16 %v2787, %v2779
    %v3420 = vpack.c.b16 %v2788, %v2780
    %v3421 = vpack.c.b16 %v2789, %v2781
    %v3422 = vpack.c.b16 %v2790, %v2782
    %v3423 = vpack.c.b16 %v2791, %v2783
    %v3424 = vpack.c.b16 %v2792, %v2784
    %v3425 = vpack.c.b16 %v2801, %v2793
    %v3426 = vpack.c.b16 %v2802, %v2794
    %v3427 = vpack.c.b16 %v2803, %v2795
    %v3428 = vpack.c.b16 %v2804, %v2796
    %v3429 = vpack.c.b16 %v2805, %v2797
    %v3430 = vpack.c.b16 %v2806, %v2798
    %v3431 = vpack.c.b16 %v2807, %v2799
    %v3432 = vpack.c.b16 %v2808, %v2800
    %v3433 = vpack.c.b16 %v2817, %v2809
    %v3434 = vpack.c.b16 %v2818, %v2810
    %v3435 = vpack.c.b16 %v2819, %v2811
    %v3436 = vpack.c.b16 %v2820, %v2812
    %v3437 = vpack.c.b16 %v2821, %v2813
    %v3438 = vpack.c.b16 %v2822, %v2814
    %v3439 = vpack.c.b16 %v2823, %v2815
    %v3440 = vpack.c.b16 %v2824, %v2816
    %v3441 = vpack.c.b16 %v2833, %v2825
    %v3442 = vpack.c.b16 %v2834, %v2826
    %v3443 = vpack.c.b16 %v2835, %v2827
    %v3444 = vpack.c.b16 %v2836, %v2828
    %v3445 = vpack.c.b16 %v2837, %v2829
    %v3446 = vpack.c.b16 %v2838, %v2830
    %v3447 = vpack.c.b16 %v2839, %v2831
    %v3448 = vpack.c.b16 %v2840, %v2832
    %v3449 = vpack.c.b16 %v2849, %v2841
    %v3450 = vpack.c.b16 %v2850, %v2842
    %v3451 = vpack.c.b16 %v2851, %v2843
    %v3452 = vpack.c.b16 %v2852, %v2844
    %v3453 = vpack.c.b16 %v2853, %v2845
    %v3454 = vpack.c.b16 %v2854, %v2846
    %v3455 = vpack.c.b16 %v2855, %v2847
    %v3456 = vpack.c.b16 %v2856, %v2848
    %v3457 = vpack.c.b16 %v2865, %v2857
    %v3458 = vpack.c.b16 %v2866, %v2858
    %v3459 = vpack.c.b16 %v2867, %v2859
    %v3460 = vpack.c.b16 %v2868, %v2860
    %v3461 = vpack.c.b16 %v2869, %v2861
    %v3462 = vpack.c.b16 %v2870, %v2862
    %v3463 = vpack.c.b16 %v2871, %v2863
    %v3464 = vpack.c.b16 %v2872, %v2864
    %v3465 = vpack.c.b16 %v2881, %v2873
    %v3466 = vpack.c.b16 %v2882, %v2874
    %v3467 = vpack.c.b16 %v2883, %v2875
    %v3468 = vpack.c.b16 %v2884, %v2876
    %v3469 = vpack.c.b16 %v2885, %v2877
    %v3470 = vpack.c.b16 %v2886, %v2878
    %v3471 = vpack.c.b16 %v2887, %v2879
    %v3472 = vpack.c.b16 %v2888, %v2880
    %v3473 = vpack.c.b16 %v2897, %v2889
    %v3474 = vpack.c.b16 %v2898, %v2890
    %v3475 = vpack.c.b16 %v2899, %v2891
    %v3476 = vpack.c.b16 %v2900, %v2892
    %v3477 = vpack.c.b16 %v2901, %v2893
    %v3478 = vpack.c.b16 %v2902, %v2894
    %v3479 = vpack.c.b16 %v2903, %v2895
    %v3480 = vpack.c.b16 %v2904, %v2896
    %v3481 = vpack.c.b16 %v2913, %v2905
    %v3482 = vpack.c.b16 %v2914, %v2906
    %v3483 = vpack.c.b16 %v2915, %v2907
    %v3484 = vpack.c.b16 %v2916, %v2908
    %v3485 = vpack.c.b16 %v2917, %v2909
    %v3486 = vpack.c.b16 %v2918, %v2910
    %v3487 = vpack.c.b16 %v2919, %v2911
    %v3488 = vpack.c.b16 %v2920, %v2912
    %v3489 = vpack.c.b16 %v2929, %v2921
    %v3490 = vpack.c.b16 %v2930, %v2922
    %v3491 = vpack.c.b16 %v2931, %v2923
    %v3492 = vpack.c.b16 %v2932, %v2924
    %v3493 = vpack.c.b16 %v2933, %v2925
    %v3494 = vpack.c.b16 %v2934, %v2926
    %v3495 = vpack.c.b16 %v2935, %v2927
    %v3496 = vpack.c.b16 %v2936, %v2928
    %v3497 = vpack.c.b16 %v2945, %v2937
    %v3498 = vpack.c.b16 %v2946, %v2938
    %v3499 = vpack.c.b16 %v2947, %v2939
    %v3500 = vpack.c.b16 %v2948, %v2940
    %v3501 = vpack.c.b16 %v2949, %v2941
    %v3502 = vpack.c.b16 %v2950, %v2942
    %v3503 = vpack.c.b16 %v2951, %v2943
    %v3504 = vpack.c.b16 %v2952, %v2944
    %v3505 = vpack.c.b16 %v2961, %v2953
    %v3506 = vpack.c.b16 %v2962, %v2954
    %v3507 = vpack.c.b16 %v2963, %v2955
    %v3508 = vpack.c.b16 %v2964, %v2956
    %v3509 = vpack.c.b16 %v2965, %v2957
    %v3510 = vpack.c.b16 %v2966, %v2958
    %v3511 = vpack.c.b16 %v2967, %v2959
    %v3512 = vpack.c.b16 %v2968, %v2960
    %v3513 = vpack.c.b16 %v2977, %v2969
    %v3514 = vpack.c.b16 %v2978, %v2970
    %v3515 = vpack.c.b16 %v2979, %v2971
    %v3516 = vpack.c.b16 %v2980, %v2972
    %v3517 = vpack.c.b16 %v2981, %v2973
    %v3518 = vpack.c.b16 %v2982, %v2974
    %v3519 = vpack.c.b16 %v2983, %v2975
    %v3520 = vpack.c.b16 %v2984, %v2976
    %v3521 = vpack.c.b16 %v2993, %v2985
    %v3522 = vpack.c.b16 %v2994, %v2986
    %v3523 = vpack.c.b16 %v2995, %v2987
    %v3524 = vpack.c.b16 %v2996, %v2988
    %v3525 = vpack.c.b16 %v2997, %v2989
    %v3526 = vpack.c.b16 %v2998, %v2990
    %v3527 = vpack.c.b16 %v2999, %v2991
    %v3528 = vpack.c.b16 %v3000, %v2992
    %v3529 = vpack.c.b16 %v3009, %v3001
    %v3530 = vpack.c.b16 %v3010, %v3002
    %v3531 = vpack.c.b16 %v3011, %v3003
    %v3532 = vpack.c.b16 %v3012, %v3004
    %v3533 = vpack.c.b16 %v3013, %v3005
    %v3534 = vpack.c.b16 %v3014, %v3006
    %v3535 = vpack.c.b16 %v3015, %v3007
    %v3536 = vpack.c.b16 %v3016, %v3008
    %v3537 = vpack.c.b16 %v3025, %v3017
    %v3538 = vpack.c.b16 %v3026, %v3018
    %v3539 = vpack.c.b16 %v3027, %v3019
    %v3540 = vpack.c.b16 %v3028, %v3020
    %v3541 = vpack.c.b16 %v3029, %v3021
    %v3542 = vpack.c.b16 %v3030, %v3022
    %v3543 = vpack.c.b16 %v3031, %v3023
    %v3544 = vpack.c.b16 %v3032, %v3024
    %4057 = vmatprep.subr.bf16.mxu0 %v3034
    %4058 = vmatpush1.bf16.msra.mxu0 %v3033
    %4059 = vmatprep.subr.bf16.mxu0 %v3042
    %4060 = vmatpush1.bf16.msra.mxu0 %v3041
    %4061 = vmatprep.subr.bf16.mxu0 %v3050
    %4062 = vmatpush1.bf16.msra.mxu0 %v3049
    %4063 = vmatprep.subr.bf16.mxu0 %v3058
    %4064 = vmatpush1.bf16.msra.mxu0 %v3057
    %4065 = vmatprep.subr.bf16.mxu0 %v3066
    %4066 = vmatpush1.bf16.msra.mxu0 %v3065
    %4067 = vmatprep.subr.bf16.mxu0 %v3074
    %4068 = vmatpush1.bf16.msra.mxu0 %v3073
    %4069 = vmatprep.subr.bf16.mxu0 %v3082
    %4070 = vmatpush1.bf16.msra.mxu0 %v3081
    %4071 = vmatprep.subr.bf16.mxu0 %v3090
    %4072 = vmatpush1.bf16.msra.mxu0 %v3089
    %4073 = vmatprep.subr.bf16.mxu0 %v3098
    %4074 = vmatpush1.bf16.msra.mxu0 %v3097
    %4075 = vmatprep.subr.bf16.mxu0 %v3106
    %4076 = vmatpush1.bf16.msra.mxu0 %v3105
    %4077 = vmatprep.subr.bf16.mxu0 %v3114
    %4078 = vmatpush1.bf16.msra.mxu0 %v3113
    %4079 = vmatprep.subr.bf16.mxu0 %v3122
    %4080 = vmatpush1.bf16.msra.mxu0 %v3121
    %4081 = vmatprep.subr.bf16.mxu0 %v3130
    %4082 = vmatpush1.bf16.msra.mxu0 %v3129
    %4083 = vmatprep.subr.bf16.mxu0 %v3138
    %4084 = vmatpush1.bf16.msra.mxu0 %v3137
    %4085 = vmatprep.subr.bf16.mxu0 %v3146
    %4086 = vmatpush1.bf16.msra.mxu0 %v3145
    %4087 = vmatprep.subr.bf16.mxu0 %v3154
    %4088 = vmatpush1.bf16.msra.mxu0 %v3153
    %4089 = vmatprep.mubr.bf16.mxu0 %v936
    %4090 = vmatmul.mubr.bf16.gmra.mrb[0].mxu0 %v935
    %v4091 = vpop.f32.mrb[0].mxu0
    %v4092 = vadd.f32 %v1460, %v4091
    %v4093 = vpop.f32.mrb[0].mxu0
    %v4094 = vadd.f32 %v1464, %v4093
    %v4095 = vpop.f32.mrb[0].mxu0
    %v4096 = vpop.f32.mrb[0].mxu0
    %4097 = vdwg.mxu0
    %4098 = vmatprep.subr.bf16.mxu0 %v3162
    %4099 = vmatpush1.bf16.msra.mxu0 %v3161
    %4100 = vmatprep.subr.bf16.mxu0 %v3170
    %4101 = vmatpush1.bf16.msra.mxu0 %v3169
    %4102 = vmatprep.subr.bf16.mxu0 %v3178
    %4103 = vmatpush1.bf16.msra.mxu0 %v3177
    %4104 = vmatprep.subr.bf16.mxu0 %v3186
    %4105 = vmatpush1.bf16.msra.mxu0 %v3185
    %4106 = vmatprep.subr.bf16.mxu0 %v3194
    %4107 = vmatpush1.bf16.msra.mxu0 %v3193
    %4108 = vmatprep.subr.bf16.mxu0 %v3202
    %4109 = vmatpush1.bf16.msra.mxu0 %v3201
    %4110 = vmatprep.subr.bf16.mxu0 %v3210
    %4111 = vmatpush1.bf16.msra.mxu0 %v3209
    %4112 = vmatprep.subr.bf16.mxu0 %v3218
    %4113 = vmatpush1.bf16.msra.mxu0 %v3217
    %4114 = vmatprep.subr.bf16.mxu0 %v3226
    %4115 = vmatpush1.bf16.msra.mxu0 %v3225
    %4116 = vmatprep.subr.bf16.mxu0 %v3234
    %4117 = vmatpush1.bf16.msra.mxu0 %v3233
    %4118 = vmatprep.subr.bf16.mxu0 %v3242
    %4119 = vmatpush1.bf16.msra.mxu0 %v3241
    %4120 = vmatprep.subr.bf16.mxu0 %v3250
    %4121 = vmatpush1.bf16.msra.mxu0 %v3249
    %4122 = vmatprep.subr.bf16.mxu0 %v3258
    %4123 = vmatpush1.bf16.msra.mxu0 %v3257
    %4124 = vmatprep.subr.bf16.mxu0 %v3266
    %4125 = vmatpush1.bf16.msra.mxu0 %v3265
    %4126 = vmatprep.subr.bf16.mxu0 %v3274
    %4127 = vmatpush1.bf16.msra.mxu0 %v3273
    %4128 = vmatprep.subr.bf16.mxu0 %v3282
    %4129 = vmatpush1.bf16.msra.mxu0 %v3281
    %4130 = vmatprep.mubr.bf16.mxu0 %v938
    %4131 = vmatmul.mubr.bf16.gmra.mrb[0].mxu0 %v937
    %v4132 = vpop.f32.mrb[0].mxu0
    %v4133 = vadd.f32 %v4092, %v4132
    %v4134 = vpop.f32.mrb[0].mxu0
    %v4135 = vadd.f32 %v4094, %v4134
    %v4136 = vpop.f32.mrb[0].mxu0
    %v4137 = vpop.f32.mrb[0].mxu0
    %4138 = vdwg.mxu0
    %4139 = vmatprep.subr.bf16.mxu0 %v3290
    %4140 = vmatpush1.bf16.msra.mxu0 %v3289
    %4141 = vmatprep.subr.bf16.mxu0 %v3298
    %4142 = vmatpush1.bf16.msra.mxu0 %v3297
    %4143 = vmatprep.subr.bf16.mxu0 %v3306
    %4144 = vmatpush1.bf16.msra.mxu0 %v3305
    %4145 = vmatprep.subr.bf16.mxu0 %v3314
    %4146 = vmatpush1.bf16.msra.mxu0 %v3313
    %4147 = vmatprep.subr.bf16.mxu0 %v3322
    %4148 = vmatpush1.bf16.msra.mxu0 %v3321
    %4149 = vmatprep.subr.bf16.mxu0 %v3330
    %4150 = vmatpush1.bf16.msra.mxu0 %v3329
    %4151 = vmatprep.subr.bf16.mxu0 %v3338
    %4152 = vmatpush1.bf16.msra.mxu0 %v3337
    %4153 = vmatprep.subr.bf16.mxu0 %v3346
    %4154 = vmatpush1.bf16.msra.mxu0 %v3345
    %4155 = vmatprep.subr.bf16.mxu0 %v3354
    %4156 = vmatpush1.bf16.msra.mxu0 %v3353
    %4157 = vmatprep.subr.bf16.mxu0 %v3362
    %4158 = vmatpush1.bf16.msra.mxu0 %v3361
    %4159 = vmatprep.subr.bf16.mxu0 %v3370
    %4160 = vmatpush1.bf16.msra.mxu0 %v3369
    %4161 = vmatprep.subr.bf16.mxu0 %v3378
    %4162 = vmatpush1.bf16.msra.mxu0 %v3377
    %4163 = vmatprep.subr.bf16.mxu0 %v3386
    %4164 = vmatpush1.bf16.msra.mxu0 %v3385
    %4165 = vmatprep.subr.bf16.mxu0 %v3394
    %4166 = vmatpush1.bf16.msra.mxu0 %v3393
    %4167 = vmatprep.subr.bf16.mxu0 %v3402
    %4168 = vmatpush1.bf16.msra.mxu0 %v3401
    %4169 = vmatprep.subr.bf16.mxu0 %v3410
    %4170 = vmatpush1.bf16.msra.mxu0 %v3409
    %4171 = vmatprep.mubr.bf16.mxu0 %v940
    %4172 = vmatmul.mubr.bf16.gmra.mrb[0].mxu0 %v939
    %v4173 = vpop.f32.mrb[0].mxu0
    %v4174 = vadd.f32 %v4133, %v4173
    %v4175 = vpop.f32.mrb[0].mxu0
    %v4176 = vadd.f32 %v4135, %v4175
    %v4177 = vpop.f32.mrb[0].mxu0
    %v4178 = vpop.f32.mrb[0].mxu0
    %4179 = vdwg.mxu0
    %4180 = vmatprep.subr.bf16.mxu0 %v3418
    %4181 = vmatpush1.bf16.msra.mxu0 %v3417
    %4182 = vmatprep.subr.bf16.mxu0 %v3426
    %4183 = vmatpush1.bf16.msra.mxu0 %v3425
    %4184 = vmatprep.subr.bf16.mxu0 %v3434
    %4185 = vmatpush1.bf16.msra.mxu0 %v3433
    %4186 = vmatprep.subr.bf16.mxu0 %v3442
    %4187 = vmatpush1.bf16.msra.mxu0 %v3441
    %4188 = vmatprep.subr.bf16.mxu0 %v3450
    %4189 = vmatpush1.bf16.msra.mxu0 %v3449
    %4190 = vmatprep.subr.bf16.mxu0 %v3458
    %4191 = vmatpush1.bf16.msra.mxu0 %v3457
    %4192 = vmatprep.subr.bf16.mxu0 %v3466
    %4193 = vmatpush1.bf16.msra.mxu0 %v3465
    %4194 = vmatprep.subr.bf16.mxu0 %v3474
    %4195 = vmatpush1.bf16.msra.mxu0 %v3473
    %4196 = vmatprep.subr.bf16.mxu0 %v3482
    %4197 = vmatpush1.bf16.msra.mxu0 %v3481
    %4198 = vmatprep.subr.bf16.mxu0 %v3490
    %4199 = vmatpush1.bf16.msra.mxu0 %v3489
    %4200 = vmatprep.subr.bf16.mxu0 %v3498
    %4201 = vmatpush1.bf16.msra.mxu0 %v3497
    %4202 = vmatprep.subr.bf16.mxu0 %v3506
    %4203 = vmatpush1.bf16.msra.mxu0 %v3505
    %4204 = vmatprep.subr.bf16.mxu0 %v3514
    %4205 = vmatpush1.bf16.msra.mxu0 %v3513
    %4206 = vmatprep.subr.bf16.mxu0 %v3522
    %4207 = vmatpush1.bf16.msra.mxu0 %v3521
    %4208 = vmatprep.subr.bf16.mxu0 %v3530
    %4209 = vmatpush1.bf16.msra.mxu0 %v3529
    %4210 = vmatprep.subr.bf16.mxu0 %v3538
    %4211 = vmatpush1.bf16.msra.mxu0 %v3537
    %4212 = vmatprep.mubr.bf16.mxu0 %v942
    %4213 = vmatmul.mubr.bf16.gmra.mrb[0].mxu0 %v941
    %v4214 = vpop.f32.mrb[0].mxu0
    %v4215 = vadd.f32 %v4174, %v4214
    %v4216 = vpop.f32.mrb[0].mxu0
    %v4217 = vadd.f32 %v4176, %v4216
    %v4218 = vpop.f32.mrb[0].mxu0
    %v4219 = vpop.f32.mrb[0].mxu0
    %4220 = vdwg.mxu0
    %4221 = vmatprep.subr.bf16.mxu0 %v3036
    %4222 = vmatpush1.bf16.msra.mxu0 %v3035
    %4223 = vmatprep.subr.bf16.mxu0 %v3044
    %4224 = vmatpush1.bf16.msra.mxu0 %v3043
    %4225 = vmatprep.subr.bf16.mxu0 %v3052
    %4226 = vmatpush1.bf16.msra.mxu0 %v3051
    %4227 = vmatprep.subr.bf16.mxu0 %v3060
    %4228 = vmatpush1.bf16.msra.mxu0 %v3059
    %4229 = vmatprep.subr.bf16.mxu0 %v3068
    %4230 = vmatpush1.bf16.msra.mxu0 %v3067
    %4231 = vmatprep.subr.bf16.mxu0 %v3076
    %4232 = vmatpush1.bf16.msra.mxu0 %v3075
    %4233 = vmatprep.subr.bf16.mxu0 %v3084
    %4234 = vmatpush1.bf16.msra.mxu0 %v3083
    %4235 = vmatprep.subr.bf16.mxu0 %v3092
    %4236 = vmatpush1.bf16.msra.mxu0 %v3091
    %4237 = vmatprep.subr.bf16.mxu0 %v3100
    %4238 = vmatpush1.bf16.msra.mxu0 %v3099
    %4239 = vmatprep.subr.bf16.mxu0 %v3108
    %4240 = vmatpush1.bf16.msra.mxu0 %v3107
    %4241 = vmatprep.subr.bf16.mxu0 %v3116
    %4242 = vmatpush1.bf16.msra.mxu0 %v3115
    %4243 = vmatprep.subr.bf16.mxu0 %v3124
    %4244 = vmatpush1.bf16.msra.mxu0 %v3123
    %4245 = vmatprep.subr.bf16.mxu0 %v3132
    %4246 = vmatpush1.bf16.msra.mxu0 %v3131
    %4247 = vmatprep.subr.bf16.mxu0 %v3140
    %4248 = vmatpush1.bf16.msra.mxu0 %v3139
    %4249 = vmatprep.subr.bf16.mxu0 %v3148
    %4250 = vmatpush1.bf16.msra.mxu0 %v3147
    %4251 = vmatprep.subr.bf16.mxu0 %v3156
    %4252 = vmatpush1.bf16.msra.mxu0 %v3155
    %4253 = vmatprep.mubr.bf16.mxu0 %v936
    %4254 = vmatmul.mubr.bf16.gmra.mrb[0].mxu0 %v935
    %v4255 = vpop.f32.mrb[0].mxu0
    %v4256 = vadd.f32 %v1468, %v4255
    %v4257 = vpop.f32.mrb[0].mxu0
    %v4258 = vadd.f32 %v1472, %v4257
    %v4259 = vpop.f32.mrb[0].mxu0
    %v4260 = vpop.f32.mrb[0].mxu0
    %4261 = vdwg.mxu0
    %4262 = vmatprep.subr.bf16.mxu0 %v3164
    %4263 = vmatpush1.bf16.msra.mxu0 %v3163
    %4264 = vmatprep.subr.bf16.mxu0 %v3172
    %4265 = vmatpush1.bf16.msra.mxu0 %v3171
    %4266 = vmatprep.subr.bf16.mxu0 %v3180
    %4267 = vmatpush1.bf16.msra.mxu0 %v3179
    %4268 = vmatprep.subr.bf16.mxu0 %v3188
    %4269 = vmatpush1.bf16.msra.mxu0 %v3187
    %4270 = vmatprep.subr.bf16.mxu0 %v3196
    %4271 = vmatpush1.bf16.msra.mxu0 %v3195
    %4272 = vmatprep.subr.bf16.mxu0 %v3204
    %4273 = vmatpush1.bf16.msra.mxu0 %v3203
    %4274 = vmatprep.subr.bf16.mxu0 %v3212
    %4275 = vmatpush1.bf16.msra.mxu0 %v3211
    %4276 = vmatprep.subr.bf16.mxu0 %v3220
    %4277 = vmatpush1.bf16.msra.mxu0 %v3219
    %4278 = vmatprep.subr.bf16.mxu0 %v3228
    %4279 = vmatpush1.bf16.msra.mxu0 %v3227
    %4280 = vmatprep.subr.bf16.mxu0 %v3236
    %4281 = vmatpush1.bf16.msra.mxu0 %v3235
    %4282 = vmatprep.subr.bf16.mxu0 %v3244
    %4283 = vmatpush1.bf16.msra.mxu0 %v3243
    %4284 = vmatprep.subr.bf16.mxu0 %v3252
    %4285 = vmatpush1.bf16.msra.mxu0 %v3251
    %4286 = vmatprep.subr.bf16.mxu0 %v3260
    %4287 = vmatpush1.bf16.msra.mxu0 %v3259
    %4288 = vmatprep.subr.bf16.mxu0 %v3268
    %4289 = vmatpush1.bf16.msra.mxu0 %v3267
    %4290 = vmatprep.subr.bf16.mxu0 %v3276
    %4291 = vmatpush1.bf16.msra.mxu0 %v3275
    %4292 = vmatprep.subr.bf16.mxu0 %v3284
    %4293 = vmatpush1.bf16.msra.mxu0 %v3283
    %4294 = vmatprep.mubr.bf16.mxu0 %v938
    %4295 = vmatmul.mubr.bf16.gmra.mrb[0].mxu0 %v937
    %v4296 = vpop.f32.mrb[0].mxu0
    %v4297 = vadd.f32 %v4256, %v4296
    %v4298 = vpop.f32.mrb[0].mxu0
    %v4299 = vadd.f32 %v4258, %v4298
    %v4300 = vpop.f32.mrb[0].mxu0
    %v4301 = vpop.f32.mrb[0].mxu0
    %4302 = vdwg.mxu0
    %4303 = vmatprep.subr.bf16.mxu0 %v3292
    %4304 = vmatpush1.bf16.msra.mxu0 %v3291
    %4305 = vmatprep.subr.bf16.mxu0 %v3300
    %4306 = vmatpush1.bf16.msra.mxu0 %v3299
    %4307 = vmatprep.subr.bf16.mxu0 %v3308
    %4308 = vmatpush1.bf16.msra.mxu0 %v3307
    %4309 = vmatprep.subr.bf16.mxu0 %v3316
    %4310 = vmatpush1.bf16.msra.mxu0 %v3315
    %4311 = vmatprep.subr.bf16.mxu0 %v3324
    %4312 = vmatpush1.bf16.msra.mxu0 %v3323
    %4313 = vmatprep.subr.bf16.mxu0 %v3332
    %4314 = vmatpush1.bf16.msra.mxu0 %v3331
    %4315 = vmatprep.subr.bf16.mxu0 %v3340
    %4316 = vmatpush1.bf16.msra.mxu0 %v3339
    %4317 = vmatprep.subr.bf16.mxu0 %v3348
    %4318 = vmatpush1.bf16.msra.mxu0 %v3347
    %4319 = vmatprep.subr.bf16.mxu0 %v3356
    %4320 = vmatpush1.bf16.msra.mxu0 %v3355
    %4321 = vmatprep.subr.bf16.mxu0 %v3364
    %4322 = vmatpush1.bf16.msra.mxu0 %v3363
    %4323 = vmatprep.subr.bf16.mxu0 %v3372
    %4324 = vmatpush1.bf16.msra.mxu0 %v3371
    %4325 = vmatprep.subr.bf16.mxu0 %v3380
    %4326 = vmatpush1.bf16.msra.mxu0 %v3379
    %4327 = vmatprep.subr.bf16.mxu0 %v3388
    %4328 = vmatpush1.bf16.msra.mxu0 %v3387
    %4329 = vmatprep.subr.bf16.mxu0 %v3396
    %4330 = vmatpush1.bf16.msra.mxu0 %v3395
    %4331 = vmatprep.subr.bf16.mxu0 %v3404
    %4332 = vmatpush1.bf16.msra.mxu0 %v3403
    %4333 = vmatprep.subr.bf16.mxu0 %v3412
    %4334 = vmatpush1.bf16.msra.mxu0 %v3411
    %4335 = vmatprep.mubr.bf16.mxu0 %v940
    %4336 = vmatmul.mubr.bf16.gmra.mrb[0].mxu0 %v939
    %v4337 = vpop.f32.mrb[0].mxu0
    %v4338 = vadd.f32 %v4297, %v4337
    %v4339 = vpop.f32.mrb[0].mxu0
    %v4340 = vadd.f32 %v4299, %v4339
    %v4341 = vpop.f32.mrb[0].mxu0
    %v4342 = vpop.f32.mrb[0].mxu0
    %4343 = vdwg.mxu0
    %4344 = vmatprep.subr.bf16.mxu0 %v3420
    %4345 = vmatpush1.bf16.msra.mxu0 %v3419
    %4346 = vmatprep.subr.bf16.mxu0 %v3428
    %4347 = vmatpush1.bf16.msra.mxu0 %v3427
    %4348 = vmatprep.subr.bf16.mxu0 %v3436
    %4349 = vmatpush1.bf16.msra.mxu0 %v3435
    %4350 = vmatprep.subr.bf16.mxu0 %v3444
    %4351 = vmatpush1.bf16.msra.mxu0 %v3443
    %4352 = vmatprep.subr.bf16.mxu0 %v3452
    %4353 = vmatpush1.bf16.msra.mxu0 %v3451
    %4354 = vmatprep.subr.bf16.mxu0 %v3460
    %4355 = vmatpush1.bf16.msra.mxu0 %v3459
    %4356 = vmatprep.subr.bf16.mxu0 %v3468
    %4357 = vmatpush1.bf16.msra.mxu0 %v3467
    %4358 = vmatprep.subr.bf16.mxu0 %v3476
    %4359 = vmatpush1.bf16.msra.mxu0 %v3475
    %4360 = vmatprep.subr.bf16.mxu0 %v3484
    %4361 = vmatpush1.bf16.msra.mxu0 %v3483
    %4362 = vmatprep.subr.bf16.mxu0 %v3492
    %4363 = vmatpush1.bf16.msra.mxu0 %v3491
    %4364 = vmatprep.subr.bf16.mxu0 %v3500
    %4365 = vmatpush1.bf16.msra.mxu0 %v3499
    %4366 = vmatprep.subr.bf16.mxu0 %v3508
    %4367 = vmatpush1.bf16.msra.mxu0 %v3507
    %4368 = vmatprep.subr.bf16.mxu0 %v3516
    %4369 = vmatpush1.bf16.msra.mxu0 %v3515
    %4370 = vmatprep.subr.bf16.mxu0 %v3524
    %4371 = vmatpush1.bf16.msra.mxu0 %v3523
    %4372 = vmatprep.subr.bf16.mxu0 %v3532
    %4373 = vmatpush1.bf16.msra.mxu0 %v3531
    %4374 = vmatprep.subr.bf16.mxu0 %v3540
    %4375 = vmatpush1.bf16.msra.mxu0 %v3539
    %4376 = vmatprep.mubr.bf16.mxu0 %v942
    %4377 = vmatmul.mubr.bf16.gmra.mrb[0].mxu0 %v941
    %v4378 = vpop.f32.mrb[0].mxu0
    %v4379 = vadd.f32 %v4338, %v4378
    %v4380 = vpop.f32.mrb[0].mxu0
    %v4381 = vadd.f32 %v4340, %v4380
    %v4382 = vpop.f32.mrb[0].mxu0
    %v4383 = vpop.f32.mrb[0].mxu0
    %4384 = vdwg.mxu0
    %4385 = vmatprep.subr.bf16.mxu0 %v3038
    %4386 = vmatpush1.bf16.msra.mxu0 %v3037
    %4387 = vmatprep.subr.bf16.mxu0 %v3046
    %4388 = vmatpush1.bf16.msra.mxu0 %v3045
    %4389 = vmatprep.subr.bf16.mxu0 %v3054
    %4390 = vmatpush1.bf16.msra.mxu0 %v3053
    %4391 = vmatprep.subr.bf16.mxu0 %v3062
    %4392 = vmatpush1.bf16.msra.mxu0 %v3061
    %4393 = vmatprep.subr.bf16.mxu0 %v3070
    %4394 = vmatpush1.bf16.msra.mxu0 %v3069
    %4395 = vmatprep.subr.bf16.mxu0 %v3078
    %4396 = vmatpush1.bf16.msra.mxu0 %v3077
    %4397 = vmatprep.subr.bf16.mxu0 %v3086
    %4398 = vmatpush1.bf16.msra.mxu0 %v3085
    %4399 = vmatprep.subr.bf16.mxu0 %v3094
    %4400 = vmatpush1.bf16.msra.mxu0 %v3093
    %4401 = vmatprep.subr.bf16.mxu0 %v3102
    %4402 = vmatpush1.bf16.msra.mxu0 %v3101
    %4403 = vmatprep.subr.bf16.mxu0 %v3110
    %4404 = vmatpush1.bf16.msra.mxu0 %v3109
    %4405 = vmatprep.subr.bf16.mxu0 %v3118
    %4406 = vmatpush1.bf16.msra.mxu0 %v3117
    %4407 = vmatprep.subr.bf16.mxu0 %v3126
    %4408 = vmatpush1.bf16.msra.mxu0 %v3125
    %4409 = vmatprep.subr.bf16.mxu0 %v3134
    %4410 = vmatpush1.bf16.msra.mxu0 %v3133
    %4411 = vmatprep.subr.bf16.mxu0 %v3142
    %4412 = vmatpush1.bf16.msra.mxu0 %v3141
    %4413 = vmatprep.subr.bf16.mxu0 %v3150
    %4414 = vmatpush1.bf16.msra.mxu0 %v3149
    %4415 = vmatprep.subr.bf16.mxu0 %v3158
    %4416 = vmatpush1.bf16.msra.mxu0 %v3157
    %4417 = vmatprep.mubr.bf16.mxu0 %v936
    %4418 = vmatmul.mubr.bf16.gmra.mrb[0].mxu0 %v935
    %v4419 = vpop.f32.mrb[0].mxu0
    %v4420 = vadd.f32 %v1476, %v4419
    %v4421 = vpop.f32.mrb[0].mxu0
    %v4422 = vadd.f32 %v1480, %v4421
    %v4423 = vpop.f32.mrb[0].mxu0
    %v4424 = vpop.f32.mrb[0].mxu0
    %4425 = vdwg.mxu0
    %4426 = vmatprep.subr.bf16.mxu0 %v3166
    %4427 = vmatpush1.bf16.msra.mxu0 %v3165
    %4428 = vmatprep.subr.bf16.mxu0 %v3174
    %4429 = vmatpush1.bf16.msra.mxu0 %v3173
    %4430 = vmatprep.subr.bf16.mxu0 %v3182
    %4431 = vmatpush1.bf16.msra.mxu0 %v3181
    %4432 = vmatprep.subr.bf16.mxu0 %v3190
    %4433 = vmatpush1.bf16.msra.mxu0 %v3189
    %4434 = vmatprep.subr.bf16.mxu0 %v3198
    %4435 = vmatpush1.bf16.msra.mxu0 %v3197
    %4436 = vmatprep.subr.bf16.mxu0 %v3206
    %4437 = vmatpush1.bf16.msra.mxu0 %v3205
    %4438 = vmatprep.subr.bf16.mxu0 %v3214
    %4439 = vmatpush1.bf16.msra.mxu0 %v3213
    %4440 = vmatprep.subr.bf16.mxu0 %v3222
    %4441 = vmatpush1.bf16.msra.mxu0 %v3221
    %4442 = vmatprep.subr.bf16.mxu0 %v3230
    %4443 = vmatpush1.bf16.msra.mxu0 %v3229
    %4444 = vmatprep.subr.bf16.mxu0 %v3238
    %4445 = vmatpush1.bf16.msra.mxu0 %v3237
    %4446 = vmatprep.subr.bf16.mxu0 %v3246
    %4447 = vmatpush1.bf16.msra.mxu0 %v3245
    %4448 = vmatprep.subr.bf16.mxu0 %v3254
    %4449 = vmatpush1.bf16.msra.mxu0 %v3253
    %4450 = vmatprep.subr.bf16.mxu0 %v3262
    %4451 = vmatpush1.bf16.msra.mxu0 %v3261
    %4452 = vmatprep.subr.bf16.mxu0 %v3270
    %4453 = vmatpush1.bf16.msra.mxu0 %v3269
    %4454 = vmatprep.subr.bf16.mxu0 %v3278
    %4455 = vmatpush1.bf16.msra.mxu0 %v3277
    %4456 = vmatprep.subr.bf16.mxu0 %v3286
    %4457 = vmatpush1.bf16.msra.mxu0 %v3285
    %4458 = vmatprep.mubr.bf16.mxu0 %v938
    %4459 = vmatmul.mubr.bf16.gmra.mrb[0].mxu0 %v937
    %v4460 = vpop.f32.mrb[0].mxu0
    %v4461 = vadd.f32 %v4420, %v4460
    %v4462 = vpop.f32.mrb[0].mxu0
    %v4463 = vadd.f32 %v4422, %v4462
    %v4464 = vpop.f32.mrb[0].mxu0
    %v4465 = vpop.f32.mrb[0].mxu0
    %4466 = vdwg.mxu0
    %4467 = vmatprep.subr.bf16.mxu0 %v3294
    %4468 = vmatpush1.bf16.msra.mxu0 %v3293
    %4469 = vmatprep.subr.bf16.mxu0 %v3302
    %4470 = vmatpush1.bf16.msra.mxu0 %v3301
    %4471 = vmatprep.subr.bf16.mxu0 %v3310
    %4472 = vmatpush1.bf16.msra.mxu0 %v3309
    %4473 = vmatprep.subr.bf16.mxu0 %v3318
    %4474 = vmatpush1.bf16.msra.mxu0 %v3317
    %4475 = vmatprep.subr.bf16.mxu0 %v3326
    %4476 = vmatpush1.bf16.msra.mxu0 %v3325
    %4477 = vmatprep.subr.bf16.mxu0 %v3334
    %4478 = vmatpush1.bf16.msra.mxu0 %v3333
    %4479 = vmatprep.subr.bf16.mxu0 %v3342
    %4480 = vmatpush1.bf16.msra.mxu0 %v3341
    %4481 = vmatprep.subr.bf16.mxu0 %v3350
    %4482 = vmatpush1.bf16.msra.mxu0 %v3349
    %4483 = vmatprep.subr.bf16.mxu0 %v3358
    %4484 = vmatpush1.bf16.msra.mxu0 %v3357
    %4485 = vmatprep.subr.bf16.mxu0 %v3366
    %4486 = vmatpush1.bf16.msra.mxu0 %v3365
    %4487 = vmatprep.subr.bf16.mxu0 %v3374
    %4488 = vmatpush1.bf16.msra.mxu0 %v3373
    %4489 = vmatprep.subr.bf16.mxu0 %v3382
    %4490 = vmatpush1.bf16.msra.mxu0 %v3381
    %4491 = vmatprep.subr.bf16.mxu0 %v3390
    %4492 = vmatpush1.bf16.msra.mxu0 %v3389
    %4493 = vmatprep.subr.bf16.mxu0 %v3398
    %4494 = vmatpush1.bf16.msra.mxu0 %v3397
    %4495 = vmatprep.subr.bf16.mxu0 %v3406
    %4496 = vmatpush1.bf16.msra.mxu0 %v3405
    %4497 = vmatprep.subr.bf16.mxu0 %v3414
    %4498 = vmatpush1.bf16.msra.mxu0 %v3413
    %4499 = vmatprep.mubr.bf16.mxu0 %v940
    %4500 = vmatmul.mubr.bf16.gmra.mrb[0].mxu0 %v939
    %v4501 = vpop.f32.mrb[0].mxu0
    %v4502 = vadd.f32 %v4461, %v4501
    %v4503 = vpop.f32.mrb[0].mxu0
    %v4504 = vadd.f32 %v4463, %v4503
    %v4505 = vpop.f32.mrb[0].mxu0
    %v4506 = vpop.f32.mrb[0].mxu0
    %4507 = vdwg.mxu0
    %4508 = vmatprep.subr.bf16.mxu0 %v3422
    %4509 = vmatpush1.bf16.msra.mxu0 %v3421
    %4510 = vmatprep.subr.bf16.mxu0 %v3430
    %4511 = vmatpush1.bf16.msra.mxu0 %v3429
    %4512 = vmatprep.subr.bf16.mxu0 %v3438
    %4513 = vmatpush1.bf16.msra.mxu0 %v3437
    %4514 = vmatprep.subr.bf16.mxu0 %v3446
    %4515 = vmatpush1.bf16.msra.mxu0 %v3445
    %4516 = vmatprep.subr.bf16.mxu0 %v3454
    %4517 = vmatpush1.bf16.msra.mxu0 %v3453
    %4518 = vmatprep.subr.bf16.mxu0 %v3462
    %4519 = vmatpush1.bf16.msra.mxu0 %v3461
    %4520 = vmatprep.subr.bf16.mxu0 %v3470
    %4521 = vmatpush1.bf16.msra.mxu0 %v3469
    %4522 = vmatprep.subr.bf16.mxu0 %v3478
    %4523 = vmatpush1.bf16.msra.mxu0 %v3477
    %4524 = vmatprep.subr.bf16.mxu0 %v3486
    %4525 = vmatpush1.bf16.msra.mxu0 %v3485
    %4526 = vmatprep.subr.bf16.mxu0 %v3494
    %4527 = vmatpush1.bf16.msra.mxu0 %v3493
    %4528 = vmatprep.subr.bf16.mxu0 %v3502
    %4529 = vmatpush1.bf16.msra.mxu0 %v3501
    %4530 = vmatprep.subr.bf16.mxu0 %v3510
    %4531 = vmatpush1.bf16.msra.mxu0 %v3509
    %4532 = vmatprep.subr.bf16.mxu0 %v3518
    %4533 = vmatpush1.bf16.msra.mxu0 %v3517
    %4534 = vmatprep.subr.bf16.mxu0 %v3526
    %4535 = vmatpush1.bf16.msra.mxu0 %v3525
    %4536 = vmatprep.subr.bf16.mxu0 %v3534
    %4537 = vmatpush1.bf16.msra.mxu0 %v3533
    %4538 = vmatprep.subr.bf16.mxu0 %v3542
    %4539 = vmatpush1.bf16.msra.mxu0 %v3541
    %4540 = vmatprep.mubr.bf16.mxu0 %v942
    %4541 = vmatmul.mubr.bf16.gmra.mrb[0].mxu0 %v941
    %v4542 = vpop.f32.mrb[0].mxu0
    %v4543 = vadd.f32 %v4502, %v4542
    %v4544 = vpop.f32.mrb[0].mxu0
    %v4545 = vadd.f32 %v4504, %v4544
    %v4546 = vpop.f32.mrb[0].mxu0
    %v4547 = vpop.f32.mrb[0].mxu0
    %4548 = vdwg.mxu0
    %4549 = vmatprep.subr.bf16.mxu0 %v3040
    %4550 = vmatpush1.bf16.msra.mxu0 %v3039
    %4551 = vmatprep.subr.bf16.mxu0 %v3048
    %4552 = vmatpush1.bf16.msra.mxu0 %v3047
    %4553 = vmatprep.subr.bf16.mxu0 %v3056
    %4554 = vmatpush1.bf16.msra.mxu0 %v3055
    %4555 = vmatprep.subr.bf16.mxu0 %v3064
    %4556 = vmatpush1.bf16.msra.mxu0 %v3063
    %4557 = vmatprep.subr.bf16.mxu0 %v3072
    %4558 = vmatpush1.bf16.msra.mxu0 %v3071
    %4559 = vmatprep.subr.bf16.mxu0 %v3080
    %4560 = vmatpush1.bf16.msra.mxu0 %v3079
    %4561 = vmatprep.subr.bf16.mxu0 %v3088
    %4562 = vmatpush1.bf16.msra.mxu0 %v3087
    %4563 = vmatprep.subr.bf16.mxu0 %v3096
    %4564 = vmatpush1.bf16.msra.mxu0 %v3095
    %4565 = vmatprep.subr.bf16.mxu0 %v3104
    %4566 = vmatpush1.bf16.msra.mxu0 %v3103
    %4567 = vmatprep.subr.bf16.mxu0 %v3112
    %4568 = vmatpush1.bf16.msra.mxu0 %v3111
    %4569 = vmatprep.subr.bf16.mxu0 %v3120
    %4570 = vmatpush1.bf16.msra.mxu0 %v3119
    %4571 = vmatprep.subr.bf16.mxu0 %v3128
    %4572 = vmatpush1.bf16.msra.mxu0 %v3127
    %4573 = vmatprep.subr.bf16.mxu0 %v3136
    %4574 = vmatpush1.bf16.msra.mxu0 %v3135
    %4575 = vmatprep.subr.bf16.mxu0 %v3144
    %4576 = vmatpush1.bf16.msra.mxu0 %v3143
    %4577 = vmatprep.subr.bf16.mxu0 %v3152
    %4578 = vmatpush1.bf16.msra.mxu0 %v3151
    %4579 = vmatprep.subr.bf16.mxu0 %v3160
    %4580 = vmatpush1.bf16.msra.mxu0 %v3159
    %4581 = vmatprep.mubr.bf16.mxu0 %v936
    %4582 = vmatmul.mubr.bf16.gmra.mrb[0].mxu0 %v935
    %v4583 = vpop.f32.mrb[0].mxu0
    %v4584 = vadd.f32 %v1484, %v4583
    %v4585 = vpop.f32.mrb[0].mxu0
    %v4586 = vadd.f32 %v1488, %v4585
    %v4587 = vpop.f32.mrb[0].mxu0
    %v4588 = vpop.f32.mrb[0].mxu0
    %4589 = vdwg.mxu0
    %4590 = vmatprep.subr.bf16.mxu0 %v3168
    %4591 = vmatpush1.bf16.msra.mxu0 %v3167
    %4592 = vmatprep.subr.bf16.mxu0 %v3176
    %4593 = vmatpush1.bf16.msra.mxu0 %v3175
    %4594 = vmatprep.subr.bf16.mxu0 %v3184
    %4595 = vmatpush1.bf16.msra.mxu0 %v3183
    %4596 = vmatprep.subr.bf16.mxu0 %v3192
    %4597 = vmatpush1.bf16.msra.mxu0 %v3191
    %4598 = vmatprep.subr.bf16.mxu0 %v3200
    %4599 = vmatpush1.bf16.msra.mxu0 %v3199
    %4600 = vmatprep.subr.bf16.mxu0 %v3208
    %4601 = vmatpush1.bf16.msra.mxu0 %v3207
    %4602 = vmatprep.subr.bf16.mxu0 %v3216
    %4603 = vmatpush1.bf16.msra.mxu0 %v3215
    %4604 = vmatprep.subr.bf16.mxu0 %v3224
    %4605 = vmatpush1.bf16.msra.mxu0 %v3223
    %4606 = vmatprep.subr.bf16.mxu0 %v3232
    %4607 = vmatpush1.bf16.msra.mxu0 %v3231
    %4608 = vmatprep.subr.bf16.mxu0 %v3240
    %4609 = vmatpush1.bf16.msra.mxu0 %v3239
    %4610 = vmatprep.subr.bf16.mxu0 %v3248
    %4611 = vmatpush1.bf16.msra.mxu0 %v3247
    %4612 = vmatprep.subr.bf16.mxu0 %v3256
    %4613 = vmatpush1.bf16.msra.mxu0 %v3255
    %4614 = vmatprep.subr.bf16.mxu0 %v3264
    %4615 = vmatpush1.bf16.msra.mxu0 %v3263
    %4616 = vmatprep.subr.bf16.mxu0 %v3272
    %4617 = vmatpush1.bf16.msra.mxu0 %v3271
    %4618 = vmatprep.subr.bf16.mxu0 %v3280
    %4619 = vmatpush1.bf16.msra.mxu0 %v3279
    %4620 = vmatprep.subr.bf16.mxu0 %v3288
    %4621 = vmatpush1.bf16.msra.mxu0 %v3287
    %4622 = vmatprep.mubr.bf16.mxu0 %v938
    %4623 = vmatmul.mubr.bf16.gmra.mrb[0].mxu0 %v937
    %v4624 = vpop.f32.mrb[0].mxu0
    %v4625 = vadd.f32 %v4584, %v4624
    %v4626 = vpop.f32.mrb[0].mxu0
    %v4627 = vadd.f32 %v4586, %v4626
    %v4628 = vpop.f32.mrb[0].mxu0
    %v4629 = vpop.f32.mrb[0].mxu0
    %4630 = vdwg.mxu0
    %4631 = vmatprep.subr.bf16.mxu0 %v3296
    %4632 = vmatpush1.bf16.msra.mxu0 %v3295
    %4633 = vmatprep.subr.bf16.mxu0 %v3304
    %4634 = vmatpush1.bf16.msra.mxu0 %v3303
    %4635 = vmatprep.subr.bf16.mxu0 %v3312
    %4636 = vmatpush1.bf16.msra.mxu0 %v3311
    %4637 = vmatprep.subr.bf16.mxu0 %v3320
    %4638 = vmatpush1.bf16.msra.mxu0 %v3319
    %4639 = vmatprep.subr.bf16.mxu0 %v3328
    %4640 = vmatpush1.bf16.msra.mxu0 %v3327
    %4641 = vmatprep.subr.bf16.mxu0 %v3336
    %4642 = vmatpush1.bf16.msra.mxu0 %v3335
    %4643 = vmatprep.subr.bf16.mxu0 %v3344
    %4644 = vmatpush1.bf16.msra.mxu0 %v3343
    %4645 = vmatprep.subr.bf16.mxu0 %v3352
    %4646 = vmatpush1.bf16.msra.mxu0 %v3351
    %4647 = vmatprep.subr.bf16.mxu0 %v3360
    %4648 = vmatpush1.bf16.msra.mxu0 %v3359
    %4649 = vmatprep.subr.bf16.mxu0 %v3368
    %4650 = vmatpush1.bf16.msra.mxu0 %v3367
    %4651 = vmatprep.subr.bf16.mxu0 %v3376
    %4652 = vmatpush1.bf16.msra.mxu0 %v3375
    %4653 = vmatprep.subr.bf16.mxu0 %v3384
    %4654 = vmatpush1.bf16.msra.mxu0 %v3383
    %4655 = vmatprep.subr.bf16.mxu0 %v3392
    %4656 = vmatpush1.bf16.msra.mxu0 %v3391
    %4657 = vmatprep.subr.bf16.mxu0 %v3400
    %4658 = vmatpush1.bf16.msra.mxu0 %v3399
    %4659 = vmatprep.subr.bf16.mxu0 %v3408
    %4660 = vmatpush1.bf16.msra.mxu0 %v3407
    %4661 = vmatprep.subr.bf16.mxu0 %v3416
    %4662 = vmatpush1.bf16.msra.mxu0 %v3415
    %4663 = vmatprep.mubr.bf16.mxu0 %v940
    %4664 = vmatmul.mubr.bf16.gmra.mrb[0].mxu0 %v939
    %v4665 = vpop.f32.mrb[0].mxu0
    %v4666 = vadd.f32 %v4625, %v4665
    %v4667 = vpop.f32.mrb[0].mxu0
    %v4668 = vadd.f32 %v4627, %v4667
    %v4669 = vpop.f32.mrb[0].mxu0
    %v4670 = vpop.f32.mrb[0].mxu0
    %4671 = vdwg.mxu0
    %4672 = vmatprep.subr.bf16.mxu0 %v3424
    %4673 = vmatpush1.bf16.msra.mxu0 %v3423
    %4674 = vmatprep.subr.bf16.mxu0 %v3432
    %4675 = vmatpush1.bf16.msra.mxu0 %v3431
    %4676 = vmatprep.subr.bf16.mxu0 %v3440
    %4677 = vmatpush1.bf16.msra.mxu0 %v3439
    %4678 = vmatprep.subr.bf16.mxu0 %v3448
    %4679 = vmatpush1.bf16.msra.mxu0 %v3447
    %4680 = vmatprep.subr.bf16.mxu0 %v3456
    %4681 = vmatpush1.bf16.msra.mxu0 %v3455
    %4682 = vmatprep.subr.bf16.mxu0 %v3464
    %4683 = vmatpush1.bf16.msra.mxu0 %v3463
    %4684 = vmatprep.subr.bf16.mxu0 %v3472
    %4685 = vmatpush1.bf16.msra.mxu0 %v3471
    %4686 = vmatprep.subr.bf16.mxu0 %v3480
    %4687 = vmatpush1.bf16.msra.mxu0 %v3479
    %4688 = vmatprep.subr.bf16.mxu0 %v3488
    %4689 = vmatpush1.bf16.msra.mxu0 %v3487
    %4690 = vmatprep.subr.bf16.mxu0 %v3496
    %4691 = vmatpush1.bf16.msra.mxu0 %v3495
    %4692 = vmatprep.subr.bf16.mxu0 %v3504
    %4693 = vmatpush1.bf16.msra.mxu0 %v3503
    %4694 = vmatprep.subr.bf16.mxu0 %v3512
    %4695 = vmatpush1.bf16.msra.mxu0 %v3511
    %4696 = vmatprep.subr.bf16.mxu0 %v3520
    %4697 = vmatpush1.bf16.msra.mxu0 %v3519
    %4698 = vmatprep.subr.bf16.mxu0 %v3528
    %4699 = vmatpush1.bf16.msra.mxu0 %v3527
    %4700 = vmatprep.subr.bf16.mxu0 %v3536
    %4701 = vmatpush1.bf16.msra.mxu0 %v3535
    %4702 = vmatprep.subr.bf16.mxu0 %v3544
    %4703 = vmatpush1.bf16.msra.mxu0 %v3543
    %4704 = vmatprep.mubr.bf16.mxu0 %v942
    %4705 = vmatmul.mubr.bf16.gmra.mrb[0].mxu0 %v941
    %v4706 = vpop.f32.mrb[0].mxu0
    %v4707 = vadd.f32 %v4666, %v4706
    %v4708 = vpop.f32.mrb[0].mxu0
    %v4709 = vadd.f32 %v4668, %v4708
    %v4710 = vpop.f32.mrb[0].mxu0
    %v4711 = vpop.f32.mrb[0].mxu0
    %4712 = vdwg.mxu0
    %4713 = vst [vmem:[#allocation14] sm:$0xff] %v4215
    %4714 = vst [vmem:[#allocation14 + $0x8] sm:$0xff] %v4217
    %4715 = vst [vmem:[#allocation14 + $0x10] sm:$0xff] %v4379
    %4716 = vst [vmem:[#allocation14 + $0x18] sm:$0xff] %v4381
    %4717 = vst [vmem:[#allocation14 + $0x20] sm:$0xff] %v4543
    %4718 = vst [vmem:[#allocation14 + $0x28] sm:$0xff] %v4545
    %4719 = vst [vmem:[#allocation14 + $0x30] sm:$0xff] %v4707
    %4720 = vst [vmem:[#allocation14 + $0x38] sm:$0xff] %v4709
    // Predicated region
    $region112: #{tpu_custom_call.1} parent=1 // pred_check
      _
    $region113: #{tpu_custom_call.1} parent=1 // pred_check_branch
      %4722 = sbr.rel (0) target = $region115
    $region114: #{tpu_custom_call.1} parent=1 // pred_region
      %s4724 = ssub.s32 1024, 1024
      %4725 = vsyncadd [#allocation6], %s4724
      %s4727 = sshll.u32 [#allocation14], 4
      %s4728 = int_to_ptr.vmem [resolvable:$true] %s4727
      %4730 = dma.vmem_to_hbm [thread:$0]  %s4728, 1024, %s5, [#allocation6]
    $region115: #{tpu_custom_call.1} parent=1 // pred_fallthru
      _
    // Predicated region
    $region116: #{tpu_custom_call.1} parent=1 // pred_check
      _
    $region117: #{tpu_custom_call.1} parent=1 // pred_check_branch
      %4732 = sbr.rel (0) target = $region119
    $region118: #{tpu_custom_call.1} parent=1 // pred_region
      %4733 = dma.done [#allocation6], 1024
    $region119: #{tpu_custom_call.1} parent=1 // pred_fallthru
      _
    %4734 = vsyncpa [#allocation5], 1
    %4735 = vsyncpa [#allocation12], 1
    %4736 = vsyncpa [#allocation6], 1
    %4737 = vsyncpa [#allocation7], 1
    %4738 = vsyncpa [#allocation10], 1

</llo_original>
